<compile_context>
chip_gen: v6e
topology: v6e:2x2x1
jax: 0.10.0
libtpu: 0.0.40
codegen_flags: <defaults>
</compile_context>

<pallas_src>
import functools

import jax
import jax.numpy as jnp
from jax import lax
from jax.experimental import pallas as pl
from jax.experimental.pallas import tpu as pltpu

# ----------------------- problem sizes / "args" -----------------------------
IN_DIM = 4        # MLP input feature dim
HIDDEN = 32       # hidden width (embedding dim)
OUT_DIM = 1       # regression output dim
N_SHOT = 8
N_QUERY = 8
INNER_ITERS = 3   # args.inner_iters
GD_LR = 0.01      # args.gd_lr

_D = HIDDEN + 1          # ridge system size ([embedding | ones])
_ROWS = _D + OUT_DIM     # bordered system rows: [[S^T S + I], [y^T S]]


# dot_general helpers (no explicit transposes; MXU-friendly)
def _mm_nt(a, b):   # a @ b.T
    return lax.dot_general(a, b, (((1,), (1,)), ((), ())),
                           preferred_element_type=jnp.float32)


def _mm_tn(a, b):   # a.T @ b
    return lax.dot_general(a, b, (((0,), (0,)), ((), ())),
                           preferred_element_type=jnp.float32)


def _mm_nn(a, b):   # a @ b
    return lax.dot_general(a, b, (((1,), (0,)), ((), ())),
                           preferred_element_type=jnp.float32)


# --------------------------- fully fused kernel ------------------------------
def maml_mse_kernel(x_ref, ys_ref, w_ref, b_ref, out_ref, *, inner_iters, gd_lr):
    # x_ref : (N_SHOT + N_QUERY, IN)   support rows first, then query rows
    # ys_ref: (N_SHOT, OUT)
    # w_ref : (H, H + IN)              = [layer2.weight | layer1.weight]
    # b_ref : (2, H)                   = [layer1.bias ; layer2.bias]
    xs = x_ref[0:N_SHOT, :]
    xq = x_ref[N_SHOT:N_SHOT + N_QUERY, :]
    ys = ys_ref[...]
    w2 = w_ref[:, 0:HIDDEN]
    w1 = w_ref[:, HIDDEN:HIDDEN + IN_DIM]
    b1 = b_ref[0:1, :]
    b2 = b_ref[1:2, :]
    n = N_SHOT

    def hidden_fwd(x, w1_, b1_, w2_, b2_):
        h1 = jnp.maximum(_mm_nt(x, w1_) + b1_, 0.0)
        h2 = jnp.maximum(_mm_nt(h1, w2_) + b2_, 0.0)
        return h1, h2

    # ---- support embedding (encoder with embedding=True -> penultimate act) --
    _, emb = hidden_fwd(xs, w1, b1, w2, b2)                       # (n, H)

    # ---- bordered normal equations with ONE MXU op ---------------------------
    # S = [emb | 1];  S_aug = [S | y]  (n, 34)
    # N = S_aug^T @ S: top 33 rows = S^T S, bottom row = y^T S.  Add I on the
    # top-left 33x33 diagonal via an iota mask.
    s_aug = jnp.concatenate(
        [emb, jnp.ones((n, 1), jnp.float32), ys], axis=1)         # (n, _ROWS)
    rows = lax.broadcasted_iota(jnp.int32, (_ROWS, _D), 0)
    cols = lax.broadcasted_iota(jnp.int32, (_ROWS, _D), 1)
    m = _mm_tn(s_aug, s_aug[:, 0:_D]) + (rows == cols).astype(jnp.float32)

    # ---- Gauss-Jordan on the transposed system, fully unrolled ----------------
    # Column ops on the (34, 33) matrix == row GJ on [A | b]; A = S^T S + I is
    # SPD with diag >= 1 so no pivoting is needed.  All slices are static, so
    # each step is: column slice, pivot slice, divide, rank-1 update, select.
    # At the end the bottom row is x^T = [w4 | b4] directly (no transpose).
    for k in range(_D):
        c = m[:, k:k + 1]            # current column k     (_ROWS, 1)
        piv = c[k:k + 1, :]          # pivot A[k, k]         (1, 1)
        r = m[k:k + 1, :]            # current row k         (1, _D)
        cn = c / piv
        m = jnp.where(cols == k, cn, m - cn * r)

    sol = m[_D:_ROWS, :]             # (1, _D) = [w4_init | b4_init]
    fc_w_init = sol[:, 0:HIDDEN]     # (1, H)
    fc_b_init = sol[:, HIDDEN:_D]    # (1, 1)

    # ---- first-order MAML inner loop: fully unrolled, all state in registers --
    grad_scale = 2.0 / float(n * OUT_DIM)        # F.mse_loss mean reduction
    w1c, b1c, w2c, b2c = w1, b1, w2, b2
    w4c, b4c = fc_w_init, fc_b_init
    acc_w = jnp.zeros_like(fc_w_init)
    acc_b = jnp.zeros_like(fc_b_init)

    for _ in range(inner_iters):
        h1, h2 = hidden_fwd(xs, w1c, b1c, w2c, b2c)
        # layer4 is a (1, H) row: keep its products on VPU mul + lane reduce,
        # off the MXU port shared with dw2 / dh1.
        y = jnp.sum(h2 * w4c, axis=1, keepdims=True) + b4c        # (n, 1)
        dy = grad_scale * (y - ys)                                # dMSE/dy
        dw4 = jnp.sum(dy * h2, axis=0, keepdims=True)             # (1, H)
        db4 = jnp.sum(dy, axis=0, keepdims=True)                  # (1, 1)
        dz2 = jnp.where(h2 > 0, dy * w4c, 0.0)                    # (n, H)
        dw2 = _mm_tn(dz2, h1)                                     # (H, H)  MXU
        db2 = jnp.sum(dz2, axis=0, keepdims=True)
        dz1 = jnp.where(h1 > 0, _mm_nn(dz2, w2c), 0.0)            # (n, H)  MXU
        dw1 = _mm_tn(dz1, xs)                                     # (H, IN) MXU
        db1 = jnp.sum(dz1, axis=0, keepdims=True)
        acc_w = acc_w + dw4
        acc_b = acc_b + db4
        w1c = w1c - gd_lr * dw1
        b1c = b1c - gd_lr * db1
        w2c = w2c - gd_lr * dw2
        b2c = b2c - gd_lr * db2
        w4c = w4c - gd_lr * dw4
        b4c = b4c - gd_lr * db4

    # final layer4 = ridge init - gd_lr * accumulated grads (as in the module)
    w4f = fc_w_init - gd_lr * acc_w
    b4f = fc_b_init - gd_lr * acc_b

    # ---- query forward with adapted encoder + reinitialized layer4 -----------
    _, q2 = hidden_fwd(xq, w1c, b1c, w2c, b2c)
    out_ref[...] = jnp.sum(q2 * w4f, axis=1, keepdims=True) + b4f


# ------------------------------ wrappers ---------------------------------------
def _cost_estimate(num_tasks):
    fwd = 2 * N_SHOT * IN_DIM * HIDDEN + 2 * N_SHOT * HIDDEN * HIDDEN
    ridge = 2 * N_SHOT * _ROWS * _D + _D * (2 * _ROWS * _D + _ROWS)
    inner = INNER_ITERS * (fwd + 4 * N_SHOT * HIDDEN * HIDDEN
                           + 2 * N_SHOT * HIDDEN * IN_DIM + 8 * N_SHOT * HIDDEN)
    qfwd = 2 * N_QUERY * IN_DIM * HIDDEN + 2 * N_QUERY * HIDDEN * HIDDEN
    flops = num_tasks * (fwd + ridge + inner + qfwd)
    bytes_accessed = 4 * (num_tasks * ((N_SHOT + N_QUERY) * IN_DIM
                                       + N_SHOT * OUT_DIM + N_QUERY * OUT_DIM)
                          + HIDDEN * (HIDDEN + IN_DIM) + 2 * HIDDEN)
    return pl.CostEstimate(flops=flops, transcendentals=0,
                           bytes_accessed=bytes_accessed)


@jax.jit
def maml_mse_forward_batched(data_shot, data_query, label_shot, params):
    """data_shot: (T, N_SHOT, IN), data_query: (T, N_QUERY, IN),
    label_shot: (T, N_SHOT, OUT).  Shared encoder params.  Returns (T, N_QUERY, OUT)."""
    num_tasks = data_shot.shape[0]
    # Consolidate the 7 tiny inputs into 4 lane-denser DMAs.
    x_all = jnp.concatenate([data_shot, data_query], axis=1).astype(jnp.float32)
    ys = label_shot.astype(jnp.float32)
    w_pack = jnp.concatenate(
        [params['layer2.weight'], params['layer1.weight']], axis=1).astype(jnp.float32)
    b_pack = jnp.stack(
        [params['layer1.bias'], params['layer2.bias']], axis=0).astype(jnp.float32)

    kernel = functools.partial(maml_mse_kernel,
                               inner_iters=INNER_ITERS, gd_lr=GD_LR)
    return pl.pallas_call(
        kernel,
        grid=(num_tasks,),
        in_specs=[
            pl.BlockSpec((None, N_SHOT + N_QUERY, IN_DIM), lambda i: (i, 0, 0)),
            pl.BlockSpec((None, N_SHOT, OUT_DIM), lambda i: (i, 0, 0)),
            pl.BlockSpec((HIDDEN, HIDDEN + IN_DIM), lambda i: (0, 0)),
            pl.BlockSpec((2, HIDDEN), lambda i: (0, 0)),
        ],
        out_specs=pl.BlockSpec((None, N_QUERY, OUT_DIM), lambda i: (i, 0, 0)),
        out_shape=jax.ShapeDtypeStruct((num_tasks, N_QUERY, OUT_DIM), jnp.float32),
        compiler_params=pltpu.CompilerParams(dimension_semantics=("parallel",)),
        cost_estimate=_cost_estimate(num_tasks),
    )(x_all, ys, w_pack, b_pack)


@jax.jit
def maml_mse_forward(data_shot, data_query, label_shot, params):
    """Single-task forward matching MAML_MSE.forward; returns [logits]."""
    # Note: layer4.{weight,bias} never influence the output (they are
    # overwritten by the ridge init before the inner loop), so they are not used.
    out = maml_mse_forward_batched(data_shot[None], data_query[None],
                                   label_shot[None], params)
    return [out[0]]


# ------------------------- pure-JAX reference (for checking) ------------------
def _reference(data_shot, data_query, label_shot, params):
    def hidden(x, w1, b1, w2, b2):
        h1 = jnp.maximum(x @ w1.T + b1, 0.0)
        h2 = jnp.maximum(h1 @ w2.T + b2, 0.0)
        return h1, h2

    w1 = params['layer1.weight']; b1 = params['layer1.bias']
    w2 = params['layer2.weight']; b2 = params['layer2.bias']
    _, emb = hidden(data_shot, w1, b1, w2, b2)
    n = emb.shape[0]
    s = jnp.concatenate([emb, jnp.ones((n, 1), jnp.float32)], axis=1)
    a = s.T @ s + jnp.eye(s.shape[1], dtype=jnp.float32)
    b = s.T @ label_shot
    sol = jnp.linalg.solve(a, b).reshape(1, -1)
    w4i, b4i = sol[:, :HIDDEN], sol[:, HIDDEN:]
    w1c, b1c, w2c, b2c, w4c, b4c = w1, b1, w2, b2, w4i, b4i
    acc_w = jnp.zeros_like(w4i); acc_b = jnp.zeros_like(b4i)
    for _ in range(INNER_ITERS):
        h1, h2 = hidden(data_shot, w1c, b1c, w2c, b2c)
        y = h2 @ w4c.T + b4c
        dy = 2.0 / (n * OUT_DIM) * (y - label_shot)
        dw4 = dy.T @ h2; db4 = jnp.sum(dy, axis=0, keepdims=True)
        dz2 = jnp.where(h2 > 0, dy @ w4c, 0.0)
        dw2 = dz2.T @ h1; db2 = jnp.sum(dz2, axis=0)
        dz1 = jnp.where(h1 > 0, dz2 @ w2c, 0.0)
        dw1 = dz1.T @ data_shot; db1 = jnp.sum(dz1, axis=0)
        acc_w = acc_w + dw4; acc_b = acc_b + db4
        w1c = w1c - GD_LR * dw1; b1c = b1c - GD_LR * db1
        w2c = w2c - GD_LR * dw2; b2c = b2c - GD_LR * db2
        w4c = w4c - GD_LR * dw4; b4c = b4c - GD_LR * db4
    w4f = w4i - GD_LR * acc_w; b4f = b4i - GD_LR * acc_b
    _, q2 = hidden(data_query, w1c, b1c, w2c, b2c)
    return q2 @ w4f.T + b4f


# ---------------------------------- main ---------------------------------------
if __name__ == "__main__":
    key = jax.random.PRNGKey(0)
    k1, k2, k3, k4, k5, k6, kx, kq, kl = jax.random.split(key, 9)
    params = {
        'layer1.weight': 0.1 * jax.random.normal(k1, (HIDDEN, IN_DIM), jnp.float32),
        'layer1.bias':   0.01 * jax.random.normal(k4, (HIDDEN,), jnp.float32),
        'layer2.weight': 0.1 * jax.random.normal(k2, (HIDDEN, HIDDEN), jnp.float32),
        'layer2.bias':   0.01 * jax.random.normal(k5, (HIDDEN,), jnp.float32),
        'layer4.weight': 0.1 * jax.random.normal(k3, (OUT_DIM, HIDDEN), jnp.float32),
        'layer4.bias':   0.01 * jax.random.normal(k6, (OUT_DIM,), jnp.float32),
    }

    # --- single task (module semantics) ---
    data_shot = jax.random.normal(kx, (N_SHOT, IN_DIM), jnp.float32)
    data_query = jax.random.normal(kq, (N_QUERY, IN_DIM), jnp.float32)
    label_shot = jax.random.normal(kl, (N_SHOT, OUT_DIM), jnp.float32)

    logits = maml_mse_forward(data_shot, data_query, label_shot, params)
    out = jax.block_until_ready(logits[0])
    assert out.shape == (N_QUERY, OUT_DIM) and out.dtype == jnp.float32
    ref = jax.block_until_ready(_reference(data_shot, data_query, label_shot, params))
    assert jnp.allclose(out, ref, rtol=1e-2, atol=1e-2), (out, ref)

    # --- batched tasks over the parallel grid axis ---
    T = 4
    kx2, kq2, kl2 = jax.random.split(jax.random.PRNGKey(1), 3)
    shot_b = jax.random.normal(kx2, (T, N_SHOT, IN_DIM), jnp.float32)
    query_b = jax.random.normal(kq2, (T, N_QUERY, IN_DIM), jnp.float32)
    label_b = jax.random.normal(kl2, (T, N_SHOT, OUT_DIM), jnp.float32)
    out_b = jax.block_until_ready(
        maml_mse_forward_batched(shot_b, query_b, label_b, params))
    assert out_b.shape == (T, N_QUERY, OUT_DIM)
    for t in range(T):
        ref_t = _reference(shot_b[t], query_b[t], label_b[t], params)
        assert jnp.allclose(out_b[t], ref_t, rtol=1e-2, atol=1e-2), t

    print("KERNEL_OK")
</pallas_src>

<mosaic_0001>
module attributes {stable_mosaic.version = 11 : i64} {
  func.func @maml_mse_kernel(%arg0: i32, %arg1: memref<1x16x4xf32, #tpu.memory_space<vmem>>, %arg2: memref<1x8x1xf32, #tpu.memory_space<vmem>>, %arg3: memref<32x36xf32, #tpu.memory_space<vmem>>, %arg4: memref<2x32xf32, #tpu.memory_space<vmem>>, %arg5: memref<1x8x1xf32, #tpu.memory_space<vmem>>) attributes {dimension_semantics = [#tpu.dimension_semantics<parallel>], iteration_bounds = array<i64: 1>, scalar_prefetch = 0 : i64, scratch_operands = 0 : i64, tpu.core_type = #tpu.core_type<tc>, window_params = [{transform_indices = @transform_0, window_bounds = array<i64: 1, 16, 4>}, {transform_indices = @transform_1, window_bounds = array<i64: 1, 8, 1>}, {pipeline_mode = #tpu.pipeline_mode<synchronous>, transform_indices = @transform_2, window_bounds = array<i64: 32, 36>}, {pipeline_mode = #tpu.pipeline_mode<synchronous>, transform_indices = @transform_3, window_bounds = array<i64: 2, 32>}, {transform_indices = @transform_4, window_bounds = array<i64: 1, 8, 1>}]} {
    %c0 = arith.constant 0 : index
    %c0_0 = arith.constant 0 : index
    %c0_1 = arith.constant 0 : index
    %0 = vector.load %arg1[%c0, %c0_0, %c0_1] : memref<1x16x4xf32, #tpu.memory_space<vmem>>, vector<1x8x4xf32>
    %1 = vector.shape_cast %0 : vector<1x8x4xf32> to vector<8x4xf32>
    %c0_2 = arith.constant 0 : index
    %c8 = arith.constant 8 : index
    %c0_3 = arith.constant 0 : index
    %2 = vector.load %arg1[%c0_2, %c8, %c0_3] : memref<1x16x4xf32, #tpu.memory_space<vmem>>, vector<1x8x4xf32>
    %3 = vector.shape_cast %2 : vector<1x8x4xf32> to vector<8x4xf32>
    %c0_4 = arith.constant 0 : index
    %c0_5 = arith.constant 0 : index
    %c0_6 = arith.constant 0 : index
    %4 = vector.load %arg2[%c0_4, %c0_5, %c0_6] : memref<1x8x1xf32, #tpu.memory_space<vmem>>, vector<1x8x1xf32>
    %5 = vector.shape_cast %4 : vector<1x8x1xf32> to vector<8x1xf32>
    %c0_7 = arith.constant 0 : index
    %c0_8 = arith.constant 0 : index
    %6 = vector.load %arg3[%c0_7, %c0_8] : memref<32x36xf32, #tpu.memory_space<vmem>>, vector<32x32xf32>
    %c0_9 = arith.constant 0 : index
    %c32 = arith.constant 32 : index
    %7 = vector.load %arg3[%c0_9, %c32] : memref<32x36xf32, #tpu.memory_space<vmem>>, vector<32x4xf32>
    %c0_10 = arith.constant 0 : index
    %c0_11 = arith.constant 0 : index
    %8 = vector.load %arg4[%c0_10, %c0_11] : memref<2x32xf32, #tpu.memory_space<vmem>>, vector<1x32xf32>
    %c1 = arith.constant 1 : index
    %c0_12 = arith.constant 0 : index
    %9 = vector.load %arg4[%c1, %c0_12] : memref<2x32xf32, #tpu.memory_space<vmem>>, vector<1x32xf32>
    %cst = arith.constant dense<0.000000e+00> : vector<8x32xf32>
    %10 = tpu.matmul %1, %7, %cst {dimension_numbers = #tpu.dot_dimension_numbers<[1], [1], [0], [0], [0, 0, 1, 0], [], []>} : vector<8x4xf32>, vector<32x4xf32>, vector<8x32xf32> -> vector<8x32xf32>
    %11 = vector.broadcast %8 : vector<1x32xf32> to vector<8x32xf32>
    %12 = arith.addf %10, %11 : vector<8x32xf32>
    %cst_13 = arith.constant 0.000000e+00 : f32
    %13 = vector.broadcast %cst_13 : f32 to vector<8x32xf32>
    %14 = arith.maximumf %12, %13 : vector<8x32xf32>
    %cst_14 = arith.constant dense<0.000000e+00> : vector<8x32xf32>
    %15 = tpu.matmul %14, %6, %cst_14 {dimension_numbers = #tpu.dot_dimension_numbers<[1], [1], [0], [0], [0, 0, 1, 0], [], []>} : vector<8x32xf32>, vector<32x32xf32>, vector<8x32xf32> -> vector<8x32xf32>
    %16 = vector.broadcast %9 : vector<1x32xf32> to vector<8x32xf32>
    %17 = arith.addf %15, %16 : vector<8x32xf32>
    %cst_15 = arith.constant 0.000000e+00 : f32
    %18 = vector.broadcast %cst_15 : f32 to vector<8x32xf32>
    %19 = arith.maximumf %17, %18 : vector<8x32xf32>
    %cst_16 = arith.constant 1.000000e+00 : f32
    %20 = vector.broadcast %cst_16 : f32 to vector<8x1xf32>
    %21 = tpu.concatenate %19, %20, %5 in 1 : vector<8x32xf32>, vector<8x1xf32>, vector<8x1xf32> -> vector<8x34xf32>
    %22 = tpu.iota {dimensions = array<i32: 0>} : vector<34x33xi32>
    %23 = tpu.iota {dimensions = array<i32: 1>} : vector<34x33xi32>
    %24 = vector.extract_strided_slice %21 {offsets = [0, 0], sizes = [8, 33], strides = [1, 1]} : vector<8x34xf32> to vector<8x33xf32>
    %cst_17 = arith.constant dense<0.000000e+00> : vector<34x33xf32>
    %25 = tpu.matmul %21, %24, %cst_17 {dimension_numbers = #tpu.dot_dimension_numbers<[0], [0], [1], [1], [0, 1, 1, 1], [], []>} : vector<8x34xf32>, vector<8x33xf32>, vector<34x33xf32> -> vector<34x33xf32>
    %26 = arith.cmpi eq, %22, %23 : vector<34x33xi32>
    %27 = arith.extui %26 : vector<34x33xi1> to vector<34x33xi32>
    %28 = arith.sitofp %27 : vector<34x33xi32> to vector<34x33xf32>
    %29 = arith.addf %25, %28 : vector<34x33xf32>
    %30 = vector.extract_strided_slice %29 {offsets = [0, 0], sizes = [34, 1], strides = [1, 1]} : vector<34x33xf32> to vector<34x1xf32>
    %31 = vector.extract_strided_slice %30 {offsets = [0, 0], sizes = [1, 1], strides = [1, 1]} : vector<34x1xf32> to vector<1x1xf32>
    %32 = vector.extract_strided_slice %29 {offsets = [0, 0], sizes = [1, 33], strides = [1, 1]} : vector<34x33xf32> to vector<1x33xf32>
    %33 = vector.broadcast %31 : vector<1x1xf32> to vector<34x1xf32>
    %34 = arith.divf %30, %33 : vector<34x1xf32>
    %c0_i32 = arith.constant 0 : i32
    %35 = vector.broadcast %c0_i32 : i32 to vector<34x33xi32>
    %36 = arith.cmpi eq, %23, %35 : vector<34x33xi32>
    %37 = vector.broadcast %34 : vector<34x1xf32> to vector<34x33xf32>
    %38 = vector.broadcast %32 : vector<1x33xf32> to vector<34x33xf32>
    %39 = arith.mulf %37, %38 : vector<34x33xf32>
    %40 = arith.subf %29, %39 : vector<34x33xf32>
    %41 = vector.shape_cast %34 : vector<34x1xf32> to vector<34x1xf32>
    %42 = vector.broadcast %41 : vector<34x1xf32> to vector<34x33xf32>
    %43 = arith.select %36, %42, %40 : vector<34x33xi1>, vector<34x33xf32>
    %44 = vector.extract_strided_slice %43 {offsets = [0, 1], sizes = [34, 1], strides = [1, 1]} : vector<34x33xf32> to vector<34x1xf32>
    %45 = vector.extract_strided_slice %44 {offsets = [1, 0], sizes = [1, 1], strides = [1, 1]} : vector<34x1xf32> to vector<1x1xf32>
    %46 = vector.extract_strided_slice %43 {offsets = [1, 0], sizes = [1, 33], strides = [1, 1]} : vector<34x33xf32> to vector<1x33xf32>
    %47 = vector.broadcast %45 : vector<1x1xf32> to vector<34x1xf32>
    %48 = arith.divf %44, %47 : vector<34x1xf32>
    %c1_i32 = arith.constant 1 : i32
    %49 = vector.broadcast %c1_i32 : i32 to vector<34x33xi32>
    %50 = arith.cmpi eq, %23, %49 : vector<34x33xi32>
    %51 = vector.broadcast %48 : vector<34x1xf32> to vector<34x33xf32>
    %52 = vector.broadcast %46 : vector<1x33xf32> to vector<34x33xf32>
    %53 = arith.mulf %51, %52 : vector<34x33xf32>
    %54 = arith.subf %43, %53 : vector<34x33xf32>
    %55 = vector.shape_cast %48 : vector<34x1xf32> to vector<34x1xf32>
    %56 = vector.broadcast %55 : vector<34x1xf32> to vector<34x33xf32>
    %57 = arith.select %50, %56, %54 : vector<34x33xi1>, vector<34x33xf32>
    %58 = vector.extract_strided_slice %57 {offsets = [0, 2], sizes = [34, 1], strides = [1, 1]} : vector<34x33xf32> to vector<34x1xf32>
    %59 = vector.extract_strided_slice %58 {offsets = [2, 0], sizes = [1, 1], strides = [1, 1]} : vector<34x1xf32> to vector<1x1xf32>
    %60 = vector.extract_strided_slice %57 {offsets = [2, 0], sizes = [1, 33], strides = [1, 1]} : vector<34x33xf32> to vector<1x33xf32>
    %61 = vector.broadcast %59 : vector<1x1xf32> to vector<34x1xf32>
    %62 = arith.divf %58, %61 : vector<34x1xf32>
    %c2_i32 = arith.constant 2 : i32
    %63 = vector.broadcast %c2_i32 : i32 to vector<34x33xi32>
    %64 = arith.cmpi eq, %23, %63 : vector<34x33xi32>
    %65 = vector.broadcast %62 : vector<34x1xf32> to vector<34x33xf32>
    %66 = vector.broadcast %60 : vector<1x33xf32> to vector<34x33xf32>
    %67 = arith.mulf %65, %66 : vector<34x33xf32>
    %68 = arith.subf %57, %67 : vector<34x33xf32>
    %69 = vector.shape_cast %62 : vector<34x1xf32> to vector<34x1xf32>
    %70 = vector.broadcast %69 : vector<34x1xf32> to vector<34x33xf32>
    %71 = arith.select %64, %70, %68 : vector<34x33xi1>, vector<34x33xf32>
    %72 = vector.extract_strided_slice %71 {offsets = [0, 3], sizes = [34, 1], strides = [1, 1]} : vector<34x33xf32> to vector<34x1xf32>
    %73 = vector.extract_strided_slice %72 {offsets = [3, 0], sizes = [1, 1], strides = [1, 1]} : vector<34x1xf32> to vector<1x1xf32>
    %74 = vector.extract_strided_slice %71 {offsets = [3, 0], sizes = [1, 33], strides = [1, 1]} : vector<34x33xf32> to vector<1x33xf32>
    %75 = vector.broadcast %73 : vector<1x1xf32> to vector<34x1xf32>
    %76 = arith.divf %72, %75 : vector<34x1xf32>
    %c3_i32 = arith.constant 3 : i32
    %77 = vector.broadcast %c3_i32 : i32 to vector<34x33xi32>
    %78 = arith.cmpi eq, %23, %77 : vector<34x33xi32>
    %79 = vector.broadcast %76 : vector<34x1xf32> to vector<34x33xf32>
    %80 = vector.broadcast %74 : vector<1x33xf32> to vector<34x33xf32>
    %81 = arith.mulf %79, %80 : vector<34x33xf32>
    %82 = arith.subf %71, %81 : vector<34x33xf32>
    %83 = vector.shape_cast %76 : vector<34x1xf32> to vector<34x1xf32>
    %84 = vector.broadcast %83 : vector<34x1xf32> to vector<34x33xf32>
    %85 = arith.select %78, %84, %82 : vector<34x33xi1>, vector<34x33xf32>
    %86 = vector.extract_strided_slice %85 {offsets = [0, 4], sizes = [34, 1], strides = [1, 1]} : vector<34x33xf32> to vector<34x1xf32>
    %87 = vector.extract_strided_slice %86 {offsets = [4, 0], sizes = [1, 1], strides = [1, 1]} : vector<34x1xf32> to vector<1x1xf32>
    %88 = vector.extract_strided_slice %85 {offsets = [4, 0], sizes = [1, 33], strides = [1, 1]} : vector<34x33xf32> to vector<1x33xf32>
    %89 = vector.broadcast %87 : vector<1x1xf32> to vector<34x1xf32>
    %90 = arith.divf %86, %89 : vector<34x1xf32>
    %c4_i32 = arith.constant 4 : i32
    %91 = vector.broadcast %c4_i32 : i32 to vector<34x33xi32>
    %92 = arith.cmpi eq, %23, %91 : vector<34x33xi32>
    %93 = vector.broadcast %90 : vector<34x1xf32> to vector<34x33xf32>
    %94 = vector.broadcast %88 : vector<1x33xf32> to vector<34x33xf32>
    %95 = arith.mulf %93, %94 : vector<34x33xf32>
    %96 = arith.subf %85, %95 : vector<34x33xf32>
    %97 = vector.shape_cast %90 : vector<34x1xf32> to vector<34x1xf32>
    %98 = vector.broadcast %97 : vector<34x1xf32> to vector<34x33xf32>
    %99 = arith.select %92, %98, %96 : vector<34x33xi1>, vector<34x33xf32>
    %100 = vector.extract_strided_slice %99 {offsets = [0, 5], sizes = [34, 1], strides = [1, 1]} : vector<34x33xf32> to vector<34x1xf32>
    %101 = vector.extract_strided_slice %100 {offsets = [5, 0], sizes = [1, 1], strides = [1, 1]} : vector<34x1xf32> to vector<1x1xf32>
    %102 = vector.extract_strided_slice %99 {offsets = [5, 0], sizes = [1, 33], strides = [1, 1]} : vector<34x33xf32> to vector<1x33xf32>
    %103 = vector.broadcast %101 : vector<1x1xf32> to vector<34x1xf32>
    %104 = arith.divf %100, %103 : vector<34x1xf32>
    %c5_i32 = arith.constant 5 : i32
    %105 = vector.broadcast %c5_i32 : i32 to vector<34x33xi32>
    %106 = arith.cmpi eq, %23, %105 : vector<34x33xi32>
    %107 = vector.broadcast %104 : vector<34x1xf32> to vector<34x33xf32>
    %108 = vector.broadcast %102 : vector<1x33xf32> to vector<34x33xf32>
    %109 = arith.mulf %107, %108 : vector<34x33xf32>
    %110 = arith.subf %99, %109 : vector<34x33xf32>
    %111 = vector.shape_cast %104 : vector<34x1xf32> to vector<34x1xf32>
    %112 = vector.broadcast %111 : vector<34x1xf32> to vector<34x33xf32>
    %113 = arith.select %106, %112, %110 : vector<34x33xi1>, vector<34x33xf32>
    %114 = vector.extract_strided_slice %113 {offsets = [0, 6], sizes = [34, 1], strides = [1, 1]} : vector<34x33xf32> to vector<34x1xf32>
    %115 = vector.extract_strided_slice %114 {offsets = [6, 0], sizes = [1, 1], strides = [1, 1]} : vector<34x1xf32> to vector<1x1xf32>
    %116 = vector.extract_strided_slice %113 {offsets = [6, 0], sizes = [1, 33], strides = [1, 1]} : vector<34x33xf32> to vector<1x33xf32>
    %117 = vector.broadcast %115 : vector<1x1xf32> to vector<34x1xf32>
    %118 = arith.divf %114, %117 : vector<34x1xf32>
    %c6_i32 = arith.constant 6 : i32
    %119 = vector.broadcast %c6_i32 : i32 to vector<34x33xi32>
    %120 = arith.cmpi eq, %23, %119 : vector<34x33xi32>
    %121 = vector.broadcast %118 : vector<34x1xf32> to vector<34x33xf32>
    %122 = vector.broadcast %116 : vector<1x33xf32> to vector<34x33xf32>
    %123 = arith.mulf %121, %122 : vector<34x33xf32>
    %124 = arith.subf %113, %123 : vector<34x33xf32>
    %125 = vector.shape_cast %118 : vector<34x1xf32> to vector<34x1xf32>
    %126 = vector.broadcast %125 : vector<34x1xf32> to vector<34x33xf32>
    %127 = arith.select %120, %126, %124 : vector<34x33xi1>, vector<34x33xf32>
    %128 = vector.extract_strided_slice %127 {offsets = [0, 7], sizes = [34, 1], strides = [1, 1]} : vector<34x33xf32> to vector<34x1xf32>
    %129 = vector.extract_strided_slice %128 {offsets = [7, 0], sizes = [1, 1], strides = [1, 1]} : vector<34x1xf32> to vector<1x1xf32>
    %130 = vector.extract_strided_slice %127 {offsets = [7, 0], sizes = [1, 33], strides = [1, 1]} : vector<34x33xf32> to vector<1x33xf32>
    %131 = vector.broadcast %129 : vector<1x1xf32> to vector<34x1xf32>
    %132 = arith.divf %128, %131 : vector<34x1xf32>
    %c7_i32 = arith.constant 7 : i32
    %133 = vector.broadcast %c7_i32 : i32 to vector<34x33xi32>
    %134 = arith.cmpi eq, %23, %133 : vector<34x33xi32>
    %135 = vector.broadcast %132 : vector<34x1xf32> to vector<34x33xf32>
    %136 = vector.broadcast %130 : vector<1x33xf32> to vector<34x33xf32>
    %137 = arith.mulf %135, %136 : vector<34x33xf32>
    %138 = arith.subf %127, %137 : vector<34x33xf32>
    %139 = vector.shape_cast %132 : vector<34x1xf32> to vector<34x1xf32>
    %140 = vector.broadcast %139 : vector<34x1xf32> to vector<34x33xf32>
    %141 = arith.select %134, %140, %138 : vector<34x33xi1>, vector<34x33xf32>
    %142 = vector.extract_strided_slice %141 {offsets = [0, 8], sizes = [34, 1], strides = [1, 1]} : vector<34x33xf32> to vector<34x1xf32>
    %143 = vector.extract_strided_slice %142 {offsets = [8, 0], sizes = [1, 1], strides = [1, 1]} : vector<34x1xf32> to vector<1x1xf32>
    %144 = vector.extract_strided_slice %141 {offsets = [8, 0], sizes = [1, 33], strides = [1, 1]} : vector<34x33xf32> to vector<1x33xf32>
    %145 = vector.broadcast %143 : vector<1x1xf32> to vector<34x1xf32>
    %146 = arith.divf %142, %145 : vector<34x1xf32>
    %c8_i32 = arith.constant 8 : i32
    %147 = vector.broadcast %c8_i32 : i32 to vector<34x33xi32>
    %148 = arith.cmpi eq, %23, %147 : vector<34x33xi32>
    %149 = vector.broadcast %146 : vector<34x1xf32> to vector<34x33xf32>
    %150 = vector.broadcast %144 : vector<1x33xf32> to vector<34x33xf32>
    %151 = arith.mulf %149, %150 : vector<34x33xf32>
    %152 = arith.subf %141, %151 : vector<34x33xf32>
    %153 = vector.shape_cast %146 : vector<34x1xf32> to vector<34x1xf32>
    %154 = vector.broadcast %153 : vector<34x1xf32> to vector<34x33xf32>
    %155 = arith.select %148, %154, %152 : vector<34x33xi1>, vector<34x33xf32>
    %156 = vector.extract_strided_slice %155 {offsets = [0, 9], sizes = [34, 1], strides = [1, 1]} : vector<34x33xf32> to vector<34x1xf32>
    %157 = vector.extract_strided_slice %156 {offsets = [9, 0], sizes = [1, 1], strides = [1, 1]} : vector<34x1xf32> to vector<1x1xf32>
    %158 = vector.extract_strided_slice %155 {offsets = [9, 0], sizes = [1, 33], strides = [1, 1]} : vector<34x33xf32> to vector<1x33xf32>
    %159 = vector.broadcast %157 : vector<1x1xf32> to vector<34x1xf32>
    %160 = arith.divf %156, %159 : vector<34x1xf32>
    %c9_i32 = arith.constant 9 : i32
    %161 = vector.broadcast %c9_i32 : i32 to vector<34x33xi32>
    %162 = arith.cmpi eq, %23, %161 : vector<34x33xi32>
    %163 = vector.broadcast %160 : vector<34x1xf32> to vector<34x33xf32>
    %164 = vector.broadcast %158 : vector<1x33xf32> to vector<34x33xf32>
    %165 = arith.mulf %163, %164 : vector<34x33xf32>
    %166 = arith.subf %155, %165 : vector<34x33xf32>
    %167 = vector.shape_cast %160 : vector<34x1xf32> to vector<34x1xf32>
    %168 = vector.broadcast %167 : vector<34x1xf32> to vector<34x33xf32>
    %169 = arith.select %162, %168, %166 : vector<34x33xi1>, vector<34x33xf32>
    %170 = vector.extract_strided_slice %169 {offsets = [0, 10], sizes = [34, 1], strides = [1, 1]} : vector<34x33xf32> to vector<34x1xf32>
    %171 = vector.extract_strided_slice %170 {offsets = [10, 0], sizes = [1, 1], strides = [1, 1]} : vector<34x1xf32> to vector<1x1xf32>
    %172 = vector.extract_strided_slice %169 {offsets = [10, 0], sizes = [1, 33], strides = [1, 1]} : vector<34x33xf32> to vector<1x33xf32>
    %173 = vector.broadcast %171 : vector<1x1xf32> to vector<34x1xf32>
    %174 = arith.divf %170, %173 : vector<34x1xf32>
    %c10_i32 = arith.constant 10 : i32
    %175 = vector.broadcast %c10_i32 : i32 to vector<34x33xi32>
    %176 = arith.cmpi eq, %23, %175 : vector<34x33xi32>
    %177 = vector.broadcast %174 : vector<34x1xf32> to vector<34x33xf32>
    %178 = vector.broadcast %172 : vector<1x33xf32> to vector<34x33xf32>
    %179 = arith.mulf %177, %178 : vector<34x33xf32>
    %180 = arith.subf %169, %179 : vector<34x33xf32>
    %181 = vector.shape_cast %174 : vector<34x1xf32> to vector<34x1xf32>
    %182 = vector.broadcast %181 : vector<34x1xf32> to vector<34x33xf32>
    %183 = arith.select %176, %182, %180 : vector<34x33xi1>, vector<34x33xf32>
    %184 = vector.extract_strided_slice %183 {offsets = [0, 11], sizes = [34, 1], strides = [1, 1]} : vector<34x33xf32> to vector<34x1xf32>
    %185 = vector.extract_strided_slice %184 {offsets = [11, 0], sizes = [1, 1], strides = [1, 1]} : vector<34x1xf32> to vector<1x1xf32>
    %186 = vector.extract_strided_slice %183 {offsets = [11, 0], sizes = [1, 33], strides = [1, 1]} : vector<34x33xf32> to vector<1x33xf32>
    %187 = vector.broadcast %185 : vector<1x1xf32> to vector<34x1xf32>
    %188 = arith.divf %184, %187 : vector<34x1xf32>
    %c11_i32 = arith.constant 11 : i32
    %189 = vector.broadcast %c11_i32 : i32 to vector<34x33xi32>
    %190 = arith.cmpi eq, %23, %189 : vector<34x33xi32>
    %191 = vector.broadcast %188 : vector<34x1xf32> to vector<34x33xf32>
    %192 = vector.broadcast %186 : vector<1x33xf32> to vector<34x33xf32>
    %193 = arith.mulf %191, %192 : vector<34x33xf32>
    %194 = arith.subf %183, %193 : vector<34x33xf32>
    %195 = vector.shape_cast %188 : vector<34x1xf32> to vector<34x1xf32>
    %196 = vector.broadcast %195 : vector<34x1xf32> to vector<34x33xf32>
    %197 = arith.select %190, %196, %194 : vector<34x33xi1>, vector<34x33xf32>
    %198 = vector.extract_strided_slice %197 {offsets = [0, 12], sizes = [34, 1], strides = [1, 1]} : vector<34x33xf32> to vector<34x1xf32>
    %199 = vector.extract_strided_slice %198 {offsets = [12, 0], sizes = [1, 1], strides = [1, 1]} : vector<34x1xf32> to vector<1x1xf32>
    %200 = vector.extract_strided_slice %197 {offsets = [12, 0], sizes = [1, 33], strides = [1, 1]} : vector<34x33xf32> to vector<1x33xf32>
    %201 = vector.broadcast %199 : vector<1x1xf32> to vector<34x1xf32>
    %202 = arith.divf %198, %201 : vector<34x1xf32>
    %c12_i32 = arith.constant 12 : i32
    %203 = vector.broadcast %c12_i32 : i32 to vector<34x33xi32>
    %204 = arith.cmpi eq, %23, %203 : vector<34x33xi32>
    %205 = vector.broadcast %202 : vector<34x1xf32> to vector<34x33xf32>
    %206 = vector.broadcast %200 : vector<1x33xf32> to vector<34x33xf32>
    %207 = arith.mulf %205, %206 : vector<34x33xf32>
    %208 = arith.subf %197, %207 : vector<34x33xf32>
    %209 = vector.shape_cast %202 : vector<34x1xf32> to vector<34x1xf32>
    %210 = vector.broadcast %209 : vector<34x1xf32> to vector<34x33xf32>
    %211 = arith.select %204, %210, %208 : vector<34x33xi1>, vector<34x33xf32>
    %212 = vector.extract_strided_slice %211 {offsets = [0, 13], sizes = [34, 1], strides = [1, 1]} : vector<34x33xf32> to vector<34x1xf32>
    %213 = vector.extract_strided_slice %212 {offsets = [13, 0], sizes = [1, 1], strides = [1, 1]} : vector<34x1xf32> to vector<1x1xf32>
    %214 = vector.extract_strided_slice %211 {offsets = [13, 0], sizes = [1, 33], strides = [1, 1]} : vector<34x33xf32> to vector<1x33xf32>
    %215 = vector.broadcast %213 : vector<1x1xf32> to vector<34x1xf32>
    %216 = arith.divf %212, %215 : vector<34x1xf32>
    %c13_i32 = arith.constant 13 : i32
    %217 = vector.broadcast %c13_i32 : i32 to vector<34x33xi32>
    %218 = arith.cmpi eq, %23, %217 : vector<34x33xi32>
    %219 = vector.broadcast %216 : vector<34x1xf32> to vector<34x33xf32>
    %220 = vector.broadcast %214 : vector<1x33xf32> to vector<34x33xf32>
    %221 = arith.mulf %219, %220 : vector<34x33xf32>
    %222 = arith.subf %211, %221 : vector<34x33xf32>
    %223 = vector.shape_cast %216 : vector<34x1xf32> to vector<34x1xf32>
    %224 = vector.broadcast %223 : vector<34x1xf32> to vector<34x33xf32>
    %225 = arith.select %218, %224, %222 : vector<34x33xi1>, vector<34x33xf32>
    %226 = vector.extract_strided_slice %225 {offsets = [0, 14], sizes = [34, 1], strides = [1, 1]} : vector<34x33xf32> to vector<34x1xf32>
    %227 = vector.extract_strided_slice %226 {offsets = [14, 0], sizes = [1, 1], strides = [1, 1]} : vector<34x1xf32> to vector<1x1xf32>
    %228 = vector.extract_strided_slice %225 {offsets = [14, 0], sizes = [1, 33], strides = [1, 1]} : vector<34x33xf32> to vector<1x33xf32>
    %229 = vector.broadcast %227 : vector<1x1xf32> to vector<34x1xf32>
    %230 = arith.divf %226, %229 : vector<34x1xf32>
    %c14_i32 = arith.constant 14 : i32
    %231 = vector.broadcast %c14_i32 : i32 to vector<34x33xi32>
    %232 = arith.cmpi eq, %23, %231 : vector<34x33xi32>
    %233 = vector.broadcast %230 : vector<34x1xf32> to vector<34x33xf32>
    %234 = vector.broadcast %228 : vector<1x33xf32> to vector<34x33xf32>
    %235 = arith.mulf %233, %234 : vector<34x33xf32>
    %236 = arith.subf %225, %235 : vector<34x33xf32>
    %237 = vector.shape_cast %230 : vector<34x1xf32> to vector<34x1xf32>
    %238 = vector.broadcast %237 : vector<34x1xf32> to vector<34x33xf32>
    %239 = arith.select %232, %238, %236 : vector<34x33xi1>, vector<34x33xf32>
    %240 = vector.extract_strided_slice %239 {offsets = [0, 15], sizes = [34, 1], strides = [1, 1]} : vector<34x33xf32> to vector<34x1xf32>
    %241 = vector.extract_strided_slice %240 {offsets = [15, 0], sizes = [1, 1], strides = [1, 1]} : vector<34x1xf32> to vector<1x1xf32>
    %242 = vector.extract_strided_slice %239 {offsets = [15, 0], sizes = [1, 33], strides = [1, 1]} : vector<34x33xf32> to vector<1x33xf32>
    %243 = vector.broadcast %241 : vector<1x1xf32> to vector<34x1xf32>
    %244 = arith.divf %240, %243 : vector<34x1xf32>
    %c15_i32 = arith.constant 15 : i32
    %245 = vector.broadcast %c15_i32 : i32 to vector<34x33xi32>
    %246 = arith.cmpi eq, %23, %245 : vector<34x33xi32>
    %247 = vector.broadcast %244 : vector<34x1xf32> to vector<34x33xf32>
    %248 = vector.broadcast %242 : vector<1x33xf32> to vector<34x33xf32>
    %249 = arith.mulf %247, %248 : vector<34x33xf32>
    %250 = arith.subf %239, %249 : vector<34x33xf32>
    %251 = vector.shape_cast %244 : vector<34x1xf32> to vector<34x1xf32>
    %252 = vector.broadcast %251 : vector<34x1xf32> to vector<34x33xf32>
    %253 = arith.select %246, %252, %250 : vector<34x33xi1>, vector<34x33xf32>
    %254 = vector.extract_strided_slice %253 {offsets = [0, 16], sizes = [34, 1], strides = [1, 1]} : vector<34x33xf32> to vector<34x1xf32>
    %255 = vector.extract_strided_slice %254 {offsets = [16, 0], sizes = [1, 1], strides = [1, 1]} : vector<34x1xf32> to vector<1x1xf32>
    %256 = vector.extract_strided_slice %253 {offsets = [16, 0], sizes = [1, 33], strides = [1, 1]} : vector<34x33xf32> to vector<1x33xf32>
    %257 = vector.broadcast %255 : vector<1x1xf32> to vector<34x1xf32>
    %258 = arith.divf %254, %257 : vector<34x1xf32>
    %c16_i32 = arith.constant 16 : i32
    %259 = vector.broadcast %c16_i32 : i32 to vector<34x33xi32>
    %260 = arith.cmpi eq, %23, %259 : vector<34x33xi32>
    %261 = vector.broadcast %258 : vector<34x1xf32> to vector<34x33xf32>
    %262 = vector.broadcast %256 : vector<1x33xf32> to vector<34x33xf32>
    %263 = arith.mulf %261, %262 : vector<34x33xf32>
    %264 = arith.subf %253, %263 : vector<34x33xf32>
    %265 = vector.shape_cast %258 : vector<34x1xf32> to vector<34x1xf32>
    %266 = vector.broadcast %265 : vector<34x1xf32> to vector<34x33xf32>
    %267 = arith.select %260, %266, %264 : vector<34x33xi1>, vector<34x33xf32>
    %268 = vector.extract_strided_slice %267 {offsets = [0, 17], sizes = [34, 1], strides = [1, 1]} : vector<34x33xf32> to vector<34x1xf32>
    %269 = vector.extract_strided_slice %268 {offsets = [17, 0], sizes = [1, 1], strides = [1, 1]} : vector<34x1xf32> to vector<1x1xf32>
    %270 = vector.extract_strided_slice %267 {offsets = [17, 0], sizes = [1, 33], strides = [1, 1]} : vector<34x33xf32> to vector<1x33xf32>
    %271 = vector.broadcast %269 : vector<1x1xf32> to vector<34x1xf32>
    %272 = arith.divf %268, %271 : vector<34x1xf32>
    %c17_i32 = arith.constant 17 : i32
    %273 = vector.broadcast %c17_i32 : i32 to vector<34x33xi32>
    %274 = arith.cmpi eq, %23, %273 : vector<34x33xi32>
    %275 = vector.broadcast %272 : vector<34x1xf32> to vector<34x33xf32>
    %276 = vector.broadcast %270 : vector<1x33xf32> to vector<34x33xf32>
    %277 = arith.mulf %275, %276 : vector<34x33xf32>
    %278 = arith.subf %267, %277 : vector<34x33xf32>
    %279 = vector.shape_cast %272 : vector<34x1xf32> to vector<34x1xf32>
    %280 = vector.broadcast %279 : vector<34x1xf32> to vector<34x33xf32>
    %281 = arith.select %274, %280, %278 : vector<34x33xi1>, vector<34x33xf32>
    %282 = vector.extract_strided_slice %281 {offsets = [0, 18], sizes = [34, 1], strides = [1, 1]} : vector<34x33xf32> to vector<34x1xf32>
    %283 = vector.extract_strided_slice %282 {offsets = [18, 0], sizes = [1, 1], strides = [1, 1]} : vector<34x1xf32> to vector<1x1xf32>
    %284 = vector.extract_strided_slice %281 {offsets = [18, 0], sizes = [1, 33], strides = [1, 1]} : vector<34x33xf32> to vector<1x33xf32>
    %285 = vector.broadcast %283 : vector<1x1xf32> to vector<34x1xf32>
    %286 = arith.divf %282, %285 : vector<34x1xf32>
    %c18_i32 = arith.constant 18 : i32
    %287 = vector.broadcast %c18_i32 : i32 to vector<34x33xi32>
    %288 = arith.cmpi eq, %23, %287 : vector<34x33xi32>
    %289 = vector.broadcast %286 : vector<34x1xf32> to vector<34x33xf32>
    %290 = vector.broadcast %284 : vector<1x33xf32> to vector<34x33xf32>
    %291 = arith.mulf %289, %290 : vector<34x33xf32>
    %292 = arith.subf %281, %291 : vector<34x33xf32>
    %293 = vector.shape_cast %286 : vector<34x1xf32> to vector<34x1xf32>
    %294 = vector.broadcast %293 : vector<34x1xf32> to vector<34x33xf32>
    %295 = arith.select %288, %294, %292 : vector<34x33xi1>, vector<34x33xf32>
    %296 = vector.extract_strided_slice %295 {offsets = [0, 19], sizes = [34, 1], strides = [1, 1]} : vector<34x33xf32> to vector<34x1xf32>
    %297 = vector.extract_strided_slice %296 {offsets = [19, 0], sizes = [1, 1], strides = [1, 1]} : vector<34x1xf32> to vector<1x1xf32>
    %298 = vector.extract_strided_slice %295 {offsets = [19, 0], sizes = [1, 33], strides = [1, 1]} : vector<34x33xf32> to vector<1x33xf32>
    %299 = vector.broadcast %297 : vector<1x1xf32> to vector<34x1xf32>
    %300 = arith.divf %296, %299 : vector<34x1xf32>
    %c19_i32 = arith.constant 19 : i32
    %301 = vector.broadcast %c19_i32 : i32 to vector<34x33xi32>
    %302 = arith.cmpi eq, %23, %301 : vector<34x33xi32>
    %303 = vector.broadcast %300 : vector<34x1xf32> to vector<34x33xf32>
    %304 = vector.broadcast %298 : vector<1x33xf32> to vector<34x33xf32>
    %305 = arith.mulf %303, %304 : vector<34x33xf32>
    %306 = arith.subf %295, %305 : vector<34x33xf32>
    %307 = vector.shape_cast %300 : vector<34x1xf32> to vector<34x1xf32>
    %308 = vector.broadcast %307 : vector<34x1xf32> to vector<34x33xf32>
    %309 = arith.select %302, %308, %306 : vector<34x33xi1>, vector<34x33xf32>
    %310 = vector.extract_strided_slice %309 {offsets = [0, 20], sizes = [34, 1], strides = [1, 1]} : vector<34x33xf32> to vector<34x1xf32>
    %311 = vector.extract_strided_slice %310 {offsets = [20, 0], sizes = [1, 1], strides = [1, 1]} : vector<34x1xf32> to vector<1x1xf32>
    %312 = vector.extract_strided_slice %309 {offsets = [20, 0], sizes = [1, 33], strides = [1, 1]} : vector<34x33xf32> to vector<1x33xf32>
    %313 = vector.broadcast %311 : vector<1x1xf32> to vector<34x1xf32>
    %314 = arith.divf %310, %313 : vector<34x1xf32>
    %c20_i32 = arith.constant 20 : i32
    %315 = vector.broadcast %c20_i32 : i32 to vector<34x33xi32>
    %316 = arith.cmpi eq, %23, %315 : vector<34x33xi32>
    %317 = vector.broadcast %314 : vector<34x1xf32> to vector<34x33xf32>
    %318 = vector.broadcast %312 : vector<1x33xf32> to vector<34x33xf32>
    %319 = arith.mulf %317, %318 : vector<34x33xf32>
    %320 = arith.subf %309, %319 : vector<34x33xf32>
    %321 = vector.shape_cast %314 : vector<34x1xf32> to vector<34x1xf32>
    %322 = vector.broadcast %321 : vector<34x1xf32> to vector<34x33xf32>
    %323 = arith.select %316, %322, %320 : vector<34x33xi1>, vector<34x33xf32>
    %324 = vector.extract_strided_slice %323 {offsets = [0, 21], sizes = [34, 1], strides = [1, 1]} : vector<34x33xf32> to vector<34x1xf32>
    %325 = vector.extract_strided_slice %324 {offsets = [21, 0], sizes = [1, 1], strides = [1, 1]} : vector<34x1xf32> to vector<1x1xf32>
    %326 = vector.extract_strided_slice %323 {offsets = [21, 0], sizes = [1, 33], strides = [1, 1]} : vector<34x33xf32> to vector<1x33xf32>
    %327 = vector.broadcast %325 : vector<1x1xf32> to vector<34x1xf32>
    %328 = arith.divf %324, %327 : vector<34x1xf32>
    %c21_i32 = arith.constant 21 : i32
    %329 = vector.broadcast %c21_i32 : i32 to vector<34x33xi32>
    %330 = arith.cmpi eq, %23, %329 : vector<34x33xi32>
    %331 = vector.broadcast %328 : vector<34x1xf32> to vector<34x33xf32>
    %332 = vector.broadcast %326 : vector<1x33xf32> to vector<34x33xf32>
    %333 = arith.mulf %331, %332 : vector<34x33xf32>
    %334 = arith.subf %323, %333 : vector<34x33xf32>
    %335 = vector.shape_cast %328 : vector<34x1xf32> to vector<34x1xf32>
    %336 = vector.broadcast %335 : vector<34x1xf32> to vector<34x33xf32>
    %337 = arith.select %330, %336, %334 : vector<34x33xi1>, vector<34x33xf32>
    %338 = vector.extract_strided_slice %337 {offsets = [0, 22], sizes = [34, 1], strides = [1, 1]} : vector<34x33xf32> to vector<34x1xf32>
    %339 = vector.extract_strided_slice %338 {offsets = [22, 0], sizes = [1, 1], strides = [1, 1]} : vector<34x1xf32> to vector<1x1xf32>
    %340 = vector.extract_strided_slice %337 {offsets = [22, 0], sizes = [1, 33], strides = [1, 1]} : vector<34x33xf32> to vector<1x33xf32>
    %341 = vector.broadcast %339 : vector<1x1xf32> to vector<34x1xf32>
    %342 = arith.divf %338, %341 : vector<34x1xf32>
    %c22_i32 = arith.constant 22 : i32
    %343 = vector.broadcast %c22_i32 : i32 to vector<34x33xi32>
    %344 = arith.cmpi eq, %23, %343 : vector<34x33xi32>
    %345 = vector.broadcast %342 : vector<34x1xf32> to vector<34x33xf32>
    %346 = vector.broadcast %340 : vector<1x33xf32> to vector<34x33xf32>
    %347 = arith.mulf %345, %346 : vector<34x33xf32>
    %348 = arith.subf %337, %347 : vector<34x33xf32>
    %349 = vector.shape_cast %342 : vector<34x1xf32> to vector<34x1xf32>
    %350 = vector.broadcast %349 : vector<34x1xf32> to vector<34x33xf32>
    %351 = arith.select %344, %350, %348 : vector<34x33xi1>, vector<34x33xf32>
    %352 = vector.extract_strided_slice %351 {offsets = [0, 23], sizes = [34, 1], strides = [1, 1]} : vector<34x33xf32> to vector<34x1xf32>
    %353 = vector.extract_strided_slice %352 {offsets = [23, 0], sizes = [1, 1], strides = [1, 1]} : vector<34x1xf32> to vector<1x1xf32>
    %354 = vector.extract_strided_slice %351 {offsets = [23, 0], sizes = [1, 33], strides = [1, 1]} : vector<34x33xf32> to vector<1x33xf32>
    %355 = vector.broadcast %353 : vector<1x1xf32> to vector<34x1xf32>
    %356 = arith.divf %352, %355 : vector<34x1xf32>
    %c23_i32 = arith.constant 23 : i32
    %357 = vector.broadcast %c23_i32 : i32 to vector<34x33xi32>
    %358 = arith.cmpi eq, %23, %357 : vector<34x33xi32>
    %359 = vector.broadcast %356 : vector<34x1xf32> to vector<34x33xf32>
    %360 = vector.broadcast %354 : vector<1x33xf32> to vector<34x33xf32>
    %361 = arith.mulf %359, %360 : vector<34x33xf32>
    %362 = arith.subf %351, %361 : vector<34x33xf32>
    %363 = vector.shape_cast %356 : vector<34x1xf32> to vector<34x1xf32>
    %364 = vector.broadcast %363 : vector<34x1xf32> to vector<34x33xf32>
    %365 = arith.select %358, %364, %362 : vector<34x33xi1>, vector<34x33xf32>
    %366 = vector.extract_strided_slice %365 {offsets = [0, 24], sizes = [34, 1], strides = [1, 1]} : vector<34x33xf32> to vector<34x1xf32>
    %367 = vector.extract_strided_slice %366 {offsets = [24, 0], sizes = [1, 1], strides = [1, 1]} : vector<34x1xf32> to vector<1x1xf32>
    %368 = vector.extract_strided_slice %365 {offsets = [24, 0], sizes = [1, 33], strides = [1, 1]} : vector<34x33xf32> to vector<1x33xf32>
    %369 = vector.broadcast %367 : vector<1x1xf32> to vector<34x1xf32>
    %370 = arith.divf %366, %369 : vector<34x1xf32>
    %c24_i32 = arith.constant 24 : i32
    %371 = vector.broadcast %c24_i32 : i32 to vector<34x33xi32>
    %372 = arith.cmpi eq, %23, %371 : vector<34x33xi32>
    %373 = vector.broadcast %370 : vector<34x1xf32> to vector<34x33xf32>
    %374 = vector.broadcast %368 : vector<1x33xf32> to vector<34x33xf32>
    %375 = arith.mulf %373, %374 : vector<34x33xf32>
    %376 = arith.subf %365, %375 : vector<34x33xf32>
    %377 = vector.shape_cast %370 : vector<34x1xf32> to vector<34x1xf32>
    %378 = vector.broadcast %377 : vector<34x1xf32> to vector<34x33xf32>
    %379 = arith.select %372, %378, %376 : vector<34x33xi1>, vector<34x33xf32>
    %380 = vector.extract_strided_slice %379 {offsets = [0, 25], sizes = [34, 1], strides = [1, 1]} : vector<34x33xf32> to vector<34x1xf32>
    %381 = vector.extract_strided_slice %380 {offsets = [25, 0], sizes = [1, 1], strides = [1, 1]} : vector<34x1xf32> to vector<1x1xf32>
    %382 = vector.extract_strided_slice %379 {offsets = [25, 0], sizes = [1, 33], strides = [1, 1]} : vector<34x33xf32> to vector<1x33xf32>
    %383 = vector.broadcast %381 : vector<1x1xf32> to vector<34x1xf32>
    %384 = arith.divf %380, %383 : vector<34x1xf32>
    %c25_i32 = arith.constant 25 : i32
    %385 = vector.broadcast %c25_i32 : i32 to vector<34x33xi32>
    %386 = arith.cmpi eq, %23, %385 : vector<34x33xi32>
    %387 = vector.broadcast %384 : vector<34x1xf32> to vector<34x33xf32>
    %388 = vector.broadcast %382 : vector<1x33xf32> to vector<34x33xf32>
    %389 = arith.mulf %387, %388 : vector<34x33xf32>
    %390 = arith.subf %379, %389 : vector<34x33xf32>
    %391 = vector.shape_cast %384 : vector<34x1xf32> to vector<34x1xf32>
    %392 = vector.broadcast %391 : vector<34x1xf32> to vector<34x33xf32>
    %393 = arith.select %386, %392, %390 : vector<34x33xi1>, vector<34x33xf32>
    %394 = vector.extract_strided_slice %393 {offsets = [0, 26], sizes = [34, 1], strides = [1, 1]} : vector<34x33xf32> to vector<34x1xf32>
    %395 = vector.extract_strided_slice %394 {offsets = [26, 0], sizes = [1, 1], strides = [1, 1]} : vector<34x1xf32> to vector<1x1xf32>
    %396 = vector.extract_strided_slice %393 {offsets = [26, 0], sizes = [1, 33], strides = [1, 1]} : vector<34x33xf32> to vector<1x33xf32>
    %397 = vector.broadcast %395 : vector<1x1xf32> to vector<34x1xf32>
    %398 = arith.divf %394, %397 : vector<34x1xf32>
    %c26_i32 = arith.constant 26 : i32
    %399 = vector.broadcast %c26_i32 : i32 to vector<34x33xi32>
    %400 = arith.cmpi eq, %23, %399 : vector<34x33xi32>
    %401 = vector.broadcast %398 : vector<34x1xf32> to vector<34x33xf32>
    %402 = vector.broadcast %396 : vector<1x33xf32> to vector<34x33xf32>
    %403 = arith.mulf %401, %402 : vector<34x33xf32>
    %404 = arith.subf %393, %403 : vector<34x33xf32>
    %405 = vector.shape_cast %398 : vector<34x1xf32> to vector<34x1xf32>
    %406 = vector.broadcast %405 : vector<34x1xf32> to vector<34x33xf32>
    %407 = arith.select %400, %406, %404 : vector<34x33xi1>, vector<34x33xf32>
    %408 = vector.extract_strided_slice %407 {offsets = [0, 27], sizes = [34, 1], strides = [1, 1]} : vector<34x33xf32> to vector<34x1xf32>
    %409 = vector.extract_strided_slice %408 {offsets = [27, 0], sizes = [1, 1], strides = [1, 1]} : vector<34x1xf32> to vector<1x1xf32>
    %410 = vector.extract_strided_slice %407 {offsets = [27, 0], sizes = [1, 33], strides = [1, 1]} : vector<34x33xf32> to vector<1x33xf32>
    %411 = vector.broadcast %409 : vector<1x1xf32> to vector<34x1xf32>
    %412 = arith.divf %408, %411 : vector<34x1xf32>
    %c27_i32 = arith.constant 27 : i32
    %413 = vector.broadcast %c27_i32 : i32 to vector<34x33xi32>
    %414 = arith.cmpi eq, %23, %413 : vector<34x33xi32>
    %415 = vector.broadcast %412 : vector<34x1xf32> to vector<34x33xf32>
    %416 = vector.broadcast %410 : vector<1x33xf32> to vector<34x33xf32>
    %417 = arith.mulf %415, %416 : vector<34x33xf32>
    %418 = arith.subf %407, %417 : vector<34x33xf32>
    %419 = vector.shape_cast %412 : vector<34x1xf32> to vector<34x1xf32>
    %420 = vector.broadcast %419 : vector<34x1xf32> to vector<34x33xf32>
    %421 = arith.select %414, %420, %418 : vector<34x33xi1>, vector<34x33xf32>
    %422 = vector.extract_strided_slice %421 {offsets = [0, 28], sizes = [34, 1], strides = [1, 1]} : vector<34x33xf32> to vector<34x1xf32>
    %423 = vector.extract_strided_slice %422 {offsets = [28, 0], sizes = [1, 1], strides = [1, 1]} : vector<34x1xf32> to vector<1x1xf32>
    %424 = vector.extract_strided_slice %421 {offsets = [28, 0], sizes = [1, 33], strides = [1, 1]} : vector<34x33xf32> to vector<1x33xf32>
    %425 = vector.broadcast %423 : vector<1x1xf32> to vector<34x1xf32>
    %426 = arith.divf %422, %425 : vector<34x1xf32>
    %c28_i32 = arith.constant 28 : i32
    %427 = vector.broadcast %c28_i32 : i32 to vector<34x33xi32>
    %428 = arith.cmpi eq, %23, %427 : vector<34x33xi32>
    %429 = vector.broadcast %426 : vector<34x1xf32> to vector<34x33xf32>
    %430 = vector.broadcast %424 : vector<1x33xf32> to vector<34x33xf32>
    %431 = arith.mulf %429, %430 : vector<34x33xf32>
    %432 = arith.subf %421, %431 : vector<34x33xf32>
    %433 = vector.shape_cast %426 : vector<34x1xf32> to vector<34x1xf32>
    %434 = vector.broadcast %433 : vector<34x1xf32> to vector<34x33xf32>
    %435 = arith.select %428, %434, %432 : vector<34x33xi1>, vector<34x33xf32>
    %436 = vector.extract_strided_slice %435 {offsets = [0, 29], sizes = [34, 1], strides = [1, 1]} : vector<34x33xf32> to vector<34x1xf32>
    %437 = vector.extract_strided_slice %436 {offsets = [29, 0], sizes = [1, 1], strides = [1, 1]} : vector<34x1xf32> to vector<1x1xf32>
    %438 = vector.extract_strided_slice %435 {offsets = [29, 0], sizes = [1, 33], strides = [1, 1]} : vector<34x33xf32> to vector<1x33xf32>
    %439 = vector.broadcast %437 : vector<1x1xf32> to vector<34x1xf32>
    %440 = arith.divf %436, %439 : vector<34x1xf32>
    %c29_i32 = arith.constant 29 : i32
    %441 = vector.broadcast %c29_i32 : i32 to vector<34x33xi32>
    %442 = arith.cmpi eq, %23, %441 : vector<34x33xi32>
    %443 = vector.broadcast %440 : vector<34x1xf32> to vector<34x33xf32>
    %444 = vector.broadcast %438 : vector<1x33xf32> to vector<34x33xf32>
    %445 = arith.mulf %443, %444 : vector<34x33xf32>
    %446 = arith.subf %435, %445 : vector<34x33xf32>
    %447 = vector.shape_cast %440 : vector<34x1xf32> to vector<34x1xf32>
    %448 = vector.broadcast %447 : vector<34x1xf32> to vector<34x33xf32>
    %449 = arith.select %442, %448, %446 : vector<34x33xi1>, vector<34x33xf32>
    %450 = vector.extract_strided_slice %449 {offsets = [0, 30], sizes = [34, 1], strides = [1, 1]} : vector<34x33xf32> to vector<34x1xf32>
    %451 = vector.extract_strided_slice %450 {offsets = [30, 0], sizes = [1, 1], strides = [1, 1]} : vector<34x1xf32> to vector<1x1xf32>
    %452 = vector.extract_strided_slice %449 {offsets = [30, 0], sizes = [1, 33], strides = [1, 1]} : vector<34x33xf32> to vector<1x33xf32>
    %453 = vector.broadcast %451 : vector<1x1xf32> to vector<34x1xf32>
    %454 = arith.divf %450, %453 : vector<34x1xf32>
    %c30_i32 = arith.constant 30 : i32
    %455 = vector.broadcast %c30_i32 : i32 to vector<34x33xi32>
    %456 = arith.cmpi eq, %23, %455 : vector<34x33xi32>
    %457 = vector.broadcast %454 : vector<34x1xf32> to vector<34x33xf32>
    %458 = vector.broadcast %452 : vector<1x33xf32> to vector<34x33xf32>
    %459 = arith.mulf %457, %458 : vector<34x33xf32>
    %460 = arith.subf %449, %459 : vector<34x33xf32>
    %461 = vector.shape_cast %454 : vector<34x1xf32> to vector<34x1xf32>
    %462 = vector.broadcast %461 : vector<34x1xf32> to vector<34x33xf32>
    %463 = arith.select %456, %462, %460 : vector<34x33xi1>, vector<34x33xf32>
    %464 = vector.extract_strided_slice %463 {offsets = [0, 31], sizes = [34, 1], strides = [1, 1]} : vector<34x33xf32> to vector<34x1xf32>
    %465 = vector.extract_strided_slice %464 {offsets = [31, 0], sizes = [1, 1], strides = [1, 1]} : vector<34x1xf32> to vector<1x1xf32>
    %466 = vector.extract_strided_slice %463 {offsets = [31, 0], sizes = [1, 33], strides = [1, 1]} : vector<34x33xf32> to vector<1x33xf32>
    %467 = vector.broadcast %465 : vector<1x1xf32> to vector<34x1xf32>
    %468 = arith.divf %464, %467 : vector<34x1xf32>
    %c31_i32 = arith.constant 31 : i32
    %469 = vector.broadcast %c31_i32 : i32 to vector<34x33xi32>
    %470 = arith.cmpi eq, %23, %469 : vector<34x33xi32>
    %471 = vector.broadcast %468 : vector<34x1xf32> to vector<34x33xf32>
    %472 = vector.broadcast %466 : vector<1x33xf32> to vector<34x33xf32>
    %473 = arith.mulf %471, %472 : vector<34x33xf32>
    %474 = arith.subf %463, %473 : vector<34x33xf32>
    %475 = vector.shape_cast %468 : vector<34x1xf32> to vector<34x1xf32>
    %476 = vector.broadcast %475 : vector<34x1xf32> to vector<34x33xf32>
    %477 = arith.select %470, %476, %474 : vector<34x33xi1>, vector<34x33xf32>
    %478 = vector.extract_strided_slice %477 {offsets = [0, 32], sizes = [34, 1], strides = [1, 1]} : vector<34x33xf32> to vector<34x1xf32>
    %479 = vector.extract_strided_slice %478 {offsets = [32, 0], sizes = [1, 1], strides = [1, 1]} : vector<34x1xf32> to vector<1x1xf32>
    %480 = vector.extract_strided_slice %477 {offsets = [32, 0], sizes = [1, 33], strides = [1, 1]} : vector<34x33xf32> to vector<1x33xf32>
    %481 = vector.broadcast %479 : vector<1x1xf32> to vector<34x1xf32>
    %482 = arith.divf %478, %481 : vector<34x1xf32>
    %c32_i32 = arith.constant 32 : i32
    %483 = vector.broadcast %c32_i32 : i32 to vector<34x33xi32>
    %484 = arith.cmpi eq, %23, %483 : vector<34x33xi32>
    %485 = vector.broadcast %482 : vector<34x1xf32> to vector<34x33xf32>
    %486 = vector.broadcast %480 : vector<1x33xf32> to vector<34x33xf32>
    %487 = arith.mulf %485, %486 : vector<34x33xf32>
    %488 = arith.subf %477, %487 : vector<34x33xf32>
    %489 = vector.shape_cast %482 : vector<34x1xf32> to vector<34x1xf32>
    %490 = vector.broadcast %489 : vector<34x1xf32> to vector<34x33xf32>
    %491 = arith.select %484, %490, %488 : vector<34x33xi1>, vector<34x33xf32>
    %492 = vector.extract_strided_slice %491 {offsets = [33, 0], sizes = [1, 33], strides = [1, 1]} : vector<34x33xf32> to vector<1x33xf32>
    %493 = vector.extract_strided_slice %492 {offsets = [0, 0], sizes = [1, 32], strides = [1, 1]} : vector<1x33xf32> to vector<1x32xf32>
    %494 = vector.extract_strided_slice %492 {offsets = [0, 32], sizes = [1, 1], strides = [1, 1]} : vector<1x33xf32> to vector<1x1xf32>
    %cst_18 = arith.constant 0.000000e+00 : f32
    %495 = vector.broadcast %cst_18 : f32 to vector<1x32xf32>
    %cst_19 = arith.constant 0.000000e+00 : f32
    %496 = vector.broadcast %cst_19 : f32 to vector<1x1xf32>
    %cst_20 = arith.constant dense<0.000000e+00> : vector<8x32xf32>
    %497 = tpu.matmul %1, %7, %cst_20 {dimension_numbers = #tpu.dot_dimension_numbers<[1], [1], [0], [0], [0, 0, 1, 0], [], []>} : vector<8x4xf32>, vector<32x4xf32>, vector<8x32xf32> -> vector<8x32xf32>
    %498 = vector.broadcast %8 : vector<1x32xf32> to vector<8x32xf32>
    %499 = arith.addf %497, %498 : vector<8x32xf32>
    %cst_21 = arith.constant 0.000000e+00 : f32
    %500 = vector.broadcast %cst_21 : f32 to vector<8x32xf32>
    %501 = arith.maximumf %499, %500 : vector<8x32xf32>
    %cst_22 = arith.constant dense<0.000000e+00> : vector<8x32xf32>
    %502 = tpu.matmul %501, %6, %cst_22 {dimension_numbers = #tpu.dot_dimension_numbers<[1], [1], [0], [0], [0, 0, 1, 0], [], []>} : vector<8x32xf32>, vector<32x32xf32>, vector<8x32xf32> -> vector<8x32xf32>
    %503 = vector.broadcast %9 : vector<1x32xf32> to vector<8x32xf32>
    %504 = arith.addf %502, %503 : vector<8x32xf32>
    %cst_23 = arith.constant 0.000000e+00 : f32
    %505 = vector.broadcast %cst_23 : f32 to vector<8x32xf32>
    %506 = arith.maximumf %504, %505 : vector<8x32xf32>
    %507 = vector.broadcast %493 : vector<1x32xf32> to vector<8x32xf32>
    %508 = arith.mulf %506, %507 : vector<8x32xf32>
    %cst_24 = arith.constant dense<0.000000e+00> : vector<8xf32>
    %509 = vector.multi_reduction <add>, %508, %cst_24 [1] : vector<8x32xf32> to vector<8xf32>
    %510 = vector.shape_cast %509 : vector<8xf32> to vector<8x1xf32>
    %511 = vector.broadcast %494 : vector<1x1xf32> to vector<8x1xf32>
    %512 = arith.addf %510, %511 : vector<8x1xf32>
    %513 = arith.subf %512, %5 : vector<8x1xf32>
    %cst_25 = arith.constant 2.500000e-01 : f32
    %514 = vector.broadcast %cst_25 : f32 to vector<8x1xf32>
    %515 = arith.mulf %514, %513 : vector<8x1xf32>
    %516 = vector.broadcast %515 : vector<8x1xf32> to vector<8x32xf32>
    %517 = arith.mulf %516, %506 : vector<8x32xf32>
    %cst_26 = arith.constant dense<0.000000e+00> : vector<32xf32>
    %518 = vector.multi_reduction <add>, %517, %cst_26 [0] : vector<8x32xf32> to vector<32xf32>
    %519 = vector.shape_cast %518 : vector<32xf32> to vector<1x32xf32>
    %cst_27 = arith.constant dense<0.000000e+00> : vector<1xf32>
    %520 = vector.multi_reduction <add>, %515, %cst_27 [0] : vector<8x1xf32> to vector<1xf32>
    %521 = vector.shape_cast %520 : vector<1xf32> to vector<1x1xf32>
    %cst_28 = arith.constant 0.000000e+00 : f32
    %522 = vector.broadcast %cst_28 : f32 to vector<8x32xf32>
    %523 = arith.cmpf ogt, %506, %522 : vector<8x32xf32>
    %524 = vector.broadcast %515 : vector<8x1xf32> to vector<8x32xf32>
    %525 = vector.broadcast %493 : vector<1x32xf32> to vector<8x32xf32>
    %526 = arith.mulf %524, %525 : vector<8x32xf32>
    %cst_29 = arith.constant 0.000000e+00 : f32
    %527 = vector.broadcast %cst_29 : f32 to vector<8x32xf32>
    %528 = arith.select %523, %526, %527 : vector<8x32xi1>, vector<8x32xf32>
    %cst_30 = arith.constant dense<0.000000e+00> : vector<32x32xf32>
    %529 = tpu.matmul %528, %501, %cst_30 {dimension_numbers = #tpu.dot_dimension_numbers<[0], [0], [1], [1], [0, 1, 1, 1], [], []>} : vector<8x32xf32>, vector<8x32xf32>, vector<32x32xf32> -> vector<32x32xf32>
    %cst_31 = arith.constant dense<0.000000e+00> : vector<32xf32>
    %530 = vector.multi_reduction <add>, %528, %cst_31 [0] : vector<8x32xf32> to vector<32xf32>
    %531 = vector.shape_cast %530 : vector<32xf32> to vector<1x32xf32>
    %cst_32 = arith.constant 0.000000e+00 : f32
    %532 = vector.broadcast %cst_32 : f32 to vector<8x32xf32>
    %533 = arith.cmpf ogt, %501, %532 : vector<8x32xf32>
    %cst_33 = arith.constant dense<0.000000e+00> : vector<8x32xf32>
    %534 = tpu.matmul %528, %6, %cst_33 {dimension_numbers = #tpu.dot_dimension_numbers<[1], [0], [0], [1], [0, 0, 1, 1], [], []>} : vector<8x32xf32>, vector<32x32xf32>, vector<8x32xf32> -> vector<8x32xf32>
    %cst_34 = arith.constant 0.000000e+00 : f32
    %535 = vector.broadcast %cst_34 : f32 to vector<8x32xf32>
    %536 = arith.select %533, %534, %535 : vector<8x32xi1>, vector<8x32xf32>
    %cst_35 = arith.constant dense<0.000000e+00> : vector<32x4xf32>
    %537 = tpu.matmul %536, %1, %cst_35 {dimension_numbers = #tpu.dot_dimension_numbers<[0], [0], [1], [1], [0, 1, 1, 1], [], []>} : vector<8x32xf32>, vector<8x4xf32>, vector<32x4xf32> -> vector<32x4xf32>
    %cst_36 = arith.constant dense<0.000000e+00> : vector<32xf32>
    %538 = vector.multi_reduction <add>, %536, %cst_36 [0] : vector<8x32xf32> to vector<32xf32>
    %539 = vector.shape_cast %538 : vector<32xf32> to vector<1x32xf32>
    %540 = arith.addf %495, %519 : vector<1x32xf32>
    %541 = arith.addf %496, %521 : vector<1x1xf32>
    %cst_37 = arith.constant 0.00999999977 : f32
    %542 = vector.broadcast %cst_37 : f32 to vector<32x4xf32>
    %543 = arith.mulf %542, %537 : vector<32x4xf32>
    %544 = arith.subf %7, %543 : vector<32x4xf32>
    %cst_38 = arith.constant 0.00999999977 : f32
    %545 = vector.broadcast %cst_38 : f32 to vector<1x32xf32>
    %546 = arith.mulf %545, %539 : vector<1x32xf32>
    %547 = arith.subf %8, %546 : vector<1x32xf32>
    %cst_39 = arith.constant 0.00999999977 : f32
    %548 = vector.broadcast %cst_39 : f32 to vector<32x32xf32>
    %549 = arith.mulf %548, %529 : vector<32x32xf32>
    %550 = arith.subf %6, %549 : vector<32x32xf32>
    %cst_40 = arith.constant 0.00999999977 : f32
    %551 = vector.broadcast %cst_40 : f32 to vector<1x32xf32>
    %552 = arith.mulf %551, %531 : vector<1x32xf32>
    %553 = arith.subf %9, %552 : vector<1x32xf32>
    %cst_41 = arith.constant 0.00999999977 : f32
    %554 = vector.broadcast %cst_41 : f32 to vector<1x32xf32>
    %555 = arith.mulf %554, %519 : vector<1x32xf32>
    %556 = arith.subf %493, %555 : vector<1x32xf32>
    %cst_42 = arith.constant 0.00999999977 : f32
    %557 = vector.broadcast %cst_42 : f32 to vector<1x1xf32>
    %558 = arith.mulf %557, %521 : vector<1x1xf32>
    %559 = arith.subf %494, %558 : vector<1x1xf32>
    %cst_43 = arith.constant dense<0.000000e+00> : vector<8x32xf32>
    %560 = tpu.matmul %1, %544, %cst_43 {dimension_numbers = #tpu.dot_dimension_numbers<[1], [1], [0], [0], [0, 0, 1, 0], [], []>} : vector<8x4xf32>, vector<32x4xf32>, vector<8x32xf32> -> vector<8x32xf32>
    %561 = vector.broadcast %547 : vector<1x32xf32> to vector<8x32xf32>
    %562 = arith.addf %560, %561 : vector<8x32xf32>
    %cst_44 = arith.constant 0.000000e+00 : f32
    %563 = vector.broadcast %cst_44 : f32 to vector<8x32xf32>
    %564 = arith.maximumf %562, %563 : vector<8x32xf32>
    %cst_45 = arith.constant dense<0.000000e+00> : vector<8x32xf32>
    %565 = tpu.matmul %564, %550, %cst_45 {dimension_numbers = #tpu.dot_dimension_numbers<[1], [1], [0], [0], [0, 0, 1, 0], [], []>} : vector<8x32xf32>, vector<32x32xf32>, vector<8x32xf32> -> vector<8x32xf32>
    %566 = vector.broadcast %553 : vector<1x32xf32> to vector<8x32xf32>
    %567 = arith.addf %565, %566 : vector<8x32xf32>
    %cst_46 = arith.constant 0.000000e+00 : f32
    %568 = vector.broadcast %cst_46 : f32 to vector<8x32xf32>
    %569 = arith.maximumf %567, %568 : vector<8x32xf32>
    %570 = vector.broadcast %556 : vector<1x32xf32> to vector<8x32xf32>
    %571 = arith.mulf %569, %570 : vector<8x32xf32>
    %cst_47 = arith.constant dense<0.000000e+00> : vector<8xf32>
    %572 = vector.multi_reduction <add>, %571, %cst_47 [1] : vector<8x32xf32> to vector<8xf32>
    %573 = vector.shape_cast %572 : vector<8xf32> to vector<8x1xf32>
    %574 = vector.broadcast %559 : vector<1x1xf32> to vector<8x1xf32>
    %575 = arith.addf %573, %574 : vector<8x1xf32>
    %576 = arith.subf %575, %5 : vector<8x1xf32>
    %cst_48 = arith.constant 2.500000e-01 : f32
    %577 = vector.broadcast %cst_48 : f32 to vector<8x1xf32>
    %578 = arith.mulf %577, %576 : vector<8x1xf32>
    %579 = vector.broadcast %578 : vector<8x1xf32> to vector<8x32xf32>
    %580 = arith.mulf %579, %569 : vector<8x32xf32>
    %cst_49 = arith.constant dense<0.000000e+00> : vector<32xf32>
    %581 = vector.multi_reduction <add>, %580, %cst_49 [0] : vector<8x32xf32> to vector<32xf32>
    %582 = vector.shape_cast %581 : vector<32xf32> to vector<1x32xf32>
    %cst_50 = arith.constant dense<0.000000e+00> : vector<1xf32>
    %583 = vector.multi_reduction <add>, %578, %cst_50 [0] : vector<8x1xf32> to vector<1xf32>
    %584 = vector.shape_cast %583 : vector<1xf32> to vector<1x1xf32>
    %cst_51 = arith.constant 0.000000e+00 : f32
    %585 = vector.broadcast %cst_51 : f32 to vector<8x32xf32>
    %586 = arith.cmpf ogt, %569, %585 : vector<8x32xf32>
    %587 = vector.broadcast %578 : vector<8x1xf32> to vector<8x32xf32>
    %588 = vector.broadcast %556 : vector<1x32xf32> to vector<8x32xf32>
    %589 = arith.mulf %587, %588 : vector<8x32xf32>
    %cst_52 = arith.constant 0.000000e+00 : f32
    %590 = vector.broadcast %cst_52 : f32 to vector<8x32xf32>
    %591 = arith.select %586, %589, %590 : vector<8x32xi1>, vector<8x32xf32>
    %cst_53 = arith.constant dense<0.000000e+00> : vector<32x32xf32>
    %592 = tpu.matmul %591, %564, %cst_53 {dimension_numbers = #tpu.dot_dimension_numbers<[0], [0], [1], [1], [0, 1, 1, 1], [], []>} : vector<8x32xf32>, vector<8x32xf32>, vector<32x32xf32> -> vector<32x32xf32>
    %cst_54 = arith.constant dense<0.000000e+00> : vector<32xf32>
    %593 = vector.multi_reduction <add>, %591, %cst_54 [0] : vector<8x32xf32> to vector<32xf32>
    %594 = vector.shape_cast %593 : vector<32xf32> to vector<1x32xf32>
    %cst_55 = arith.constant 0.000000e+00 : f32
    %595 = vector.broadcast %cst_55 : f32 to vector<8x32xf32>
    %596 = arith.cmpf ogt, %564, %595 : vector<8x32xf32>
    %cst_56 = arith.constant dense<0.000000e+00> : vector<8x32xf32>
    %597 = tpu.matmul %591, %550, %cst_56 {dimension_numbers = #tpu.dot_dimension_numbers<[1], [0], [0], [1], [0, 0, 1, 1], [], []>} : vector<8x32xf32>, vector<32x32xf32>, vector<8x32xf32> -> vector<8x32xf32>
    %cst_57 = arith.constant 0.000000e+00 : f32
    %598 = vector.broadcast %cst_57 : f32 to vector<8x32xf32>
    %599 = arith.select %596, %597, %598 : vector<8x32xi1>, vector<8x32xf32>
    %cst_58 = arith.constant dense<0.000000e+00> : vector<32x4xf32>
    %600 = tpu.matmul %599, %1, %cst_58 {dimension_numbers = #tpu.dot_dimension_numbers<[0], [0], [1], [1], [0, 1, 1, 1], [], []>} : vector<8x32xf32>, vector<8x4xf32>, vector<32x4xf32> -> vector<32x4xf32>
    %cst_59 = arith.constant dense<0.000000e+00> : vector<32xf32>
    %601 = vector.multi_reduction <add>, %599, %cst_59 [0] : vector<8x32xf32> to vector<32xf32>
    %602 = vector.shape_cast %601 : vector<32xf32> to vector<1x32xf32>
    %603 = arith.addf %540, %582 : vector<1x32xf32>
    %604 = arith.addf %541, %584 : vector<1x1xf32>
    %cst_60 = arith.constant 0.00999999977 : f32
    %605 = vector.broadcast %cst_60 : f32 to vector<32x4xf32>
    %606 = arith.mulf %605, %600 : vector<32x4xf32>
    %607 = arith.subf %544, %606 : vector<32x4xf32>
    %cst_61 = arith.constant 0.00999999977 : f32
    %608 = vector.broadcast %cst_61 : f32 to vector<1x32xf32>
    %609 = arith.mulf %608, %602 : vector<1x32xf32>
    %610 = arith.subf %547, %609 : vector<1x32xf32>
    %cst_62 = arith.constant 0.00999999977 : f32
    %611 = vector.broadcast %cst_62 : f32 to vector<32x32xf32>
    %612 = arith.mulf %611, %592 : vector<32x32xf32>
    %613 = arith.subf %550, %612 : vector<32x32xf32>
    %cst_63 = arith.constant 0.00999999977 : f32
    %614 = vector.broadcast %cst_63 : f32 to vector<1x32xf32>
    %615 = arith.mulf %614, %594 : vector<1x32xf32>
    %616 = arith.subf %553, %615 : vector<1x32xf32>
    %cst_64 = arith.constant 0.00999999977 : f32
    %617 = vector.broadcast %cst_64 : f32 to vector<1x32xf32>
    %618 = arith.mulf %617, %582 : vector<1x32xf32>
    %619 = arith.subf %556, %618 : vector<1x32xf32>
    %cst_65 = arith.constant 0.00999999977 : f32
    %620 = vector.broadcast %cst_65 : f32 to vector<1x1xf32>
    %621 = arith.mulf %620, %584 : vector<1x1xf32>
    %622 = arith.subf %559, %621 : vector<1x1xf32>
    %cst_66 = arith.constant dense<0.000000e+00> : vector<8x32xf32>
    %623 = tpu.matmul %1, %607, %cst_66 {dimension_numbers = #tpu.dot_dimension_numbers<[1], [1], [0], [0], [0, 0, 1, 0], [], []>} : vector<8x4xf32>, vector<32x4xf32>, vector<8x32xf32> -> vector<8x32xf32>
    %624 = vector.broadcast %610 : vector<1x32xf32> to vector<8x32xf32>
    %625 = arith.addf %623, %624 : vector<8x32xf32>
    %cst_67 = arith.constant 0.000000e+00 : f32
    %626 = vector.broadcast %cst_67 : f32 to vector<8x32xf32>
    %627 = arith.maximumf %625, %626 : vector<8x32xf32>
    %cst_68 = arith.constant dense<0.000000e+00> : vector<8x32xf32>
    %628 = tpu.matmul %627, %613, %cst_68 {dimension_numbers = #tpu.dot_dimension_numbers<[1], [1], [0], [0], [0, 0, 1, 0], [], []>} : vector<8x32xf32>, vector<32x32xf32>, vector<8x32xf32> -> vector<8x32xf32>
    %629 = vector.broadcast %616 : vector<1x32xf32> to vector<8x32xf32>
    %630 = arith.addf %628, %629 : vector<8x32xf32>
    %cst_69 = arith.constant 0.000000e+00 : f32
    %631 = vector.broadcast %cst_69 : f32 to vector<8x32xf32>
    %632 = arith.maximumf %630, %631 : vector<8x32xf32>
    %633 = vector.broadcast %619 : vector<1x32xf32> to vector<8x32xf32>
    %634 = arith.mulf %632, %633 : vector<8x32xf32>
    %cst_70 = arith.constant dense<0.000000e+00> : vector<8xf32>
    %635 = vector.multi_reduction <add>, %634, %cst_70 [1] : vector<8x32xf32> to vector<8xf32>
    %636 = vector.shape_cast %635 : vector<8xf32> to vector<8x1xf32>
    %637 = vector.broadcast %622 : vector<1x1xf32> to vector<8x1xf32>
    %638 = arith.addf %636, %637 : vector<8x1xf32>
    %639 = arith.subf %638, %5 : vector<8x1xf32>
    %cst_71 = arith.constant 2.500000e-01 : f32
    %640 = vector.broadcast %cst_71 : f32 to vector<8x1xf32>
    %641 = arith.mulf %640, %639 : vector<8x1xf32>
    %642 = vector.broadcast %641 : vector<8x1xf32> to vector<8x32xf32>
    %643 = arith.mulf %642, %632 : vector<8x32xf32>
    %cst_72 = arith.constant dense<0.000000e+00> : vector<32xf32>
    %644 = vector.multi_reduction <add>, %643, %cst_72 [0] : vector<8x32xf32> to vector<32xf32>
    %645 = vector.shape_cast %644 : vector<32xf32> to vector<1x32xf32>
    %cst_73 = arith.constant dense<0.000000e+00> : vector<1xf32>
    %646 = vector.multi_reduction <add>, %641, %cst_73 [0] : vector<8x1xf32> to vector<1xf32>
    %647 = vector.shape_cast %646 : vector<1xf32> to vector<1x1xf32>
    %cst_74 = arith.constant 0.000000e+00 : f32
    %648 = vector.broadcast %cst_74 : f32 to vector<8x32xf32>
    %649 = arith.cmpf ogt, %632, %648 : vector<8x32xf32>
    %650 = vector.broadcast %641 : vector<8x1xf32> to vector<8x32xf32>
    %651 = vector.broadcast %619 : vector<1x32xf32> to vector<8x32xf32>
    %652 = arith.mulf %650, %651 : vector<8x32xf32>
    %cst_75 = arith.constant 0.000000e+00 : f32
    %653 = vector.broadcast %cst_75 : f32 to vector<8x32xf32>
    %654 = arith.select %649, %652, %653 : vector<8x32xi1>, vector<8x32xf32>
    %cst_76 = arith.constant dense<0.000000e+00> : vector<32x32xf32>
    %655 = tpu.matmul %654, %627, %cst_76 {dimension_numbers = #tpu.dot_dimension_numbers<[0], [0], [1], [1], [0, 1, 1, 1], [], []>} : vector<8x32xf32>, vector<8x32xf32>, vector<32x32xf32> -> vector<32x32xf32>
    %cst_77 = arith.constant dense<0.000000e+00> : vector<32xf32>
    %656 = vector.multi_reduction <add>, %654, %cst_77 [0] : vector<8x32xf32> to vector<32xf32>
    %657 = vector.shape_cast %656 : vector<32xf32> to vector<1x32xf32>
    %cst_78 = arith.constant 0.000000e+00 : f32
    %658 = vector.broadcast %cst_78 : f32 to vector<8x32xf32>
    %659 = arith.cmpf ogt, %627, %658 : vector<8x32xf32>
    %cst_79 = arith.constant dense<0.000000e+00> : vector<8x32xf32>
    %660 = tpu.matmul %654, %613, %cst_79 {dimension_numbers = #tpu.dot_dimension_numbers<[1], [0], [0], [1], [0, 0, 1, 1], [], []>} : vector<8x32xf32>, vector<32x32xf32>, vector<8x32xf32> -> vector<8x32xf32>
    %cst_80 = arith.constant 0.000000e+00 : f32
    %661 = vector.broadcast %cst_80 : f32 to vector<8x32xf32>
    %662 = arith.select %659, %660, %661 : vector<8x32xi1>, vector<8x32xf32>
    %cst_81 = arith.constant dense<0.000000e+00> : vector<32x4xf32>
    %663 = tpu.matmul %662, %1, %cst_81 {dimension_numbers = #tpu.dot_dimension_numbers<[0], [0], [1], [1], [0, 1, 1, 1], [], []>} : vector<8x32xf32>, vector<8x4xf32>, vector<32x4xf32> -> vector<32x4xf32>
    %cst_82 = arith.constant dense<0.000000e+00> : vector<32xf32>
    %664 = vector.multi_reduction <add>, %662, %cst_82 [0] : vector<8x32xf32> to vector<32xf32>
    %665 = vector.shape_cast %664 : vector<32xf32> to vector<1x32xf32>
    %666 = arith.addf %603, %645 : vector<1x32xf32>
    %667 = arith.addf %604, %647 : vector<1x1xf32>
    %cst_83 = arith.constant 0.00999999977 : f32
    %668 = vector.broadcast %cst_83 : f32 to vector<32x4xf32>
    %669 = arith.mulf %668, %663 : vector<32x4xf32>
    %670 = arith.subf %607, %669 : vector<32x4xf32>
    %cst_84 = arith.constant 0.00999999977 : f32
    %671 = vector.broadcast %cst_84 : f32 to vector<1x32xf32>
    %672 = arith.mulf %671, %665 : vector<1x32xf32>
    %673 = arith.subf %610, %672 : vector<1x32xf32>
    %cst_85 = arith.constant 0.00999999977 : f32
    %674 = vector.broadcast %cst_85 : f32 to vector<32x32xf32>
    %675 = arith.mulf %674, %655 : vector<32x32xf32>
    %676 = arith.subf %613, %675 : vector<32x32xf32>
    %cst_86 = arith.constant 0.00999999977 : f32
    %677 = vector.broadcast %cst_86 : f32 to vector<1x32xf32>
    %678 = arith.mulf %677, %657 : vector<1x32xf32>
    %679 = arith.subf %616, %678 : vector<1x32xf32>
    %cst_87 = arith.constant 0.00999999977 : f32
    %680 = vector.broadcast %cst_87 : f32 to vector<1x32xf32>
    %681 = arith.mulf %680, %666 : vector<1x32xf32>
    %682 = arith.subf %493, %681 : vector<1x32xf32>
    %cst_88 = arith.constant 0.00999999977 : f32
    %683 = vector.broadcast %cst_88 : f32 to vector<1x1xf32>
    %684 = arith.mulf %683, %667 : vector<1x1xf32>
    %685 = arith.subf %494, %684 : vector<1x1xf32>
    %cst_89 = arith.constant dense<0.000000e+00> : vector<8x32xf32>
    %686 = tpu.matmul %3, %670, %cst_89 {dimension_numbers = #tpu.dot_dimension_numbers<[1], [1], [0], [0], [0, 0, 1, 0], [], []>} : vector<8x4xf32>, vector<32x4xf32>, vector<8x32xf32> -> vector<8x32xf32>
    %687 = vector.broadcast %673 : vector<1x32xf32> to vector<8x32xf32>
    %688 = arith.addf %686, %687 : vector<8x32xf32>
    %cst_90 = arith.constant 0.000000e+00 : f32
    %689 = vector.broadcast %cst_90 : f32 to vector<8x32xf32>
    %690 = arith.maximumf %688, %689 : vector<8x32xf32>
    %cst_91 = arith.constant dense<0.000000e+00> : vector<8x32xf32>
    %691 = tpu.matmul %690, %676, %cst_91 {dimension_numbers = #tpu.dot_dimension_numbers<[1], [1], [0], [0], [0, 0, 1, 0], [], []>} : vector<8x32xf32>, vector<32x32xf32>, vector<8x32xf32> -> vector<8x32xf32>
    %692 = vector.broadcast %679 : vector<1x32xf32> to vector<8x32xf32>
    %693 = arith.addf %691, %692 : vector<8x32xf32>
    %cst_92 = arith.constant 0.000000e+00 : f32
    %694 = vector.broadcast %cst_92 : f32 to vector<8x32xf32>
    %695 = arith.maximumf %693, %694 : vector<8x32xf32>
    %696 = vector.broadcast %682 : vector<1x32xf32> to vector<8x32xf32>
    %697 = arith.mulf %695, %696 : vector<8x32xf32>
    %cst_93 = arith.constant dense<0.000000e+00> : vector<8xf32>
    %698 = vector.multi_reduction <add>, %697, %cst_93 [1] : vector<8x32xf32> to vector<8xf32>
    %699 = vector.shape_cast %698 : vector<8xf32> to vector<8x1xf32>
    %700 = vector.broadcast %685 : vector<1x1xf32> to vector<8x1xf32>
    %701 = arith.addf %699, %700 : vector<8x1xf32>
    %c0_94 = arith.constant 0 : index
    %c0_95 = arith.constant 0 : index
    %c0_96 = arith.constant 0 : index
    %702 = vector.load %arg5[%c0_94, %c0_95, %c0_96] : memref<1x8x1xf32, #tpu.memory_space<vmem>>, vector<1x8x1xf32>
    %703 = vector.shape_cast %702 : vector<1x8x1xf32> to vector<8x1xf32>
    %704 = vector.shape_cast %701 : vector<8x1xf32> to vector<1x8x1xf32>
    tpu.vector_store %arg5[%c0_94, %c0_95, %c0_96], %704 {strides = array<i32>} : memref<1x8x1xf32, #tpu.memory_space<vmem>>, vector<1x8x1xf32>,
    return
  }
  func.func @transform_0(%arg0: i32) -> (i32, i32, i32) {
    %c0_i32 = arith.constant 0 : i32
    %c0_i32_0 = arith.constant 0 : i32
    %c0_i32_1 = arith.constant 0 : i32
    return %arg0, %c0_i32, %c0_i32_0 : i32, i32, i32
  }
  func.func @transform_1(%arg0: i32) -> (i32, i32, i32) {
    %c0_i32 = arith.constant 0 : i32
    %c0_i32_0 = arith.constant 0 : i32
    %c0_i32_1 = arith.constant 0 : i32
    return %arg0, %c0_i32, %c0_i32_0 : i32, i32, i32
  }
  func.func @transform_2(%arg0: i32) -> (i32, i32) {
    %c0_i32 = arith.constant 0 : i32
    %c0_i32_0 = arith.constant 0 : i32
    %c0_i32_1 = arith.constant 0 : i32
    return %c0_i32, %c0_i32_0 : i32, i32
  }
  func.func @transform_3(%arg0: i32) -> (i32, i32) {
    %c0_i32 = arith.constant 0 : i32
    %c0_i32_0 = arith.constant 0 : i32
    %c0_i32_1 = arith.constant 0 : i32
    return %c0_i32, %c0_i32_0 : i32, i32
  }
  func.func @transform_4(%arg0: i32) -> (i32, i32, i32) {
    %c0_i32 = arith.constant 0 : i32
    %c0_i32_0 = arith.constant 0 : i32
    %c0_i32_1 = arith.constant 0 : i32
    return %arg0, %c0_i32, %c0_i32_0 : i32, i32, i32
  }
}

</mosaic_0001>

<llo_original>
// kernel: maml_mse_forward_batched.1
$region0: #{maml_mse_forward_batched.1}
  #allocation0 [shape = 'u32[]', space=smem, size = 0x4, offset = 0x4, fixed_abs, tag = 'smem constant byte address 0x4 - core index']
  #allocation1 [shape = 'u32[144,128]{1,0:T(1,128)}', space=vmem, size = 0x12000, scoped, tag = 'internal scratch']
  %s0 = inlined_call_operand.vmem [shape: f32[1,16,4], index: 0, kind: input, shape index: {}]
  %s1 = inlined_call_operand.vmem [shape: f32[1,8,1], index: 1, kind: input, shape index: {}]
  %s2 = inlined_call_operand.vmem [shape: f32[32,36], index: 2, kind: input, shape index: {}]
  %s3 = inlined_call_operand.vmem [shape: f32[2,32], index: 3, kind: input, shape index: {}]
  %s4 = inlined_call_operand.vmem [shape: f32[1,8,1], index: 4, kind: output, shape index: {}]
  %s5 = sld [smem:[#allocation0]]
  $region26: #{maml_mse_forward_batched.1} parent=0
    _
  %s7 = ssub.s32 1, %s5
  %s8 = scalar_select 0, %s7, %s5
  // Predicated region
  $region2: #{maml_mse_forward_batched.1} parent=0 // pred_check
    _
  $region3: #{maml_mse_forward_batched.1} parent=0 // pred_check_branch
    %10 = sbr.rel (0) target = $region5
  $region4: #{maml_mse_forward_batched.1} parent=0 // pred_region
    _
  $region5: #{maml_mse_forward_batched.1} parent=0 // pred_fallthru
    _
  // Predicated region
  $region6: #{maml_mse_forward_batched.1} parent=0 // pred_check
    _
  $region7: #{maml_mse_forward_batched.1} parent=0 // pred_check_branch
    %12 = sbr.rel (0) target = $region9
  $region8: #{maml_mse_forward_batched.1} parent=0 // pred_region
    _
  $region9: #{maml_mse_forward_batched.1} parent=0 // pred_fallthru
    _
  // Predicated region
  $region10: #{maml_mse_forward_batched.1} parent=0 // pred_check
    _
  $region11: #{maml_mse_forward_batched.1} parent=0 // pred_check_branch
    %14 = sbr.rel (0) target = $region13
  $region12: #{maml_mse_forward_batched.1} parent=0 // pred_region
    _
  $region13: #{maml_mse_forward_batched.1} parent=0 // pred_fallthru
    _
  // Predicated region
  $region14: #{maml_mse_forward_batched.1} parent=0 // pred_check
    _
  $region15: #{maml_mse_forward_batched.1} parent=0 // pred_check_branch
    %16 = sbr.rel (0) target = $region17
  $region16: #{maml_mse_forward_batched.1} parent=0 // pred_region
    _
  $region17: #{maml_mse_forward_batched.1} parent=0 // pred_fallthru
    _
  %v17 = vld [vmem:[%s0] sm:$0xff]
  %v18 = vld [vmem:[%s0 + $0x8] sm:$0xff]
  %v19 = vld [vmem:[%s1] sm:$0xff]
  %v20 = vld [vmem:[%s2] sm:$0xff]
  %v21 = vld [vmem:[%s2 + $0x8] sm:$0xff]
  %v22 = vld [vmem:[%s2 + $0x10] sm:$0xff]
  %v23 = vld [vmem:[%s2 + $0x18] sm:$0xff]
  %v24 = vld [vmem:[%s3] sm:$0x1]
  %v25 = vld [vmem:[%s3 + $0x1] sm:$0x1]
  %v26 = vlaneseq
  %v27 = vshrl.u32 %v26, 7
  %v28 = vsub.s32 0, %v27
  %v29 = vrot.slane %v24, %v28
  %34 = vrot.lane.b32.xlu0 %v20, 96
  %v35 = vpop.permute.xlu0 %34
  %36 = vrot.lane.b32.xlu0 %v21, 96
  %v37 = vpop.permute.xlu0 %36
  %38 = vrot.lane.b32.xlu0 %v22, 96
  %v39 = vpop.permute.xlu0 %38
  %40 = vrot.lane.b32.xlu0 %v23, 96
  %v41 = vpop.permute.xlu0 %40
  %vm42 = vcmask 31744
  %v44 = vsel %vm42, %v17, 0
  %v46 = vsel %vm42, %v35, 0
  %v48 = vsel %vm42, %v37, 0
  %v50 = vsel %vm42, %v39, 0
  %v52 = vsel %vm42, %v41, 0
  %54 = vmatprep.subr.mxu0 0.0
  %55 = vmatpush1.xpose.msra.mxu0 0.0
  %56 = vmatprep.subr.mxu0 0.0
  %57 = vmatpush1.xpose.msra.mxu0 0.0
  %58 = vmatprep.subr.mxu0 0.0
  %59 = vmatpush1.xpose.msra.mxu0 0.0
  %60 = vmatprep.subr.mxu0 0.0
  %61 = vmatpush1.xpose.msra.mxu0 0.0
  %62 = vmatprep.subr.mxu0 0.0
  %63 = vmatpush1.xpose.msra.mxu0 0.0
  %64 = vmatprep.subr.mxu0 0.0
  %65 = vmatpush1.xpose.msra.mxu0 0.0
  %66 = vmatprep.subr.mxu0 0.0
  %67 = vmatpush1.xpose.msra.mxu0 0.0
  %68 = vmatprep.subr.mxu0 0.0
  %69 = vmatpush1.xpose.msra.mxu0 0.0
  %70 = vmatprep.subr.mxu0 0.0
  %71 = vmatpush1.xpose.msra.mxu0 0.0
  %72 = vmatprep.subr.mxu0 0.0
  %73 = vmatpush1.xpose.msra.mxu0 0.0
  %74 = vmatprep.subr.mxu0 0.0
  %75 = vmatpush1.xpose.msra.mxu0 0.0
  %76 = vmatprep.subr.mxu0 0.0
  %77 = vmatpush1.xpose.msra.mxu0 0.0
  %78 = vmatprep.subr.mxu0 0.0
  %79 = vmatpush1.xpose.msra.mxu0 %v52
  %80 = vmatprep.subr.mxu0 0.0
  %81 = vmatpush1.xpose.msra.mxu0 %v50
  %82 = vmatprep.subr.mxu0 0.0
  %83 = vmatpush1.xpose.msra.mxu0 %v48
  %84 = vmatprep.subr.mxu0 0.0
  %85 = vmatpush1.xpose.msra.mxu0 %v46
  %86 = vmatprep.subr.mxu0 0.0
  %87 = vmatpush2.xpose.msra.mxu0 0.0
  %88 = vmatprep.subr.mxu0 0.0
  %89 = vmatpush2.xpose.msra.mxu0 0.0
  %90 = vmatprep.subr.mxu0 0.0
  %91 = vmatpush2.xpose.msra.mxu0 0.0
  %92 = vmatprep.subr.mxu0 0.0
  %93 = vmatpush2.xpose.msra.mxu0 0.0
  %94 = vmatprep.subr.mxu0 0.0
  %95 = vmatpush2.xpose.msra.mxu0 0.0
  %96 = vmatprep.subr.mxu0 0.0
  %97 = vmatpush2.xpose.msra.mxu0 0.0
  %98 = vmatprep.subr.mxu0 0.0
  %99 = vmatpush2.xpose.msra.mxu0 0.0
  %100 = vmatprep.subr.mxu0 0.0
  %101 = vmatpush2.xpose.msra.mxu0 0.0
  %102 = vmatprep.subr.mxu0 0.0
  %103 = vmatpush2.xpose.msra.mxu0 0.0
  %104 = vmatprep.subr.mxu0 0.0
  %105 = vmatpush2.xpose.msra.mxu0 0.0
  %106 = vmatprep.subr.mxu0 0.0
  %107 = vmatpush2.xpose.msra.mxu0 0.0
  %108 = vmatprep.subr.mxu0 0.0
  %109 = vmatpush2.xpose.msra.mxu0 0.0
  %110 = vmatprep.subr.mxu0 0.0
  %111 = vmatpush2.xpose.msra.mxu0 0.0
  %112 = vmatprep.subr.mxu0 0.0
  %113 = vmatpush2.xpose.msra.mxu0 0.0
  %114 = vmatprep.subr.mxu0 0.0
  %115 = vmatpush2.xpose.msra.mxu0 0.0
  %116 = vmatprep.subr.mxu0 0.0
  %117 = vmatpush2.xpose.msra.mxu0 0.0
  %118 = vmatprep.mubr.f32.mxu0 0.0
  %119 = vmatmul.mubr.f32.gmra.mxu0 %v44
  %v120 = vpop.f32.mrf.mxu0
  %v121 = vadd.f32 %v29, %v120
  %v122 = vpop.f32.mrf.mxu0
  %123 = vdwg.mxu0
  %v124 = vmax.f32 %v121, 0.0
  %v125 = vlaneseq
  %v126 = vshrl.u32 %v125, 7
  %v127 = vsub.s32 0, %v126
  %v128 = vrot.slane %v25, %v127
  %vm129 = vcmask 261120
  %v131 = vsel %vm129, %v124, 0
  %v133 = vsel %vm129, %v20, 0
  %v135 = vsel %vm129, %v21, 0
  %v137 = vsel %vm129, %v22, 0
  %v139 = vsel %vm129, %v23, 0
  %141 = vmatprep.subr.mxu0 0.0
  %142 = vmatpush1.xpose.msra.mxu0 0.0
  %143 = vmatprep.subr.mxu0 0.0
  %144 = vmatpush1.xpose.msra.mxu0 0.0
  %145 = vmatprep.subr.mxu0 0.0
  %146 = vmatpush1.xpose.msra.mxu0 0.0
  %147 = vmatprep.subr.mxu0 0.0
  %148 = vmatpush1.xpose.msra.mxu0 0.0
  %149 = vmatprep.subr.mxu0 0.0
  %150 = vmatpush1.xpose.msra.mxu0 0.0
  %151 = vmatprep.subr.mxu0 0.0
  %152 = vmatpush1.xpose.msra.mxu0 0.0
  %153 = vmatprep.subr.mxu0 0.0
  %154 = vmatpush1.xpose.msra.mxu0 0.0
  %155 = vmatprep.subr.mxu0 0.0
  %156 = vmatpush1.xpose.msra.mxu0 0.0
  %157 = vmatprep.subr.mxu0 0.0
  %158 = vmatpush1.xpose.msra.mxu0 0.0
  %159 = vmatprep.subr.mxu0 0.0
  %160 = vmatpush1.xpose.msra.mxu0 0.0
  %161 = vmatprep.subr.mxu0 0.0
  %162 = vmatpush1.xpose.msra.mxu0 0.0
  %163 = vmatprep.subr.mxu0 0.0
  %164 = vmatpush1.xpose.msra.mxu0 0.0
  %165 = vmatprep.subr.mxu0 0.0
  %166 = vmatpush1.xpose.msra.mxu0 %v139
  %167 = vmatprep.subr.mxu0 0.0
  %168 = vmatpush1.xpose.msra.mxu0 %v137
  %169 = vmatprep.subr.mxu0 0.0
  %170 = vmatpush1.xpose.msra.mxu0 %v135
  %171 = vmatprep.subr.mxu0 0.0
  %172 = vmatpush1.xpose.msra.mxu0 %v133
  %173 = vmatprep.subr.mxu0 0.0
  %174 = vmatpush2.xpose.msra.mxu0 0.0
  %175 = vmatprep.subr.mxu0 0.0
  %176 = vmatpush2.xpose.msra.mxu0 0.0
  %177 = vmatprep.subr.mxu0 0.0
  %178 = vmatpush2.xpose.msra.mxu0 0.0
  %179 = vmatprep.subr.mxu0 0.0
  %180 = vmatpush2.xpose.msra.mxu0 0.0
  %181 = vmatprep.subr.mxu0 0.0
  %182 = vmatpush2.xpose.msra.mxu0 0.0
  %183 = vmatprep.subr.mxu0 0.0
  %184 = vmatpush2.xpose.msra.mxu0 0.0
  %185 = vmatprep.subr.mxu0 0.0
  %186 = vmatpush2.xpose.msra.mxu0 0.0
  %187 = vmatprep.subr.mxu0 0.0
  %188 = vmatpush2.xpose.msra.mxu0 0.0
  %189 = vmatprep.subr.mxu0 0.0
  %190 = vmatpush2.xpose.msra.mxu0 0.0
  %191 = vmatprep.subr.mxu0 0.0
  %192 = vmatpush2.xpose.msra.mxu0 0.0
  %193 = vmatprep.subr.mxu0 0.0
  %194 = vmatpush2.xpose.msra.mxu0 0.0
  %195 = vmatprep.subr.mxu0 0.0
  %196 = vmatpush2.xpose.msra.mxu0 0.0
  %197 = vmatprep.subr.mxu0 0.0
  %198 = vmatpush2.xpose.msra.mxu0 0.0
  %199 = vmatprep.subr.mxu0 0.0
  %200 = vmatpush2.xpose.msra.mxu0 0.0
  %201 = vmatprep.subr.mxu0 0.0
  %202 = vmatpush2.xpose.msra.mxu0 0.0
  %203 = vmatprep.subr.mxu0 0.0
  %204 = vmatpush2.xpose.msra.mxu0 0.0
  %205 = vmatprep.mubr.f32.mxu0 0.0
  %206 = vmatmul.mubr.f32.gmra.mxu0 %v131
  %v207 = vpop.f32.mrf.mxu0
  %v208 = vadd.f32 %v128, %v207
  %v209 = vpop.f32.mrf.mxu0
  %210 = vdwg.mxu0
  %v211 = vmax.f32 %v208, 0.0
  %213 = vrot.lane.b32.xlu0 %v19, 33
  %v214 = vpop.permute.xlu0 %213
  %v216 = vsel %vm129, %v211, 1.0
  %vm217 = vcmask 269312
  %v218 = vsel %vm217, %v216, %v214
  %v219 = vlaneseq
  %v220 = vshrl.u32 %v219, 7
  %v221 = vadd.s32 %v220, 8
  %v222 = vadd.s32 %v220, 16
  %v223 = vadd.s32 %v220, 24
  %v224 = vadd.s32 %v220, 32
  %v225 = vlaneseq
  %v226 = vand.u32 %v225, 127
  %vm227 = vcmp.eq.s32.totalorder %v220, %v226
  %vm228 = vcmp.eq.s32.totalorder %v221, %v226
  %vm229 = vcmp.eq.s32.totalorder %v222, %v226
  %vm230 = vcmp.eq.s32.totalorder %v223, %v226
  %vm231 = vcmp.eq.s32.totalorder %v224, %v226
  %v232 = vsel %vm227, 1, 0
  %v233 = vsel %vm228, 1, 0
  %v234 = vsel %vm229, 1, 0
  %v235 = vsel %vm230, 1, 0
  %v236 = vsel %vm231, 1, 0
  %v237 = vcvt.s32.f32 %v232
  %v238 = vcvt.s32.f32 %v233
  %v239 = vcvt.s32.f32 %v234
  %v240 = vcvt.s32.f32 %v235
  %v241 = vcvt.s32.f32 %v236
  %242 = vxpose.xlu0.b32.start [1/16] %v218, 128
  %243 = vxpose.xlu0.b32.cont [2/16] 0.0, 128
  %244 = vxpose.xlu0.b32.cont [3/16] 0.0, 128
  %245 = vxpose.xlu0.b32.cont [4/16] 0.0, 128
  %246 = vxpose.xlu0.b32.cont [5/16] 0.0, 128
  %247 = vxpose.xlu0.b32.cont [6/16] 0.0, 128
  %248 = vxpose.xlu0.b32.cont [7/16] 0.0, 128
  %249 = vxpose.xlu0.b32.cont [8/16] 0.0, 128
  %250 = vxpose.xlu0.b32.cont [9/16] 0.0, 128
  %251 = vxpose.xlu0.b32.cont [10/16] 0.0, 128
  %252 = vxpose.xlu0.b32.cont [11/16] 0.0, 128
  %253 = vxpose.xlu0.b32.cont [12/16] 0.0, 128
  %254 = vxpose.xlu0.b32.cont [13/16] 0.0, 128
  %255 = vxpose.xlu0.b32.cont [14/16] 0.0, 128
  %256 = vxpose.xlu0.b32.cont [15/16] 0.0, 128
  %257 = vxpose.xlu0.b32.end [16/16] 0.0, 128
  %v258 = vpop.trf.xlu0
  %v259 = vpop.trf.xlu0
  %v260 = vpop.trf.xlu0
  %v261 = vpop.trf.xlu0
  %v262 = vpop.trf.xlu0
  %v263 = vpop.trf.xlu0
  %v264 = vpop.trf.xlu0
  %v265 = vpop.trf.xlu0
  %v266 = vpop.trf.xlu0
  %v267 = vpop.trf.xlu0
  %v268 = vpop.trf.xlu0
  %v269 = vpop.trf.xlu0
  %v270 = vpop.trf.xlu0
  %v271 = vpop.trf.xlu0
  %v272 = vpop.trf.xlu0
  %v273 = vpop.trf.xlu0
  %vm274 = vcmask 64512
  %v276 = vsel %vm274, %v258, 0
  %v279 = vsel %vm274, %v259, 0
  %v282 = vsel %vm274, %v260, 0
  %v285 = vsel %vm274, %v261, 0
  %v288 = vsel %vm274, %v262, 0
  %290 = vmatprep.subr.mxu0 0.0
  %291 = vmatpush1.msra.mxu0 0.0
  %292 = vmatprep.subr.mxu0 0.0
  %293 = vmatpush1.msra.mxu0 0.0
  %294 = vmatprep.subr.mxu0 0.0
  %295 = vmatpush1.msra.mxu0 0.0
  %296 = vmatprep.subr.mxu0 0.0
  %297 = vmatpush1.msra.mxu0 0.0
  %298 = vmatprep.subr.mxu0 0.0
  %299 = vmatpush1.msra.mxu0 0.0
  %300 = vmatprep.subr.mxu0 0.0
  %301 = vmatpush1.msra.mxu0 0.0
  %302 = vmatprep.subr.mxu0 0.0
  %303 = vmatpush1.msra.mxu0 0.0
  %304 = vmatprep.subr.mxu0 0.0
  %305 = vmatpush1.msra.mxu0 0.0
  %306 = vmatprep.subr.mxu0 0.0
  %307 = vmatpush1.msra.mxu0 0.0
  %308 = vmatprep.subr.mxu0 0.0
  %309 = vmatpush1.msra.mxu0 0.0
  %310 = vmatprep.subr.mxu0 0.0
  %311 = vmatpush1.msra.mxu0 0.0
  %312 = vmatprep.subr.mxu0 0.0
  %313 = vmatpush1.msra.mxu0 0.0
  %314 = vmatprep.subr.mxu0 0.0
  %315 = vmatpush1.msra.mxu0 0.0
  %316 = vmatprep.subr.mxu0 0.0
  %317 = vmatpush1.msra.mxu0 0.0
  %318 = vmatprep.subr.mxu0 0.0
  %319 = vmatpush1.msra.mxu0 0.0
  %320 = vmatprep.subr.mxu0 0.0
  %321 = vmatpush1.msra.mxu0 %v218
  %322 = vmatprep.subr.mxu0 0.0
  %323 = vmatpush2.msra.mxu0 0.0
  %324 = vmatprep.subr.mxu0 0.0
  %325 = vmatpush2.msra.mxu0 0.0
  %326 = vmatprep.subr.mxu0 0.0
  %327 = vmatpush2.msra.mxu0 0.0
  %328 = vmatprep.subr.mxu0 0.0
  %329 = vmatpush2.msra.mxu0 0.0
  %330 = vmatprep.subr.mxu0 0.0
  %331 = vmatpush2.msra.mxu0 0.0
  %332 = vmatprep.subr.mxu0 0.0
  %333 = vmatpush2.msra.mxu0 0.0
  %334 = vmatprep.subr.mxu0 0.0
  %335 = vmatpush2.msra.mxu0 0.0
  %336 = vmatprep.subr.mxu0 0.0
  %337 = vmatpush2.msra.mxu0 0.0
  %338 = vmatprep.subr.mxu0 0.0
  %339 = vmatpush2.msra.mxu0 0.0
  %340 = vmatprep.subr.mxu0 0.0
  %341 = vmatpush2.msra.mxu0 0.0
  %342 = vmatprep.subr.mxu0 0.0
  %343 = vmatpush2.msra.mxu0 0.0
  %344 = vmatprep.subr.mxu0 0.0
  %345 = vmatpush2.msra.mxu0 0.0
  %346 = vmatprep.subr.mxu0 0.0
  %347 = vmatpush2.msra.mxu0 0.0
  %348 = vmatprep.subr.mxu0 0.0
  %349 = vmatpush2.msra.mxu0 0.0
  %350 = vmatprep.subr.mxu0 0.0
  %351 = vmatpush2.msra.mxu0 0.0
  %352 = vmatprep.subr.mxu0 0.0
  %353 = vmatpush2.msra.mxu0 0.0
  %354 = vmatprep.mubr.f32.mxu0 0.0
  %355 = vmatmul.mubr.f32.gmra.mxu0 %v276
  %v356 = vpop.f32.mrf.mxu0
  %v357 = vadd.f32 %v237, %v356
  %v358 = vpop.f32.mrf.mxu0
  %359 = vmatprep.mubr.f32.mxu0 0.0
  %360 = vmatmul.mubr.f32.gmra.mxu0 %v279
  %v361 = vpop.f32.mrf.mxu0
  %v362 = vadd.f32 %v238, %v361
  %v363 = vpop.f32.mrf.mxu0
  %364 = vmatprep.mubr.f32.mxu0 0.0
  %365 = vmatmul.mubr.f32.gmra.mxu0 %v282
  %v366 = vpop.f32.mrf.mxu0
  %v367 = vadd.f32 %v239, %v366
  %v368 = vpop.f32.mrf.mxu0
  %369 = vmatprep.mubr.f32.mxu0 0.0
  %370 = vmatmul.mubr.f32.gmra.mxu0 %v285
  %v371 = vpop.f32.mrf.mxu0
  %v372 = vadd.f32 %v240, %v371
  %v373 = vpop.f32.mrf.mxu0
  %374 = vmatprep.mubr.f32.mxu0 0.0
  %375 = vmatmul.mubr.f32.gmra.mxu0 %v288
  %v376 = vpop.f32.mrf.mxu0
  %v377 = vadd.f32 %v241, %v376
  %v378 = vpop.f32.mrf.mxu0
  %379 = vdwg.mxu0
  %v380 = vlaneseq
  %v381 = vshrl.u32 %v380, 7
  %v382 = vsub.s32 0, %v381
  %v383 = vrot.slane %v357, %v382
  %v384 = vrcp.pop %v383
  %v385 = vmul.f32 %v357, %v384
  %v386 = vmul.f32 %v362, %v384
  %v387 = vmul.f32 %v367, %v384
  %v388 = vmul.f32 %v372, %v384
  %v389 = vmul.f32 %v377, %v384
  %vm390 = vcmp.eq.s32.totalorder %v226, 0
  %392 = vset.pattern.permute.xlu0 0
  %393 = vperm.xlu0 %392, %v385
  %v394 = vpop.permute.xlu0 %393
  %397 = vset.pattern.permute.xlu0 0
  %398 = vperm.xlu0 %397, %v386
  %v399 = vpop.permute.xlu0 %398
  %402 = vset.pattern.permute.xlu0 0
  %403 = vperm.xlu0 %402, %v387
  %v404 = vpop.permute.xlu0 %403
  %407 = vset.pattern.permute.xlu0 0
  %408 = vperm.xlu0 %407, %v388
  %v409 = vpop.permute.xlu0 %408
  %412 = vset.pattern.permute.xlu0 0
  %413 = vperm.xlu0 %412, %v389
  %v414 = vpop.permute.xlu0 %413
  %v416 = vmul.f32 %v394, %v383
  %v417 = vmul.f32 %v399, %v383
  %v418 = vmul.f32 %v404, %v383
  %v419 = vmul.f32 %v409, %v383
  %v420 = vmul.f32 %v414, %v383
  %v421 = vsub.f32 %v357, %v416
  %v422 = vsub.f32 %v362, %v417
  %v423 = vsub.f32 %v367, %v418
  %v424 = vsub.f32 %v372, %v419
  %v425 = vsub.f32 %v377, %v420
  %v426 = vsel %vm390, %v394, %v421
  %v427 = vsel %vm390, %v399, %v422
  %v428 = vsel %vm390, %v404, %v423
  %v429 = vsel %vm390, %v409, %v424
  %v430 = vsel %vm390, %v414, %v425
  %v431 = vlaneseq
  %v432 = vshrl.u32 %v431, 7
  %v433 = vsub.s32 1, %v432
  %v434 = vrot.slane %v426, %v433
  %v435 = vrcp.pop %v434
  %v436 = vmul.f32 %v426, %v435
  %v437 = vmul.f32 %v427, %v435
  %v438 = vmul.f32 %v428, %v435
  %v439 = vmul.f32 %v429, %v435
  %v440 = vmul.f32 %v430, %v435
  %vm441 = vcmp.eq.s32.totalorder %v226, 1
  %443 = vset.pattern.permute.xlu0 1
  %444 = vperm.xlu0 %443, %v436
  %v445 = vpop.permute.xlu0 %444
  %448 = vset.pattern.permute.xlu0 1
  %449 = vperm.xlu0 %448, %v437
  %v450 = vpop.permute.xlu0 %449
  %453 = vset.pattern.permute.xlu0 1
  %454 = vperm.xlu0 %453, %v438
  %v455 = vpop.permute.xlu0 %454
  %458 = vset.pattern.permute.xlu0 1
  %459 = vperm.xlu0 %458, %v439
  %v460 = vpop.permute.xlu0 %459
  %463 = vset.pattern.permute.xlu0 1
  %464 = vperm.xlu0 %463, %v440
  %v465 = vpop.permute.xlu0 %464
  %v467 = vmul.f32 %v445, %v434
  %v468 = vmul.f32 %v450, %v434
  %v469 = vmul.f32 %v455, %v434
  %v470 = vmul.f32 %v460, %v434
  %v471 = vmul.f32 %v465, %v434
  %v472 = vsub.f32 %v426, %v467
  %v473 = vsub.f32 %v427, %v468
  %v474 = vsub.f32 %v428, %v469
  %v475 = vsub.f32 %v429, %v470
  %v476 = vsub.f32 %v430, %v471
  %v477 = vsel %vm441, %v445, %v472
  %v478 = vsel %vm441, %v450, %v473
  %v479 = vsel %vm441, %v455, %v474
  %v480 = vsel %vm441, %v460, %v475
  %v481 = vsel %vm441, %v465, %v476
  %v482 = vlaneseq
  %v483 = vshrl.u32 %v482, 7
  %v484 = vsub.s32 2, %v483
  %v485 = vrot.slane %v477, %v484
  %v486 = vrcp.pop %v485
  %v487 = vmul.f32 %v477, %v486
  %v488 = vmul.f32 %v478, %v486
  %v489 = vmul.f32 %v479, %v486
  %v490 = vmul.f32 %v480, %v486
  %v491 = vmul.f32 %v481, %v486
  %vm492 = vcmp.eq.s32.totalorder %v226, 2
  %494 = vset.pattern.permute.xlu0 2
  %495 = vperm.xlu0 %494, %v487
  %v496 = vpop.permute.xlu0 %495
  %499 = vset.pattern.permute.xlu0 2
  %500 = vperm.xlu0 %499, %v488
  %v501 = vpop.permute.xlu0 %500
  %504 = vset.pattern.permute.xlu0 2
  %505 = vperm.xlu0 %504, %v489
  %v506 = vpop.permute.xlu0 %505
  %509 = vset.pattern.permute.xlu0 2
  %510 = vperm.xlu0 %509, %v490
  %v511 = vpop.permute.xlu0 %510
  %514 = vset.pattern.permute.xlu0 2
  %515 = vperm.xlu0 %514, %v491
  %v516 = vpop.permute.xlu0 %515
  %v518 = vmul.f32 %v496, %v485
  %v519 = vmul.f32 %v501, %v485
  %v520 = vmul.f32 %v506, %v485
  %v521 = vmul.f32 %v511, %v485
  %v522 = vmul.f32 %v516, %v485
  %v523 = vsub.f32 %v477, %v518
  %v524 = vsub.f32 %v478, %v519
  %v525 = vsub.f32 %v479, %v520
  %v526 = vsub.f32 %v480, %v521
  %v527 = vsub.f32 %v481, %v522
  %v528 = vsel %vm492, %v496, %v523
  %v529 = vsel %vm492, %v501, %v524
  %v530 = vsel %vm492, %v506, %v525
  %v531 = vsel %vm492, %v511, %v526
  %v532 = vsel %vm492, %v516, %v527
  %v533 = vlaneseq
  %v534 = vshrl.u32 %v533, 7
  %v535 = vsub.s32 3, %v534
  %v536 = vrot.slane %v528, %v535
  %v537 = vrcp.pop %v536
  %v538 = vmul.f32 %v528, %v537
  %v539 = vmul.f32 %v529, %v537
  %v540 = vmul.f32 %v530, %v537
  %v541 = vmul.f32 %v531, %v537
  %v542 = vmul.f32 %v532, %v537
  %vm543 = vcmp.eq.s32.totalorder %v226, 3
  %545 = vset.pattern.permute.xlu0 3
  %546 = vperm.xlu0 %545, %v538
  %v547 = vpop.permute.xlu0 %546
  %550 = vset.pattern.permute.xlu0 3
  %551 = vperm.xlu0 %550, %v539
  %v552 = vpop.permute.xlu0 %551
  %555 = vset.pattern.permute.xlu0 3
  %556 = vperm.xlu0 %555, %v540
  %v557 = vpop.permute.xlu0 %556
  %560 = vset.pattern.permute.xlu0 3
  %561 = vperm.xlu0 %560, %v541
  %v562 = vpop.permute.xlu0 %561
  %565 = vset.pattern.permute.xlu0 3
  %566 = vperm.xlu0 %565, %v542
  %v567 = vpop.permute.xlu0 %566
  %v569 = vmul.f32 %v547, %v536
  %v570 = vmul.f32 %v552, %v536
  %v571 = vmul.f32 %v557, %v536
  %v572 = vmul.f32 %v562, %v536
  %v573 = vmul.f32 %v567, %v536
  %v574 = vsub.f32 %v528, %v569
  %v575 = vsub.f32 %v529, %v570
  %v576 = vsub.f32 %v530, %v571
  %v577 = vsub.f32 %v531, %v572
  %v578 = vsub.f32 %v532, %v573
  %v579 = vsel %vm543, %v547, %v574
  %v580 = vsel %vm543, %v552, %v575
  %v581 = vsel %vm543, %v557, %v576
  %v582 = vsel %vm543, %v562, %v577
  %v583 = vsel %vm543, %v567, %v578
  %v584 = vlaneseq
  %v585 = vshrl.u32 %v584, 7
  %v586 = vsub.s32 4, %v585
  %v587 = vrot.slane %v579, %v586
  %v588 = vrcp.pop %v587
  %v589 = vmul.f32 %v579, %v588
  %v590 = vmul.f32 %v580, %v588
  %v591 = vmul.f32 %v581, %v588
  %v592 = vmul.f32 %v582, %v588
  %v593 = vmul.f32 %v583, %v588
  %vm594 = vcmp.eq.s32.totalorder %v226, 4
  %596 = vset.pattern.permute.xlu0 4
  %597 = vperm.xlu0 %596, %v589
  %v598 = vpop.permute.xlu0 %597
  %601 = vset.pattern.permute.xlu0 4
  %602 = vperm.xlu0 %601, %v590
  %v603 = vpop.permute.xlu0 %602
  %606 = vset.pattern.permute.xlu0 4
  %607 = vperm.xlu0 %606, %v591
  %v608 = vpop.permute.xlu0 %607
  %611 = vset.pattern.permute.xlu0 4
  %612 = vperm.xlu0 %611, %v592
  %v613 = vpop.permute.xlu0 %612
  %616 = vset.pattern.permute.xlu0 4
  %617 = vperm.xlu0 %616, %v593
  %v618 = vpop.permute.xlu0 %617
  %v620 = vmul.f32 %v598, %v587
  %v621 = vmul.f32 %v603, %v587
  %v622 = vmul.f32 %v608, %v587
  %v623 = vmul.f32 %v613, %v587
  %v624 = vmul.f32 %v618, %v587
  %v625 = vsub.f32 %v579, %v620
  %v626 = vsub.f32 %v580, %v621
  %v627 = vsub.f32 %v581, %v622
  %v628 = vsub.f32 %v582, %v623
  %v629 = vsub.f32 %v583, %v624
  %v630 = vsel %vm594, %v598, %v625
  %v631 = vsel %vm594, %v603, %v626
  %v632 = vsel %vm594, %v608, %v627
  %v633 = vsel %vm594, %v613, %v628
  %v634 = vsel %vm594, %v618, %v629
  %v635 = vlaneseq
  %v636 = vshrl.u32 %v635, 7
  %v637 = vsub.s32 5, %v636
  %v638 = vrot.slane %v630, %v637
  %v639 = vrcp.pop %v638
  %v640 = vmul.f32 %v630, %v639
  %v641 = vmul.f32 %v631, %v639
  %v642 = vmul.f32 %v632, %v639
  %v643 = vmul.f32 %v633, %v639
  %v644 = vmul.f32 %v634, %v639
  %vm645 = vcmp.eq.s32.totalorder %v226, 5
  %647 = vset.pattern.permute.xlu0 5
  %648 = vperm.xlu0 %647, %v640
  %v649 = vpop.permute.xlu0 %648
  %652 = vset.pattern.permute.xlu0 5
  %653 = vperm.xlu0 %652, %v641
  %v654 = vpop.permute.xlu0 %653
  %657 = vset.pattern.permute.xlu0 5
  %658 = vperm.xlu0 %657, %v642
  %v659 = vpop.permute.xlu0 %658
  %662 = vset.pattern.permute.xlu0 5
  %663 = vperm.xlu0 %662, %v643
  %v664 = vpop.permute.xlu0 %663
  %667 = vset.pattern.permute.xlu0 5
  %668 = vperm.xlu0 %667, %v644
  %v669 = vpop.permute.xlu0 %668
  %v671 = vmul.f32 %v649, %v638
  %v672 = vmul.f32 %v654, %v638
  %v673 = vmul.f32 %v659, %v638
  %v674 = vmul.f32 %v664, %v638
  %v675 = vmul.f32 %v669, %v638
  %v676 = vsub.f32 %v630, %v671
  %v677 = vsub.f32 %v631, %v672
  %v678 = vsub.f32 %v632, %v673
  %v679 = vsub.f32 %v633, %v674
  %v680 = vsub.f32 %v634, %v675
  %v681 = vsel %vm645, %v649, %v676
  %v682 = vsel %vm645, %v654, %v677
  %v683 = vsel %vm645, %v659, %v678
  %v684 = vsel %vm645, %v664, %v679
  %v685 = vsel %vm645, %v669, %v680
  %v686 = vlaneseq
  %v687 = vshrl.u32 %v686, 7
  %v688 = vsub.s32 6, %v687
  %v689 = vrot.slane %v681, %v688
  %v690 = vrcp.pop %v689
  %v691 = vmul.f32 %v681, %v690
  %v692 = vmul.f32 %v682, %v690
  %v693 = vmul.f32 %v683, %v690
  %v694 = vmul.f32 %v684, %v690
  %v695 = vmul.f32 %v685, %v690
  %vm696 = vcmp.eq.s32.totalorder %v226, 6
  %698 = vset.pattern.permute.xlu0 6
  %699 = vperm.xlu0 %698, %v691
  %v700 = vpop.permute.xlu0 %699
  %703 = vset.pattern.permute.xlu0 6
  %704 = vperm.xlu0 %703, %v692
  %v705 = vpop.permute.xlu0 %704
  %708 = vset.pattern.permute.xlu0 6
  %709 = vperm.xlu0 %708, %v693
  %v710 = vpop.permute.xlu0 %709
  %713 = vset.pattern.permute.xlu0 6
  %714 = vperm.xlu0 %713, %v694
  %v715 = vpop.permute.xlu0 %714
  %718 = vset.pattern.permute.xlu0 6
  %719 = vperm.xlu0 %718, %v695
  %v720 = vpop.permute.xlu0 %719
  %v722 = vmul.f32 %v700, %v689
  %v723 = vmul.f32 %v705, %v689
  %v724 = vmul.f32 %v710, %v689
  %v725 = vmul.f32 %v715, %v689
  %v726 = vmul.f32 %v720, %v689
  %v727 = vsub.f32 %v681, %v722
  %v728 = vsub.f32 %v682, %v723
  %v729 = vsub.f32 %v683, %v724
  %v730 = vsub.f32 %v684, %v725
  %v731 = vsub.f32 %v685, %v726
  %v732 = vsel %vm696, %v700, %v727
  %v733 = vsel %vm696, %v705, %v728
  %v734 = vsel %vm696, %v710, %v729
  %v735 = vsel %vm696, %v715, %v730
  %v736 = vsel %vm696, %v720, %v731
  %v737 = vlaneseq
  %v738 = vshrl.u32 %v737, 7
  %v739 = vsub.s32 7, %v738
  %v740 = vrot.slane %v732, %v739
  %v741 = vrcp.pop %v740
  %v742 = vmul.f32 %v733, %v741
  %v743 = vmul.f32 %v734, %v741
  %v744 = vmul.f32 %v735, %v741
  %v745 = vmul.f32 %v736, %v741
  %vm746 = vcmp.eq.s32.totalorder %v226, 7
  %748 = vset.pattern.permute.xlu0 7
  %749 = vperm.xlu0 %748, %v742
  %v750 = vpop.permute.xlu0 %749
  %753 = vset.pattern.permute.xlu0 7
  %754 = vperm.xlu0 %753, %v743
  %v755 = vpop.permute.xlu0 %754
  %758 = vset.pattern.permute.xlu0 7
  %759 = vperm.xlu0 %758, %v744
  %v760 = vpop.permute.xlu0 %759
  %763 = vset.pattern.permute.xlu0 7
  %764 = vperm.xlu0 %763, %v745
  %v765 = vpop.permute.xlu0 %764
  %v767 = vmul.f32 %v750, %v740
  %v768 = vmul.f32 %v755, %v740
  %v769 = vmul.f32 %v760, %v740
  %v770 = vmul.f32 %v765, %v740
  %v771 = vsub.f32 %v733, %v767
  %v772 = vsub.f32 %v734, %v768
  %v773 = vsub.f32 %v735, %v769
  %v774 = vsub.f32 %v736, %v770
  %v775 = vsel %vm746, %v750, %v771
  %v776 = vsel %vm746, %v755, %v772
  %v777 = vsel %vm746, %v760, %v773
  %v778 = vsel %vm746, %v765, %v774
  %v779 = vlaneseq
  %v780 = vshrl.u32 %v779, 7
  %v781 = vsub.s32 0, %v780
  %v782 = vrot.slane %v775, %v781
  %v783 = vrcp.pop %v782
  %v784 = vmul.f32 %v775, %v783
  %v785 = vmul.f32 %v776, %v783
  %v786 = vmul.f32 %v777, %v783
  %v787 = vmul.f32 %v778, %v783
  %vm788 = vcmp.eq.s32.totalorder %v226, 8
  %790 = vset.pattern.permute.xlu0 8
  %791 = vperm.xlu0 %790, %v784
  %v792 = vpop.permute.xlu0 %791
  %795 = vset.pattern.permute.xlu0 8
  %796 = vperm.xlu0 %795, %v785
  %v797 = vpop.permute.xlu0 %796
  %800 = vset.pattern.permute.xlu0 8
  %801 = vperm.xlu0 %800, %v786
  %v802 = vpop.permute.xlu0 %801
  %805 = vset.pattern.permute.xlu0 8
  %806 = vperm.xlu0 %805, %v787
  %v807 = vpop.permute.xlu0 %806
  %v809 = vmul.f32 %v792, %v782
  %v810 = vmul.f32 %v797, %v782
  %v811 = vmul.f32 %v802, %v782
  %v812 = vmul.f32 %v807, %v782
  %v813 = vsub.f32 %v775, %v809
  %v814 = vsub.f32 %v776, %v810
  %v815 = vsub.f32 %v777, %v811
  %v816 = vsub.f32 %v778, %v812
  %v817 = vsel %vm788, %v792, %v813
  %v818 = vsel %vm788, %v797, %v814
  %v819 = vsel %vm788, %v802, %v815
  %v820 = vsel %vm788, %v807, %v816
  %v821 = vlaneseq
  %v822 = vshrl.u32 %v821, 7
  %v823 = vsub.s32 1, %v822
  %v824 = vrot.slane %v817, %v823
  %v825 = vrcp.pop %v824
  %v826 = vmul.f32 %v817, %v825
  %v827 = vmul.f32 %v818, %v825
  %v828 = vmul.f32 %v819, %v825
  %v829 = vmul.f32 %v820, %v825
  %vm830 = vcmp.eq.s32.totalorder %v226, 9
  %832 = vset.pattern.permute.xlu0 9
  %833 = vperm.xlu0 %832, %v826
  %v834 = vpop.permute.xlu0 %833
  %837 = vset.pattern.permute.xlu0 9
  %838 = vperm.xlu0 %837, %v827
  %v839 = vpop.permute.xlu0 %838
  %842 = vset.pattern.permute.xlu0 9
  %843 = vperm.xlu0 %842, %v828
  %v844 = vpop.permute.xlu0 %843
  %847 = vset.pattern.permute.xlu0 9
  %848 = vperm.xlu0 %847, %v829
  %v849 = vpop.permute.xlu0 %848
  %v851 = vmul.f32 %v834, %v824
  %v852 = vmul.f32 %v839, %v824
  %v853 = vmul.f32 %v844, %v824
  %v854 = vmul.f32 %v849, %v824
  %v855 = vsub.f32 %v817, %v851
  %v856 = vsub.f32 %v818, %v852
  %v857 = vsub.f32 %v819, %v853
  %v858 = vsub.f32 %v820, %v854
  %v859 = vsel %vm830, %v834, %v855
  %v860 = vsel %vm830, %v839, %v856
  %v861 = vsel %vm830, %v844, %v857
  %v862 = vsel %vm830, %v849, %v858
  %v863 = vlaneseq
  %v864 = vshrl.u32 %v863, 7
  %v865 = vsub.s32 2, %v864
  %v866 = vrot.slane %v859, %v865
  %v867 = vrcp.pop %v866
  %v868 = vmul.f32 %v859, %v867
  %v869 = vmul.f32 %v860, %v867
  %v870 = vmul.f32 %v861, %v867
  %v871 = vmul.f32 %v862, %v867
  %vm872 = vcmp.eq.s32.totalorder %v226, 10
  %874 = vset.pattern.permute.xlu0 10
  %875 = vperm.xlu0 %874, %v868
  %v876 = vpop.permute.xlu0 %875
  %879 = vset.pattern.permute.xlu0 10
  %880 = vperm.xlu0 %879, %v869
  %v881 = vpop.permute.xlu0 %880
  %884 = vset.pattern.permute.xlu0 10
  %885 = vperm.xlu0 %884, %v870
  %v886 = vpop.permute.xlu0 %885
  %889 = vset.pattern.permute.xlu0 10
  %890 = vperm.xlu0 %889, %v871
  %v891 = vpop.permute.xlu0 %890
  %v893 = vmul.f32 %v876, %v866
  %v894 = vmul.f32 %v881, %v866
  %v895 = vmul.f32 %v886, %v866
  %v896 = vmul.f32 %v891, %v866
  %v897 = vsub.f32 %v859, %v893
  %v898 = vsub.f32 %v860, %v894
  %v899 = vsub.f32 %v861, %v895
  %v900 = vsub.f32 %v862, %v896
  %v901 = vsel %vm872, %v876, %v897
  %v902 = vsel %vm872, %v881, %v898
  %v903 = vsel %vm872, %v886, %v899
  %v904 = vsel %vm872, %v891, %v900
  %v905 = vlaneseq
  %v906 = vshrl.u32 %v905, 7
  %v907 = vsub.s32 3, %v906
  %v908 = vrot.slane %v901, %v907
  %v909 = vrcp.pop %v908
  %v910 = vmul.f32 %v901, %v909
  %v911 = vmul.f32 %v902, %v909
  %v912 = vmul.f32 %v903, %v909
  %v913 = vmul.f32 %v904, %v909
  %vm914 = vcmp.eq.s32.totalorder %v226, 11
  %916 = vset.pattern.permute.xlu0 11
  %917 = vperm.xlu0 %916, %v910
  %v918 = vpop.permute.xlu0 %917
  %921 = vset.pattern.permute.xlu0 11
  %922 = vperm.xlu0 %921, %v911
  %v923 = vpop.permute.xlu0 %922
  %926 = vset.pattern.permute.xlu0 11
  %927 = vperm.xlu0 %926, %v912
  %v928 = vpop.permute.xlu0 %927
  %931 = vset.pattern.permute.xlu0 11
  %932 = vperm.xlu0 %931, %v913
  %v933 = vpop.permute.xlu0 %932
  %v935 = vmul.f32 %v918, %v908
  %v936 = vmul.f32 %v923, %v908
  %v937 = vmul.f32 %v928, %v908
  %v938 = vmul.f32 %v933, %v908
  %v939 = vsub.f32 %v901, %v935
  %v940 = vsub.f32 %v902, %v936
  %v941 = vsub.f32 %v903, %v937
  %v942 = vsub.f32 %v904, %v938
  %v943 = vsel %vm914, %v918, %v939
  %v944 = vsel %vm914, %v923, %v940
  %v945 = vsel %vm914, %v928, %v941
  %v946 = vsel %vm914, %v933, %v942
  %v947 = vlaneseq
  %v948 = vshrl.u32 %v947, 7
  %v949 = vsub.s32 4, %v948
  %v950 = vrot.slane %v943, %v949
  %v951 = vrcp.pop %v950
  %v952 = vmul.f32 %v943, %v951
  %v953 = vmul.f32 %v944, %v951
  %v954 = vmul.f32 %v945, %v951
  %v955 = vmul.f32 %v946, %v951
  %vm956 = vcmp.eq.s32.totalorder %v226, 12
  %958 = vset.pattern.permute.xlu0 12
  %959 = vperm.xlu0 %958, %v952
  %v960 = vpop.permute.xlu0 %959
  %963 = vset.pattern.permute.xlu0 12
  %964 = vperm.xlu0 %963, %v953
  %v965 = vpop.permute.xlu0 %964
  %968 = vset.pattern.permute.xlu0 12
  %969 = vperm.xlu0 %968, %v954
  %v970 = vpop.permute.xlu0 %969
  %973 = vset.pattern.permute.xlu0 12
  %974 = vperm.xlu0 %973, %v955
  %v975 = vpop.permute.xlu0 %974
  %v977 = vmul.f32 %v960, %v950
  %v978 = vmul.f32 %v965, %v950
  %v979 = vmul.f32 %v970, %v950
  %v980 = vmul.f32 %v975, %v950
  %v981 = vsub.f32 %v943, %v977
  %v982 = vsub.f32 %v944, %v978
  %v983 = vsub.f32 %v945, %v979
  %v984 = vsub.f32 %v946, %v980
  %v985 = vsel %vm956, %v960, %v981
  %v986 = vsel %vm956, %v965, %v982
  %v987 = vsel %vm956, %v970, %v983
  %v988 = vsel %vm956, %v975, %v984
  %v989 = vlaneseq
  %v990 = vshrl.u32 %v989, 7
  %v991 = vsub.s32 5, %v990
  %v992 = vrot.slane %v985, %v991
  %v993 = vrcp.pop %v992
  %v994 = vmul.f32 %v985, %v993
  %v995 = vmul.f32 %v986, %v993
  %v996 = vmul.f32 %v987, %v993
  %v997 = vmul.f32 %v988, %v993
  %vm998 = vcmp.eq.s32.totalorder %v226, 13
  %1000 = vset.pattern.permute.xlu0 13
  %1001 = vperm.xlu0 %1000, %v994
  %v1002 = vpop.permute.xlu0 %1001
  %1005 = vset.pattern.permute.xlu0 13
  %1006 = vperm.xlu0 %1005, %v995
  %v1007 = vpop.permute.xlu0 %1006
  %1010 = vset.pattern.permute.xlu0 13
  %1011 = vperm.xlu0 %1010, %v996
  %v1012 = vpop.permute.xlu0 %1011
  %1015 = vset.pattern.permute.xlu0 13
  %1016 = vperm.xlu0 %1015, %v997
  %v1017 = vpop.permute.xlu0 %1016
  %v1019 = vmul.f32 %v1002, %v992
  %v1020 = vmul.f32 %v1007, %v992
  %v1021 = vmul.f32 %v1012, %v992
  %v1022 = vmul.f32 %v1017, %v992
  %v1023 = vsub.f32 %v985, %v1019
  %v1024 = vsub.f32 %v986, %v1020
  %v1025 = vsub.f32 %v987, %v1021
  %v1026 = vsub.f32 %v988, %v1022
  %v1027 = vsel %vm998, %v1002, %v1023
  %v1028 = vsel %vm998, %v1007, %v1024
  %v1029 = vsel %vm998, %v1012, %v1025
  %v1030 = vsel %vm998, %v1017, %v1026
  %v1031 = vlaneseq
  %v1032 = vshrl.u32 %v1031, 7
  %v1033 = vsub.s32 6, %v1032
  %v1034 = vrot.slane %v1027, %v1033
  %v1035 = vrcp.pop %v1034
  %v1036 = vmul.f32 %v1027, %v1035
  %v1037 = vmul.f32 %v1028, %v1035
  %v1038 = vmul.f32 %v1029, %v1035
  %v1039 = vmul.f32 %v1030, %v1035
  %vm1040 = vcmp.eq.s32.totalorder %v226, 14
  %1042 = vset.pattern.permute.xlu0 14
  %1043 = vperm.xlu0 %1042, %v1036
  %v1044 = vpop.permute.xlu0 %1043
  %1047 = vset.pattern.permute.xlu0 14
  %1048 = vperm.xlu0 %1047, %v1037
  %v1049 = vpop.permute.xlu0 %1048
  %1052 = vset.pattern.permute.xlu0 14
  %1053 = vperm.xlu0 %1052, %v1038
  %v1054 = vpop.permute.xlu0 %1053
  %1057 = vset.pattern.permute.xlu0 14
  %1058 = vperm.xlu0 %1057, %v1039
  %v1059 = vpop.permute.xlu0 %1058
  %v1061 = vmul.f32 %v1044, %v1034
  %v1062 = vmul.f32 %v1049, %v1034
  %v1063 = vmul.f32 %v1054, %v1034
  %v1064 = vmul.f32 %v1059, %v1034
  %v1065 = vsub.f32 %v1027, %v1061
  %v1066 = vsub.f32 %v1028, %v1062
  %v1067 = vsub.f32 %v1029, %v1063
  %v1068 = vsub.f32 %v1030, %v1064
  %v1069 = vsel %vm1040, %v1044, %v1065
  %v1070 = vsel %vm1040, %v1049, %v1066
  %v1071 = vsel %vm1040, %v1054, %v1067
  %v1072 = vsel %vm1040, %v1059, %v1068
  %v1073 = vlaneseq
  %v1074 = vshrl.u32 %v1073, 7
  %v1075 = vsub.s32 7, %v1074
  %v1076 = vrot.slane %v1069, %v1075
  %v1077 = vrcp.pop %v1076
  %v1078 = vmul.f32 %v1070, %v1077
  %v1079 = vmul.f32 %v1071, %v1077
  %v1080 = vmul.f32 %v1072, %v1077
  %vm1081 = vcmp.eq.s32.totalorder %v226, 15
  %1083 = vset.pattern.permute.xlu0 15
  %1084 = vperm.xlu0 %1083, %v1078
  %v1085 = vpop.permute.xlu0 %1084
  %1088 = vset.pattern.permute.xlu0 15
  %1089 = vperm.xlu0 %1088, %v1079
  %v1090 = vpop.permute.xlu0 %1089
  %1093 = vset.pattern.permute.xlu0 15
  %1094 = vperm.xlu0 %1093, %v1080
  %v1095 = vpop.permute.xlu0 %1094
  %v1097 = vmul.f32 %v1085, %v1076
  %v1098 = vmul.f32 %v1090, %v1076
  %v1099 = vmul.f32 %v1095, %v1076
  %v1100 = vsub.f32 %v1070, %v1097
  %v1101 = vsub.f32 %v1071, %v1098
  %v1102 = vsub.f32 %v1072, %v1099
  %v1103 = vsel %vm1081, %v1085, %v1100
  %v1104 = vsel %vm1081, %v1090, %v1101
  %v1105 = vsel %vm1081, %v1095, %v1102
  %v1106 = vlaneseq
  %v1107 = vshrl.u32 %v1106, 7
  %v1108 = vsub.s32 0, %v1107
  %v1109 = vrot.slane %v1103, %v1108
  %v1110 = vrcp.pop %v1109
  %v1111 = vmul.f32 %v1103, %v1110
  %v1112 = vmul.f32 %v1104, %v1110
  %v1113 = vmul.f32 %v1105, %v1110
  %vm1114 = vcmp.eq.s32.totalorder %v226, 16
  %1116 = vset.pattern.permute.xlu0 16
  %1117 = vperm.xlu0 %1116, %v1111
  %v1118 = vpop.permute.xlu0 %1117
  %1121 = vset.pattern.permute.xlu0 16
  %1122 = vperm.xlu0 %1121, %v1112
  %v1123 = vpop.permute.xlu0 %1122
  %1126 = vset.pattern.permute.xlu0 16
  %1127 = vperm.xlu0 %1126, %v1113
  %v1128 = vpop.permute.xlu0 %1127
  %v1130 = vmul.f32 %v1118, %v1109
  %v1131 = vmul.f32 %v1123, %v1109
  %v1132 = vmul.f32 %v1128, %v1109
  %v1133 = vsub.f32 %v1103, %v1130
  %v1134 = vsub.f32 %v1104, %v1131
  %v1135 = vsub.f32 %v1105, %v1132
  %v1136 = vsel %vm1114, %v1118, %v1133
  %v1137 = vsel %vm1114, %v1123, %v1134
  %v1138 = vsel %vm1114, %v1128, %v1135
  %v1139 = vlaneseq
  %v1140 = vshrl.u32 %v1139, 7
  %v1141 = vsub.s32 1, %v1140
  %v1142 = vrot.slane %v1136, %v1141
  %v1143 = vrcp.pop %v1142
  %v1144 = vmul.f32 %v1136, %v1143
  %v1145 = vmul.f32 %v1137, %v1143
  %v1146 = vmul.f32 %v1138, %v1143
  %vm1147 = vcmp.eq.s32.totalorder %v226, 17
  %1149 = vset.pattern.permute.xlu0 17
  %1150 = vperm.xlu0 %1149, %v1144
  %v1151 = vpop.permute.xlu0 %1150
  %1154 = vset.pattern.permute.xlu0 17
  %1155 = vperm.xlu0 %1154, %v1145
  %v1156 = vpop.permute.xlu0 %1155
  %1159 = vset.pattern.permute.xlu0 17
  %1160 = vperm.xlu0 %1159, %v1146
  %v1161 = vpop.permute.xlu0 %1160
  %v1163 = vmul.f32 %v1151, %v1142
  %v1164 = vmul.f32 %v1156, %v1142
  %v1165 = vmul.f32 %v1161, %v1142
  %v1166 = vsub.f32 %v1136, %v1163
  %v1167 = vsub.f32 %v1137, %v1164
  %v1168 = vsub.f32 %v1138, %v1165
  %v1169 = vsel %vm1147, %v1151, %v1166
  %v1170 = vsel %vm1147, %v1156, %v1167
  %v1171 = vsel %vm1147, %v1161, %v1168
  %v1172 = vlaneseq
  %v1173 = vshrl.u32 %v1172, 7
  %v1174 = vsub.s32 2, %v1173
  %v1175 = vrot.slane %v1169, %v1174
  %v1176 = vrcp.pop %v1175
  %v1177 = vmul.f32 %v1169, %v1176
  %v1178 = vmul.f32 %v1170, %v1176
  %v1179 = vmul.f32 %v1171, %v1176
  %vm1180 = vcmp.eq.s32.totalorder %v226, 18
  %1182 = vset.pattern.permute.xlu0 18
  %1183 = vperm.xlu0 %1182, %v1177
  %v1184 = vpop.permute.xlu0 %1183
  %1187 = vset.pattern.permute.xlu0 18
  %1188 = vperm.xlu0 %1187, %v1178
  %v1189 = vpop.permute.xlu0 %1188
  %1192 = vset.pattern.permute.xlu0 18
  %1193 = vperm.xlu0 %1192, %v1179
  %v1194 = vpop.permute.xlu0 %1193
  %v1196 = vmul.f32 %v1184, %v1175
  %v1197 = vmul.f32 %v1189, %v1175
  %v1198 = vmul.f32 %v1194, %v1175
  %v1199 = vsub.f32 %v1169, %v1196
  %v1200 = vsub.f32 %v1170, %v1197
  %v1201 = vsub.f32 %v1171, %v1198
  %v1202 = vsel %vm1180, %v1184, %v1199
  %v1203 = vsel %vm1180, %v1189, %v1200
  %v1204 = vsel %vm1180, %v1194, %v1201
  %v1205 = vlaneseq
  %v1206 = vshrl.u32 %v1205, 7
  %v1207 = vsub.s32 3, %v1206
  %v1208 = vrot.slane %v1202, %v1207
  %v1209 = vrcp.pop %v1208
  %v1210 = vmul.f32 %v1202, %v1209
  %v1211 = vmul.f32 %v1203, %v1209
  %v1212 = vmul.f32 %v1204, %v1209
  %vm1213 = vcmp.eq.s32.totalorder %v226, 19
  %1215 = vset.pattern.permute.xlu0 19
  %1216 = vperm.xlu0 %1215, %v1210
  %v1217 = vpop.permute.xlu0 %1216
  %1220 = vset.pattern.permute.xlu0 19
  %1221 = vperm.xlu0 %1220, %v1211
  %v1222 = vpop.permute.xlu0 %1221
  %1225 = vset.pattern.permute.xlu0 19
  %1226 = vperm.xlu0 %1225, %v1212
  %v1227 = vpop.permute.xlu0 %1226
  %v1229 = vmul.f32 %v1217, %v1208
  %v1230 = vmul.f32 %v1222, %v1208
  %v1231 = vmul.f32 %v1227, %v1208
  %v1232 = vsub.f32 %v1202, %v1229
  %v1233 = vsub.f32 %v1203, %v1230
  %v1234 = vsub.f32 %v1204, %v1231
  %v1235 = vsel %vm1213, %v1217, %v1232
  %v1236 = vsel %vm1213, %v1222, %v1233
  %v1237 = vsel %vm1213, %v1227, %v1234
  %v1238 = vlaneseq
  %v1239 = vshrl.u32 %v1238, 7
  %v1240 = vsub.s32 4, %v1239
  %v1241 = vrot.slane %v1235, %v1240
  %v1242 = vrcp.pop %v1241
  %v1243 = vmul.f32 %v1235, %v1242
  %v1244 = vmul.f32 %v1236, %v1242
  %v1245 = vmul.f32 %v1237, %v1242
  %vm1246 = vcmp.eq.s32.totalorder %v226, 20
  %1248 = vset.pattern.permute.xlu0 20
  %1249 = vperm.xlu0 %1248, %v1243
  %v1250 = vpop.permute.xlu0 %1249
  %1253 = vset.pattern.permute.xlu0 20
  %1254 = vperm.xlu0 %1253, %v1244
  %v1255 = vpop.permute.xlu0 %1254
  %1258 = vset.pattern.permute.xlu0 20
  %1259 = vperm.xlu0 %1258, %v1245
  %v1260 = vpop.permute.xlu0 %1259
  %v1262 = vmul.f32 %v1250, %v1241
  %v1263 = vmul.f32 %v1255, %v1241
  %v1264 = vmul.f32 %v1260, %v1241
  %v1265 = vsub.f32 %v1235, %v1262
  %v1266 = vsub.f32 %v1236, %v1263
  %v1267 = vsub.f32 %v1237, %v1264
  %v1268 = vsel %vm1246, %v1250, %v1265
  %v1269 = vsel %vm1246, %v1255, %v1266
  %v1270 = vsel %vm1246, %v1260, %v1267
  %v1271 = vlaneseq
  %v1272 = vshrl.u32 %v1271, 7
  %v1273 = vsub.s32 5, %v1272
  %v1274 = vrot.slane %v1268, %v1273
  %v1275 = vrcp.pop %v1274
  %v1276 = vmul.f32 %v1268, %v1275
  %v1277 = vmul.f32 %v1269, %v1275
  %v1278 = vmul.f32 %v1270, %v1275
  %vm1279 = vcmp.eq.s32.totalorder %v226, 21
  %1281 = vset.pattern.permute.xlu0 21
  %1282 = vperm.xlu0 %1281, %v1276
  %v1283 = vpop.permute.xlu0 %1282
  %1286 = vset.pattern.permute.xlu0 21
  %1287 = vperm.xlu0 %1286, %v1277
  %v1288 = vpop.permute.xlu0 %1287
  %1291 = vset.pattern.permute.xlu0 21
  %1292 = vperm.xlu0 %1291, %v1278
  %v1293 = vpop.permute.xlu0 %1292
  %v1295 = vmul.f32 %v1283, %v1274
  %v1296 = vmul.f32 %v1288, %v1274
  %v1297 = vmul.f32 %v1293, %v1274
  %v1298 = vsub.f32 %v1268, %v1295
  %v1299 = vsub.f32 %v1269, %v1296
  %v1300 = vsub.f32 %v1270, %v1297
  %v1301 = vsel %vm1279, %v1283, %v1298
  %v1302 = vsel %vm1279, %v1288, %v1299
  %v1303 = vsel %vm1279, %v1293, %v1300
  %v1304 = vlaneseq
  %v1305 = vshrl.u32 %v1304, 7
  %v1306 = vsub.s32 6, %v1305
  %v1307 = vrot.slane %v1301, %v1306
  %v1308 = vrcp.pop %v1307
  %v1309 = vmul.f32 %v1301, %v1308
  %v1310 = vmul.f32 %v1302, %v1308
  %v1311 = vmul.f32 %v1303, %v1308
  %vm1312 = vcmp.eq.s32.totalorder %v226, 22
  %1314 = vset.pattern.permute.xlu0 22
  %1315 = vperm.xlu0 %1314, %v1309
  %v1316 = vpop.permute.xlu0 %1315
  %1319 = vset.pattern.permute.xlu0 22
  %1320 = vperm.xlu0 %1319, %v1310
  %v1321 = vpop.permute.xlu0 %1320
  %1324 = vset.pattern.permute.xlu0 22
  %1325 = vperm.xlu0 %1324, %v1311
  %v1326 = vpop.permute.xlu0 %1325
  %v1328 = vmul.f32 %v1316, %v1307
  %v1329 = vmul.f32 %v1321, %v1307
  %v1330 = vmul.f32 %v1326, %v1307
  %v1331 = vsub.f32 %v1301, %v1328
  %v1332 = vsub.f32 %v1302, %v1329
  %v1333 = vsub.f32 %v1303, %v1330
  %v1334 = vsel %vm1312, %v1316, %v1331
  %v1335 = vsel %vm1312, %v1321, %v1332
  %v1336 = vsel %vm1312, %v1326, %v1333
  %v1337 = vlaneseq
  %v1338 = vshrl.u32 %v1337, 7
  %v1339 = vsub.s32 7, %v1338
  %v1340 = vrot.slane %v1334, %v1339
  %v1341 = vrcp.pop %v1340
  %v1342 = vmul.f32 %v1335, %v1341
  %v1343 = vmul.f32 %v1336, %v1341
  %vm1344 = vcmp.eq.s32.totalorder %v226, 23
  %1346 = vset.pattern.permute.xlu0 23
  %1347 = vperm.xlu0 %1346, %v1342
  %v1348 = vpop.permute.xlu0 %1347
  %1351 = vset.pattern.permute.xlu0 23
  %1352 = vperm.xlu0 %1351, %v1343
  %v1353 = vpop.permute.xlu0 %1352
  %v1355 = vmul.f32 %v1348, %v1340
  %v1356 = vmul.f32 %v1353, %v1340
  %v1357 = vsub.f32 %v1335, %v1355
  %v1358 = vsub.f32 %v1336, %v1356
  %v1359 = vsel %vm1344, %v1348, %v1357
  %v1360 = vsel %vm1344, %v1353, %v1358
  %v1361 = vlaneseq
  %v1362 = vshrl.u32 %v1361, 7
  %v1363 = vsub.s32 0, %v1362
  %v1364 = vrot.slane %v1359, %v1363
  %v1365 = vrcp.pop %v1364
  %v1366 = vmul.f32 %v1359, %v1365
  %v1367 = vmul.f32 %v1360, %v1365
  %vm1368 = vcmp.eq.s32.totalorder %v226, 24
  %1370 = vset.pattern.permute.xlu0 24
  %1371 = vperm.xlu0 %1370, %v1366
  %v1372 = vpop.permute.xlu0 %1371
  %1375 = vset.pattern.permute.xlu0 24
  %1376 = vperm.xlu0 %1375, %v1367
  %v1377 = vpop.permute.xlu0 %1376
  %v1379 = vmul.f32 %v1372, %v1364
  %v1380 = vmul.f32 %v1377, %v1364
  %v1381 = vsub.f32 %v1359, %v1379
  %v1382 = vsub.f32 %v1360, %v1380
  %v1383 = vsel %vm1368, %v1372, %v1381
  %v1384 = vsel %vm1368, %v1377, %v1382
  %v1385 = vlaneseq
  %v1386 = vshrl.u32 %v1385, 7
  %v1387 = vsub.s32 1, %v1386
  %v1388 = vrot.slane %v1383, %v1387
  %v1389 = vrcp.pop %v1388
  %v1390 = vmul.f32 %v1383, %v1389
  %v1391 = vmul.f32 %v1384, %v1389
  %vm1392 = vcmp.eq.s32.totalorder %v226, 25
  %1394 = vset.pattern.permute.xlu0 25
  %1395 = vperm.xlu0 %1394, %v1390
  %v1396 = vpop.permute.xlu0 %1395
  %1399 = vset.pattern.permute.xlu0 25
  %1400 = vperm.xlu0 %1399, %v1391
  %v1401 = vpop.permute.xlu0 %1400
  %v1403 = vmul.f32 %v1396, %v1388
  %v1404 = vmul.f32 %v1401, %v1388
  %v1405 = vsub.f32 %v1383, %v1403
  %v1406 = vsub.f32 %v1384, %v1404
  %v1407 = vsel %vm1392, %v1396, %v1405
  %v1408 = vsel %vm1392, %v1401, %v1406
  %v1409 = vlaneseq
  %v1410 = vshrl.u32 %v1409, 7
  %v1411 = vsub.s32 2, %v1410
  %v1412 = vrot.slane %v1407, %v1411
  %v1413 = vrcp.pop %v1412
  %v1414 = vmul.f32 %v1407, %v1413
  %v1415 = vmul.f32 %v1408, %v1413
  %vm1416 = vcmp.eq.s32.totalorder %v226, 26
  %1418 = vset.pattern.permute.xlu0 26
  %1419 = vperm.xlu0 %1418, %v1414
  %v1420 = vpop.permute.xlu0 %1419
  %1423 = vset.pattern.permute.xlu0 26
  %1424 = vperm.xlu0 %1423, %v1415
  %v1425 = vpop.permute.xlu0 %1424
  %v1427 = vmul.f32 %v1420, %v1412
  %v1428 = vmul.f32 %v1425, %v1412
  %v1429 = vsub.f32 %v1407, %v1427
  %v1430 = vsub.f32 %v1408, %v1428
  %v1431 = vsel %vm1416, %v1420, %v1429
  %v1432 = vsel %vm1416, %v1425, %v1430
  %v1433 = vlaneseq
  %v1434 = vshrl.u32 %v1433, 7
  %v1435 = vsub.s32 3, %v1434
  %v1436 = vrot.slane %v1431, %v1435
  %v1437 = vrcp.pop %v1436
  %v1438 = vmul.f32 %v1431, %v1437
  %v1439 = vmul.f32 %v1432, %v1437
  %vm1440 = vcmp.eq.s32.totalorder %v226, 27
  %1442 = vset.pattern.permute.xlu0 27
  %1443 = vperm.xlu0 %1442, %v1438
  %v1444 = vpop.permute.xlu0 %1443
  %1447 = vset.pattern.permute.xlu0 27
  %1448 = vperm.xlu0 %1447, %v1439
  %v1449 = vpop.permute.xlu0 %1448
  %v1451 = vmul.f32 %v1444, %v1436
  %v1452 = vmul.f32 %v1449, %v1436
  %v1453 = vsub.f32 %v1431, %v1451
  %v1454 = vsub.f32 %v1432, %v1452
  %v1455 = vsel %vm1440, %v1444, %v1453
  %v1456 = vsel %vm1440, %v1449, %v1454
  %v1457 = vlaneseq
  %v1458 = vshrl.u32 %v1457, 7
  %v1459 = vsub.s32 4, %v1458
  %v1460 = vrot.slane %v1455, %v1459
  %v1461 = vrcp.pop %v1460
  %v1462 = vmul.f32 %v1455, %v1461
  %v1463 = vmul.f32 %v1456, %v1461
  %vm1464 = vcmp.eq.s32.totalorder %v226, 28
  %1466 = vset.pattern.permute.xlu0 28
  %1467 = vperm.xlu0 %1466, %v1462
  %v1468 = vpop.permute.xlu0 %1467
  %1471 = vset.pattern.permute.xlu0 28
  %1472 = vperm.xlu0 %1471, %v1463
  %v1473 = vpop.permute.xlu0 %1472
  %v1475 = vmul.f32 %v1468, %v1460
  %v1476 = vmul.f32 %v1473, %v1460
  %v1477 = vsub.f32 %v1455, %v1475
  %v1478 = vsub.f32 %v1456, %v1476
  %v1479 = vsel %vm1464, %v1468, %v1477
  %v1480 = vsel %vm1464, %v1473, %v1478
  %v1481 = vlaneseq
  %v1482 = vshrl.u32 %v1481, 7
  %v1483 = vsub.s32 5, %v1482
  %v1484 = vrot.slane %v1479, %v1483
  %v1485 = vrcp.pop %v1484
  %v1486 = vmul.f32 %v1479, %v1485
  %v1487 = vmul.f32 %v1480, %v1485
  %vm1488 = vcmp.eq.s32.totalorder %v226, 29
  %1490 = vset.pattern.permute.xlu0 29
  %1491 = vperm.xlu0 %1490, %v1486
  %v1492 = vpop.permute.xlu0 %1491
  %1495 = vset.pattern.permute.xlu0 29
  %1496 = vperm.xlu0 %1495, %v1487
  %v1497 = vpop.permute.xlu0 %1496
  %v1499 = vmul.f32 %v1492, %v1484
  %v1500 = vmul.f32 %v1497, %v1484
  %v1501 = vsub.f32 %v1479, %v1499
  %v1502 = vsub.f32 %v1480, %v1500
  %v1503 = vsel %vm1488, %v1492, %v1501
  %v1504 = vsel %vm1488, %v1497, %v1502
  %v1505 = vlaneseq
  %v1506 = vshrl.u32 %v1505, 7
  %v1507 = vsub.s32 6, %v1506
  %v1508 = vrot.slane %v1503, %v1507
  %v1509 = vrcp.pop %v1508
  %v1510 = vmul.f32 %v1503, %v1509
  %v1511 = vmul.f32 %v1504, %v1509
  %vm1512 = vcmp.eq.s32.totalorder %v226, 30
  %1514 = vset.pattern.permute.xlu0 30
  %1515 = vperm.xlu0 %1514, %v1510
  %v1516 = vpop.permute.xlu0 %1515
  %1519 = vset.pattern.permute.xlu0 30
  %1520 = vperm.xlu0 %1519, %v1511
  %v1521 = vpop.permute.xlu0 %1520
  %v1523 = vmul.f32 %v1516, %v1508
  %v1524 = vmul.f32 %v1521, %v1508
  %v1525 = vsub.f32 %v1503, %v1523
  %v1526 = vsub.f32 %v1504, %v1524
  %v1527 = vsel %vm1512, %v1516, %v1525
  %v1528 = vsel %vm1512, %v1521, %v1526
  %v1529 = vlaneseq
  %v1530 = vshrl.u32 %v1529, 7
  %v1531 = vsub.s32 7, %v1530
  %v1532 = vrot.slane %v1527, %v1531
  %v1533 = vrcp.pop %v1532
  %v1534 = vmul.f32 %v1528, %v1533
  %vm1535 = vcmp.eq.s32.totalorder %v226, 31
  %1537 = vset.pattern.permute.xlu0 31
  %1538 = vperm.xlu0 %1537, %v1534
  %v1539 = vpop.permute.xlu0 %1538
  %v1541 = vmul.f32 %v1539, %v1532
  %v1542 = vsub.f32 %v1528, %v1541
  %v1543 = vsel %vm1535, %v1539, %v1542
  %v1544 = vlaneseq
  %v1545 = vshrl.u32 %v1544, 7
  %v1546 = vsub.s32 0, %v1545
  %v1547 = vrot.slane %v1543, %v1546
  %v1548 = vrcp.pop %v1547
  %v1549 = vmul.f32 %v1543, %v1548
  %vm1550 = vcmp.eq.s32.totalorder %v226, 32
  %1552 = vset.pattern.permute.xlu0 32
  %1553 = vperm.xlu0 %1552, %v1549
  %v1554 = vpop.permute.xlu0 %1553
  %v1556 = vmul.f32 %v1554, %v1547
  %v1557 = vsub.f32 %v1543, %v1556
  %v1558 = vsel %vm1550, %v1554, %v1557
  %v1559 = vlaneseq
  %v1560 = vshrl.u32 %v1559, 7
  %v1561 = vsub.s32 1, %v1560
  %v1562 = vrot.slane %v1558, %v1561
  %v1563 = vmul.f32 %v211, %v1562
  %v1564 = vsel %vm129, %v1563, 0.0
  %1565 = vadd.xlane.f32.xlu0 %v1564
  %v1566 = vpop.xlane.xlu0 %1565
  %v1567 = vadd.f32 %v1566, %v1562
  %1568 = vrot.lane.b32.xlu0 %v19, 32
  %v1569 = vpop.permute.xlu0 %1568
  %v1571 = vsub.f32 %v1567, %v1569
  %v1572 = vmul.f32 %v1571, 0.25
  %1574 = vset.pattern.permute.xlu0 32
  %1575 = vperm.xlu0 %1574, %v1572
  %v1576 = vpop.permute.xlu0 %1575
  %v1578 = vmul.f32 %v1576, %v211
  %v1579 = vsel %vm129, %v1578, 0.0
  %v1580 = vrot.slane %v1579, 4
  %v1581 = vadd.f32 %v1579, %v1580
  %v1582 = vrot.slane %v1581, 2
  %v1583 = vadd.f32 %v1581, %v1582
  %v1584 = vrot.slane %v1583, 1
  %v1585 = vadd.f32 %v1583, %v1584
  %vm1586 = vcmask 269568
  %v1587 = vsel %vm1586, %v1572, 0.0
  %v1588 = vrot.slane %v1587, 4
  %v1589 = vadd.f32 %v1587, %v1588
  %v1590 = vrot.slane %v1589, 2
  %v1591 = vadd.f32 %v1589, %v1590
  %v1592 = vrot.slane %v1591, 1
  %v1593 = vadd.f32 %v1591, %v1592
  %vm1594 = vcmp.gt.f32.partialorder %v211, 0.0
  %v1595 = vmul.f32 %v1576, %v1562
  %v1596 = vsel %vm1594, %v1595, 0.0
  %1597 = vxpose.xlu0.b32.start [1/16] %v1596, 128
  %1598 = vxpose.xlu0.b32.cont [2/16] 0.0, 128
  %1599 = vxpose.xlu0.b32.cont [3/16] 0.0, 128
  %1600 = vxpose.xlu0.b32.cont [4/16] 0.0, 128
  %1601 = vxpose.xlu0.b32.cont [5/16] 0.0, 128
  %1602 = vxpose.xlu0.b32.cont [6/16] 0.0, 128
  %1603 = vxpose.xlu0.b32.cont [7/16] 0.0, 128
  %1604 = vxpose.xlu0.b32.cont [8/16] 0.0, 128
  %1605 = vxpose.xlu0.b32.cont [9/16] 0.0, 128
  %1606 = vxpose.xlu0.b32.cont [10/16] 0.0, 128
  %1607 = vxpose.xlu0.b32.cont [11/16] 0.0, 128
  %1608 = vxpose.xlu0.b32.cont [12/16] 0.0, 128
  %1609 = vxpose.xlu0.b32.cont [13/16] 0.0, 128
  %1610 = vxpose.xlu0.b32.cont [14/16] 0.0, 128
  %1611 = vxpose.xlu0.b32.cont [15/16] 0.0, 128
  %1612 = vxpose.xlu0.b32.end [16/16] 0.0, 128
  %v1613 = vpop.trf.xlu0
  %v1614 = vpop.trf.xlu0
  %v1615 = vpop.trf.xlu0
  %v1616 = vpop.trf.xlu0
  %v1617 = vpop.trf.xlu0
  %v1618 = vpop.trf.xlu0
  %v1619 = vpop.trf.xlu0
  %v1620 = vpop.trf.xlu0
  %v1621 = vpop.trf.xlu0
  %v1622 = vpop.trf.xlu0
  %v1623 = vpop.trf.xlu0
  %v1624 = vpop.trf.xlu0
  %v1625 = vpop.trf.xlu0
  %v1626 = vpop.trf.xlu0
  %v1627 = vpop.trf.xlu0
  %v1628 = vpop.trf.xlu0
  %v1630 = vsel %vm274, %v1613, 0
  %v1633 = vsel %vm274, %v1614, 0
  %v1636 = vsel %vm274, %v1615, 0
  %v1639 = vsel %vm274, %v1616, 0
  %1641 = vmatprep.subr.mxu0 0.0
  %1642 = vmatpush1.msra.mxu0 0.0
  %1643 = vmatprep.subr.mxu0 0.0
  %1644 = vmatpush1.msra.mxu0 0.0
  %1645 = vmatprep.subr.mxu0 0.0
  %1646 = vmatpush1.msra.mxu0 0.0
  %1647 = vmatprep.subr.mxu0 0.0
  %1648 = vmatpush1.msra.mxu0 0.0
  %1649 = vmatprep.subr.mxu0 0.0
  %1650 = vmatpush1.msra.mxu0 0.0
  %1651 = vmatprep.subr.mxu0 0.0
  %1652 = vmatpush1.msra.mxu0 0.0
  %1653 = vmatprep.subr.mxu0 0.0
  %1654 = vmatpush1.msra.mxu0 0.0
  %1655 = vmatprep.subr.mxu0 0.0
  %1656 = vmatpush1.msra.mxu0 0.0
  %1657 = vmatprep.subr.mxu0 0.0
  %1658 = vmatpush1.msra.mxu0 0.0
  %1659 = vmatprep.subr.mxu0 0.0
  %1660 = vmatpush1.msra.mxu0 0.0
  %1661 = vmatprep.subr.mxu0 0.0
  %1662 = vmatpush1.msra.mxu0 0.0
  %1663 = vmatprep.subr.mxu0 0.0
  %1664 = vmatpush1.msra.mxu0 0.0
  %1665 = vmatprep.subr.mxu0 0.0
  %1666 = vmatpush1.msra.mxu0 0.0
  %1667 = vmatprep.subr.mxu0 0.0
  %1668 = vmatpush1.msra.mxu0 0.0
  %1669 = vmatprep.subr.mxu0 0.0
  %1670 = vmatpush1.msra.mxu0 0.0
  %1671 = vmatprep.subr.mxu0 0.0
  %1672 = vmatpush1.msra.mxu0 %v124
  %1673 = vmatprep.subr.mxu0 0.0
  %1674 = vmatpush2.msra.mxu0 0.0
  %1675 = vmatprep.subr.mxu0 0.0
  %1676 = vmatpush2.msra.mxu0 0.0
  %1677 = vmatprep.subr.mxu0 0.0
  %1678 = vmatpush2.msra.mxu0 0.0
  %1679 = vmatprep.subr.mxu0 0.0
  %1680 = vmatpush2.msra.mxu0 0.0
  %1681 = vmatprep.subr.mxu0 0.0
  %1682 = vmatpush2.msra.mxu0 0.0
  %1683 = vmatprep.subr.mxu0 0.0
  %1684 = vmatpush2.msra.mxu0 0.0
  %1685 = vmatprep.subr.mxu0 0.0
  %1686 = vmatpush2.msra.mxu0 0.0
  %1687 = vmatprep.subr.mxu0 0.0
  %1688 = vmatpush2.msra.mxu0 0.0
  %1689 = vmatprep.subr.mxu0 0.0
  %1690 = vmatpush2.msra.mxu0 0.0
  %1691 = vmatprep.subr.mxu0 0.0
  %1692 = vmatpush2.msra.mxu0 0.0
  %1693 = vmatprep.subr.mxu0 0.0
  %1694 = vmatpush2.msra.mxu0 0.0
  %1695 = vmatprep.subr.mxu0 0.0
  %1696 = vmatpush2.msra.mxu0 0.0
  %1697 = vmatprep.subr.mxu0 0.0
  %1698 = vmatpush2.msra.mxu0 0.0
  %1699 = vmatprep.subr.mxu0 0.0
  %1700 = vmatpush2.msra.mxu0 0.0
  %1701 = vmatprep.subr.mxu0 0.0
  %1702 = vmatpush2.msra.mxu0 0.0
  %1703 = vmatprep.subr.mxu0 0.0
  %1704 = vmatpush2.msra.mxu0 0.0
  %1705 = vmatprep.mubr.f32.mxu0 0.0
  %1706 = vmatmul.mubr.f32.gmra.mxu0 %v1630
  %v1707 = vpop.f32.mrf.mxu0
  %v1708 = vadd.f32 0.0, %v1707
  %v1709 = vpop.f32.mrf.mxu0
  %1710 = vmatprep.mubr.f32.mxu0 0.0
  %1711 = vmatmul.mubr.f32.gmra.mxu0 %v1633
  %v1712 = vpop.f32.mrf.mxu0
  %v1713 = vadd.f32 0.0, %v1712
  %v1714 = vpop.f32.mrf.mxu0
  %1715 = vmatprep.mubr.f32.mxu0 0.0
  %1716 = vmatmul.mubr.f32.gmra.mxu0 %v1636
  %v1717 = vpop.f32.mrf.mxu0
  %v1718 = vadd.f32 0.0, %v1717
  %v1719 = vpop.f32.mrf.mxu0
  %1720 = vmatprep.mubr.f32.mxu0 0.0
  %1721 = vmatmul.mubr.f32.gmra.mxu0 %v1639
  %v1722 = vpop.f32.mrf.mxu0
  %v1723 = vadd.f32 0.0, %v1722
  %v1724 = vpop.f32.mrf.mxu0
  %1725 = vdwg.mxu0
  %v1726 = vsel %vm129, %v1596, 0.0
  %v1727 = vrot.slane %v1726, 4
  %v1728 = vadd.f32 %v1726, %v1727
  %v1729 = vrot.slane %v1728, 2
  %v1730 = vadd.f32 %v1728, %v1729
  %v1731 = vrot.slane %v1730, 1
  %v1732 = vadd.f32 %v1730, %v1731
  %vm1733 = vcmp.gt.f32.partialorder %v124, 0.0
  %v1735 = vsel %vm129, %v1596, 0
  %1737 = vmatprep.subr.mxu0 0.0
  %1738 = vmatpush1.msra.mxu0 0.0
  %1739 = vmatprep.subr.mxu0 0.0
  %1740 = vmatpush1.msra.mxu0 0.0
  %1741 = vmatprep.subr.mxu0 0.0
  %1742 = vmatpush1.msra.mxu0 0.0
  %1743 = vmatprep.subr.mxu0 0.0
  %1744 = vmatpush1.msra.mxu0 0.0
  %1745 = vmatprep.subr.mxu0 0.0
  %1746 = vmatpush1.msra.mxu0 0.0
  %1747 = vmatprep.subr.mxu0 0.0
  %1748 = vmatpush1.msra.mxu0 0.0
  %1749 = vmatprep.subr.mxu0 0.0
  %1750 = vmatpush1.msra.mxu0 0.0
  %1751 = vmatprep.subr.mxu0 0.0
  %1752 = vmatpush1.msra.mxu0 0.0
  %1753 = vmatprep.subr.mxu0 0.0
  %1754 = vmatpush1.msra.mxu0 0.0
  %1755 = vmatprep.subr.mxu0 0.0
  %1756 = vmatpush1.msra.mxu0 0.0
  %1757 = vmatprep.subr.mxu0 0.0
  %1758 = vmatpush1.msra.mxu0 0.0
  %1759 = vmatprep.subr.mxu0 0.0
  %1760 = vmatpush1.msra.mxu0 0.0
  %1761 = vmatprep.subr.mxu0 0.0
  %1762 = vmatpush1.msra.mxu0 %v23
  %1763 = vmatprep.subr.mxu0 0.0
  %1764 = vmatpush1.msra.mxu0 %v22
  %1765 = vmatprep.subr.mxu0 0.0
  %1766 = vmatpush1.msra.mxu0 %v21
  %1767 = vmatprep.subr.mxu0 0.0
  %1768 = vmatpush1.msra.mxu0 %v20
  %1769 = vmatprep.subr.mxu0 0.0
  %1770 = vmatpush2.msra.mxu0 0.0
  %1771 = vmatprep.subr.mxu0 0.0
  %1772 = vmatpush2.msra.mxu0 0.0
  %1773 = vmatprep.subr.mxu0 0.0
  %1774 = vmatpush2.msra.mxu0 0.0
  %1775 = vmatprep.subr.mxu0 0.0
  %1776 = vmatpush2.msra.mxu0 0.0
  %1777 = vmatprep.subr.mxu0 0.0
  %1778 = vmatpush2.msra.mxu0 0.0
  %1779 = vmatprep.subr.mxu0 0.0
  %1780 = vmatpush2.msra.mxu0 0.0
  %1781 = vmatprep.subr.mxu0 0.0
  %1782 = vmatpush2.msra.mxu0 0.0
  %1783 = vmatprep.subr.mxu0 0.0
  %1784 = vmatpush2.msra.mxu0 0.0
  %1785 = vmatprep.subr.mxu0 0.0
  %1786 = vmatpush2.msra.mxu0 0.0
  %1787 = vmatprep.subr.mxu0 0.0
  %1788 = vmatpush2.msra.mxu0 0.0
  %1789 = vmatprep.subr.mxu0 0.0
  %1790 = vmatpush2.msra.mxu0 0.0
  %1791 = vmatprep.subr.mxu0 0.0
  %1792 = vmatpush2.msra.mxu0 0.0
  %1793 = vmatprep.subr.mxu0 0.0
  %1794 = vmatpush2.msra.mxu0 0.0
  %1795 = vmatprep.subr.mxu0 0.0
  %1796 = vmatpush2.msra.mxu0 0.0
  %1797 = vmatprep.subr.mxu0 0.0
  %1798 = vmatpush2.msra.mxu0 0.0
  %1799 = vmatprep.subr.mxu0 0.0
  %1800 = vmatpush2.msra.mxu0 0.0
  %1801 = vmatprep.mubr.f32.mxu0 0.0
  %1802 = vmatmul.mubr.f32.gmra.mxu0 %v1735
  %v1803 = vpop.f32.mrf.mxu0
  %v1804 = vadd.f32 0.0, %v1803
  %v1805 = vpop.f32.mrf.mxu0
  %1806 = vdwg.mxu0
  %v1807 = vsel %vm1733, %v1804, 0.0
  %1808 = vxpose.xlu0.b32.start [1/16] %v1807, 128
  %1809 = vxpose.xlu0.b32.cont [2/16] 0.0, 128
  %1810 = vxpose.xlu0.b32.cont [3/16] 0.0, 128
  %1811 = vxpose.xlu0.b32.cont [4/16] 0.0, 128
  %1812 = vxpose.xlu0.b32.cont [5/16] 0.0, 128
  %1813 = vxpose.xlu0.b32.cont [6/16] 0.0, 128
  %1814 = vxpose.xlu0.b32.cont [7/16] 0.0, 128
  %1815 = vxpose.xlu0.b32.cont [8/16] 0.0, 128
  %1816 = vxpose.xlu0.b32.cont [9/16] 0.0, 128
  %1817 = vxpose.xlu0.b32.cont [10/16] 0.0, 128
  %1818 = vxpose.xlu0.b32.cont [11/16] 0.0, 128
  %1819 = vxpose.xlu0.b32.cont [12/16] 0.0, 128
  %1820 = vxpose.xlu0.b32.cont [13/16] 0.0, 128
  %1821 = vxpose.xlu0.b32.cont [14/16] 0.0, 128
  %1822 = vxpose.xlu0.b32.cont [15/16] 0.0, 128
  %1823 = vxpose.xlu0.b32.end [16/16] 0.0, 128
  %v1824 = vpop.trf.xlu0
  %v1825 = vpop.trf.xlu0
  %v1826 = vpop.trf.xlu0
  %v1827 = vpop.trf.xlu0
  %v1828 = vpop.trf.xlu0
  %v1829 = vpop.trf.xlu0
  %v1830 = vpop.trf.xlu0
  %v1831 = vpop.trf.xlu0
  %v1832 = vpop.trf.xlu0
  %v1833 = vpop.trf.xlu0
  %v1834 = vpop.trf.xlu0
  %v1835 = vpop.trf.xlu0
  %v1836 = vpop.trf.xlu0
  %v1837 = vpop.trf.xlu0
  %v1838 = vpop.trf.xlu0
  %v1839 = vpop.trf.xlu0
  %v1841 = vsel %vm274, %v1824, 0
  %v1844 = vsel %vm274, %v1825, 0
  %v1847 = vsel %vm274, %v1826, 0
  %v1850 = vsel %vm274, %v1827, 0
  %1852 = vmatprep.subr.mxu0 0.0
  %1853 = vmatpush1.msra.mxu0 0.0
  %1854 = vmatprep.subr.mxu0 0.0
  %1855 = vmatpush1.msra.mxu0 0.0
  %1856 = vmatprep.subr.mxu0 0.0
  %1857 = vmatpush1.msra.mxu0 0.0
  %1858 = vmatprep.subr.mxu0 0.0
  %1859 = vmatpush1.msra.mxu0 0.0
  %1860 = vmatprep.subr.mxu0 0.0
  %1861 = vmatpush1.msra.mxu0 0.0
  %1862 = vmatprep.subr.mxu0 0.0
  %1863 = vmatpush1.msra.mxu0 0.0
  %1864 = vmatprep.subr.mxu0 0.0
  %1865 = vmatpush1.msra.mxu0 0.0
  %1866 = vmatprep.subr.mxu0 0.0
  %1867 = vmatpush1.msra.mxu0 0.0
  %1868 = vmatprep.subr.mxu0 0.0
  %1869 = vmatpush1.msra.mxu0 0.0
  %1870 = vmatprep.subr.mxu0 0.0
  %1871 = vmatpush1.msra.mxu0 0.0
  %1872 = vmatprep.subr.mxu0 0.0
  %1873 = vmatpush1.msra.mxu0 0.0
  %1874 = vmatprep.subr.mxu0 0.0
  %1875 = vmatpush1.msra.mxu0 0.0
  %1876 = vmatprep.subr.mxu0 0.0
  %1877 = vmatpush1.msra.mxu0 0.0
  %1878 = vmatprep.subr.mxu0 0.0
  %1879 = vmatpush1.msra.mxu0 0.0
  %1880 = vmatprep.subr.mxu0 0.0
  %1881 = vmatpush1.msra.mxu0 0.0
  %1882 = vmatprep.subr.mxu0 0.0
  %1883 = vmatpush1.msra.mxu0 %v17
  %1884 = vmatprep.subr.mxu0 0.0
  %1885 = vmatpush2.msra.mxu0 0.0
  %1886 = vmatprep.subr.mxu0 0.0
  %1887 = vmatpush2.msra.mxu0 0.0
  %1888 = vmatprep.subr.mxu0 0.0
  %1889 = vmatpush2.msra.mxu0 0.0
  %1890 = vmatprep.subr.mxu0 0.0
  %1891 = vmatpush2.msra.mxu0 0.0
  %1892 = vmatprep.subr.mxu0 0.0
  %1893 = vmatpush2.msra.mxu0 0.0
  %1894 = vmatprep.subr.mxu0 0.0
  %1895 = vmatpush2.msra.mxu0 0.0
  %1896 = vmatprep.subr.mxu0 0.0
  %1897 = vmatpush2.msra.mxu0 0.0
  %1898 = vmatprep.subr.mxu0 0.0
  %1899 = vmatpush2.msra.mxu0 0.0
  %1900 = vmatprep.subr.mxu0 0.0
  %1901 = vmatpush2.msra.mxu0 0.0
  %1902 = vmatprep.subr.mxu0 0.0
  %1903 = vmatpush2.msra.mxu0 0.0
  %1904 = vmatprep.subr.mxu0 0.0
  %1905 = vmatpush2.msra.mxu0 0.0
  %1906 = vmatprep.subr.mxu0 0.0
  %1907 = vmatpush2.msra.mxu0 0.0
  %1908 = vmatprep.subr.mxu0 0.0
  %1909 = vmatpush2.msra.mxu0 0.0
  %1910 = vmatprep.subr.mxu0 0.0
  %1911 = vmatpush2.msra.mxu0 0.0
  %1912 = vmatprep.subr.mxu0 0.0
  %1913 = vmatpush2.msra.mxu0 0.0
  %1914 = vmatprep.subr.mxu0 0.0
  %1915 = vmatpush2.msra.mxu0 0.0
  %1916 = vmatprep.mubr.f32.mxu0 0.0
  %1917 = vmatmul.mubr.f32.gmra.mxu0 %v1841
  %v1918 = vpop.f32.mrf.mxu0
  %v1919 = vadd.f32 0.0, %v1918
  %v1920 = vpop.f32.mrf.mxu0
  %1921 = vmatprep.mubr.f32.mxu0 0.0
  %1922 = vmatmul.mubr.f32.gmra.mxu0 %v1844
  %v1923 = vpop.f32.mrf.mxu0
  %v1924 = vadd.f32 0.0, %v1923
  %v1925 = vpop.f32.mrf.mxu0
  %1926 = vmatprep.mubr.f32.mxu0 0.0
  %1927 = vmatmul.mubr.f32.gmra.mxu0 %v1847
  %v1928 = vpop.f32.mrf.mxu0
  %v1929 = vadd.f32 0.0, %v1928
  %v1930 = vpop.f32.mrf.mxu0
  %1931 = vmatprep.mubr.f32.mxu0 0.0
  %1932 = vmatmul.mubr.f32.gmra.mxu0 %v1850
  %v1933 = vpop.f32.mrf.mxu0
  %v1934 = vadd.f32 0.0, %v1933
  %v1935 = vpop.f32.mrf.mxu0
  %1936 = vdwg.mxu0
  %v1937 = vsel %vm129, %v1807, 0.0
  %v1938 = vrot.slane %v1937, 4
  %v1939 = vadd.f32 %v1937, %v1938
  %v1940 = vrot.slane %v1939, 2
  %v1941 = vadd.f32 %v1939, %v1940
  %v1942 = vrot.slane %v1941, 1
  %v1943 = vadd.f32 %v1941, %v1942
  %v1944 = vadd.f32 %v1585, 0.0
  %v1945 = vadd.f32 %v1593, 0.0
  %v1946 = vmul.f32 %v1919, 0.01
  %v1947 = vmul.f32 %v1924, 0.01
  %v1948 = vmul.f32 %v1929, 0.01
  %v1949 = vmul.f32 %v1934, 0.01
  %1954 = vrot.lane.b32.xlu0 %v1946, 32
  %v1955 = vpop.permute.xlu0 %1954
  %1956 = vrot.lane.b32.xlu0 %v1947, 32
  %v1957 = vpop.permute.xlu0 %1956
  %1958 = vrot.lane.b32.xlu0 %v1948, 32
  %v1959 = vpop.permute.xlu0 %1958
  %1960 = vrot.lane.b32.xlu0 %v1949, 32
  %v1961 = vpop.permute.xlu0 %1960
  %v1966 = vsub.f32 %v20, %v1955
  %v1967 = vsub.f32 %v21, %v1957
  %v1968 = vsub.f32 %v22, %v1959
  %v1969 = vsub.f32 %v23, %v1961
  %v1970 = vmul.f32 %v1943, 0.01
  %v1971 = vsub.f32 %v24, %v1970
  %v1972 = vmul.f32 %v1708, 0.01
  %v1973 = vmul.f32 %v1713, 0.01
  %v1974 = vmul.f32 %v1718, 0.01
  %v1975 = vmul.f32 %v1723, 0.01
  %v1976 = vsub.f32 %v20, %v1972
  %v1977 = vsub.f32 %v21, %v1973
  %v1978 = vsub.f32 %v22, %v1974
  %v1979 = vsub.f32 %v23, %v1975
  %v1980 = vmul.f32 %v1732, 0.01
  %v1981 = vsub.f32 %v25, %v1980
  %v1982 = vmul.f32 %v1585, 0.01
  %v1983 = vsub.f32 %v1558, %v1982
  %v1984 = vmul.f32 %v1593, 0.01
  %v1985 = vsub.f32 %v1558, %v1984
  %v1986 = vlaneseq
  %v1987 = vshrl.u32 %v1986, 7
  %v1988 = vsub.s32 0, %v1987
  %v1989 = vrot.slane %v1971, %v1988
  %1994 = vrot.lane.b32.xlu0 %v1966, 96
  %v1995 = vpop.permute.xlu0 %1994
  %1996 = vrot.lane.b32.xlu0 %v1967, 96
  %v1997 = vpop.permute.xlu0 %1996
  %1998 = vrot.lane.b32.xlu0 %v1968, 96
  %v1999 = vpop.permute.xlu0 %1998
  %2000 = vrot.lane.b32.xlu0 %v1969, 96
  %v2001 = vpop.permute.xlu0 %2000
  %v2002 = vsel %vm42, %v1995, 0
  %v2004 = vsel %vm42, %v1997, 0
  %v2006 = vsel %vm42, %v1999, 0
  %v2008 = vsel %vm42, %v2001, 0
  %2010 = vmatprep.subr.mxu0 0.0
  %2011 = vmatpush1.xpose.msra.mxu0 0.0
  %2012 = vmatprep.subr.mxu0 0.0
  %2013 = vmatpush1.xpose.msra.mxu0 0.0
  %2014 = vmatprep.subr.mxu0 0.0
  %2015 = vmatpush1.xpose.msra.mxu0 0.0
  %2016 = vmatprep.subr.mxu0 0.0
  %2017 = vmatpush1.xpose.msra.mxu0 0.0
  %2018 = vmatprep.subr.mxu0 0.0
  %2019 = vmatpush1.xpose.msra.mxu0 0.0
  %2020 = vmatprep.subr.mxu0 0.0
  %2021 = vmatpush1.xpose.msra.mxu0 0.0
  %2022 = vmatprep.subr.mxu0 0.0
  %2023 = vmatpush1.xpose.msra.mxu0 0.0
  %2024 = vmatprep.subr.mxu0 0.0
  %2025 = vmatpush1.xpose.msra.mxu0 0.0
  %2026 = vmatprep.subr.mxu0 0.0
  %2027 = vmatpush1.xpose.msra.mxu0 0.0
  %2028 = vmatprep.subr.mxu0 0.0
  %2029 = vmatpush1.xpose.msra.mxu0 0.0
  %2030 = vmatprep.subr.mxu0 0.0
  %2031 = vmatpush1.xpose.msra.mxu0 0.0
  %2032 = vmatprep.subr.mxu0 0.0
  %2033 = vmatpush1.xpose.msra.mxu0 0.0
  %2034 = vmatprep.subr.mxu0 0.0
  %2035 = vmatpush1.xpose.msra.mxu0 %v2008
  %2036 = vmatprep.subr.mxu0 0.0
  %2037 = vmatpush1.xpose.msra.mxu0 %v2006
  %2038 = vmatprep.subr.mxu0 0.0
  %2039 = vmatpush1.xpose.msra.mxu0 %v2004
  %2040 = vmatprep.subr.mxu0 0.0
  %2041 = vmatpush1.xpose.msra.mxu0 %v2002
  %2042 = vmatprep.subr.mxu0 0.0
  %2043 = vmatpush2.xpose.msra.mxu0 0.0
  %2044 = vmatprep.subr.mxu0 0.0
  %2045 = vmatpush2.xpose.msra.mxu0 0.0
  %2046 = vmatprep.subr.mxu0 0.0
  %2047 = vmatpush2.xpose.msra.mxu0 0.0
  %2048 = vmatprep.subr.mxu0 0.0
  %2049 = vmatpush2.xpose.msra.mxu0 0.0
  %2050 = vmatprep.subr.mxu0 0.0
  %2051 = vmatpush2.xpose.msra.mxu0 0.0
  %2052 = vmatprep.subr.mxu0 0.0
  %2053 = vmatpush2.xpose.msra.mxu0 0.0
  %2054 = vmatprep.subr.mxu0 0.0
  %2055 = vmatpush2.xpose.msra.mxu0 0.0
  %2056 = vmatprep.subr.mxu0 0.0
  %2057 = vmatpush2.xpose.msra.mxu0 0.0
  %2058 = vmatprep.subr.mxu0 0.0
  %2059 = vmatpush2.xpose.msra.mxu0 0.0
  %2060 = vmatprep.subr.mxu0 0.0
  %2061 = vmatpush2.xpose.msra.mxu0 0.0
  %2062 = vmatprep.subr.mxu0 0.0
  %2063 = vmatpush2.xpose.msra.mxu0 0.0
  %2064 = vmatprep.subr.mxu0 0.0
  %2065 = vmatpush2.xpose.msra.mxu0 0.0
  %2066 = vmatprep.subr.mxu0 0.0
  %2067 = vmatpush2.xpose.msra.mxu0 0.0
  %2068 = vmatprep.subr.mxu0 0.0
  %2069 = vmatpush2.xpose.msra.mxu0 0.0
  %2070 = vmatprep.subr.mxu0 0.0
  %2071 = vmatpush2.xpose.msra.mxu0 0.0
  %2072 = vmatprep.subr.mxu0 0.0
  %2073 = vmatpush2.xpose.msra.mxu0 0.0
  %2074 = vmatprep.mubr.f32.mxu0 0.0
  %2075 = vmatmul.mubr.f32.gmra.mxu0 %v44
  %v2076 = vpop.f32.mrf.mxu0
  %v2077 = vadd.f32 %v1989, %v2076
  %v2078 = vpop.f32.mrf.mxu0
  %2079 = vdwg.mxu0
  %v2080 = vmax.f32 %v2077, 0.0
  %v2081 = vlaneseq
  %v2082 = vshrl.u32 %v2081, 7
  %v2083 = vsub.s32 0, %v2082
  %v2084 = vrot.slane %v1981, %v2083
  %v2086 = vsel %vm129, %v2080, 0
  %v2089 = vsel %vm129, %v1976, 0
  %v2092 = vsel %vm129, %v1977, 0
  %v2095 = vsel %vm129, %v1978, 0
  %v2098 = vsel %vm129, %v1979, 0
  %2100 = vmatprep.subr.mxu0 0.0
  %2101 = vmatpush1.xpose.msra.mxu0 0.0
  %2102 = vmatprep.subr.mxu0 0.0
  %2103 = vmatpush1.xpose.msra.mxu0 0.0
  %2104 = vmatprep.subr.mxu0 0.0
  %2105 = vmatpush1.xpose.msra.mxu0 0.0
  %2106 = vmatprep.subr.mxu0 0.0
  %2107 = vmatpush1.xpose.msra.mxu0 0.0
  %2108 = vmatprep.subr.mxu0 0.0
  %2109 = vmatpush1.xpose.msra.mxu0 0.0
  %2110 = vmatprep.subr.mxu0 0.0
  %2111 = vmatpush1.xpose.msra.mxu0 0.0
  %2112 = vmatprep.subr.mxu0 0.0
  %2113 = vmatpush1.xpose.msra.mxu0 0.0
  %2114 = vmatprep.subr.mxu0 0.0
  %2115 = vmatpush1.xpose.msra.mxu0 0.0
  %2116 = vmatprep.subr.mxu0 0.0
  %2117 = vmatpush1.xpose.msra.mxu0 0.0
  %2118 = vmatprep.subr.mxu0 0.0
  %2119 = vmatpush1.xpose.msra.mxu0 0.0
  %2120 = vmatprep.subr.mxu0 0.0
  %2121 = vmatpush1.xpose.msra.mxu0 0.0
  %2122 = vmatprep.subr.mxu0 0.0
  %2123 = vmatpush1.xpose.msra.mxu0 0.0
  %2124 = vmatprep.subr.mxu0 0.0
  %2125 = vmatpush1.xpose.msra.mxu0 %v2098
  %2126 = vmatprep.subr.mxu0 0.0
  %2127 = vmatpush1.xpose.msra.mxu0 %v2095
  %2128 = vmatprep.subr.mxu0 0.0
  %2129 = vmatpush1.xpose.msra.mxu0 %v2092
  %2130 = vmatprep.subr.mxu0 0.0
  %2131 = vmatpush1.xpose.msra.mxu0 %v2089
  %2132 = vmatprep.subr.mxu0 0.0
  %2133 = vmatpush2.xpose.msra.mxu0 0.0
  %2134 = vmatprep.subr.mxu0 0.0
  %2135 = vmatpush2.xpose.msra.mxu0 0.0
  %2136 = vmatprep.subr.mxu0 0.0
  %2137 = vmatpush2.xpose.msra.mxu0 0.0
  %2138 = vmatprep.subr.mxu0 0.0
  %2139 = vmatpush2.xpose.msra.mxu0 0.0
  %2140 = vmatprep.subr.mxu0 0.0
  %2141 = vmatpush2.xpose.msra.mxu0 0.0
  %2142 = vmatprep.subr.mxu0 0.0
  %2143 = vmatpush2.xpose.msra.mxu0 0.0
  %2144 = vmatprep.subr.mxu0 0.0
  %2145 = vmatpush2.xpose.msra.mxu0 0.0
  %2146 = vmatprep.subr.mxu0 0.0
  %2147 = vmatpush2.xpose.msra.mxu0 0.0
  %2148 = vmatprep.subr.mxu0 0.0
  %2149 = vmatpush2.xpose.msra.mxu0 0.0
  %2150 = vmatprep.subr.mxu0 0.0
  %2151 = vmatpush2.xpose.msra.mxu0 0.0
  %2152 = vmatprep.subr.mxu0 0.0
  %2153 = vmatpush2.xpose.msra.mxu0 0.0
  %2154 = vmatprep.subr.mxu0 0.0
  %2155 = vmatpush2.xpose.msra.mxu0 0.0
  %2156 = vmatprep.subr.mxu0 0.0
  %2157 = vmatpush2.xpose.msra.mxu0 0.0
  %2158 = vmatprep.subr.mxu0 0.0
  %2159 = vmatpush2.xpose.msra.mxu0 0.0
  %2160 = vmatprep.subr.mxu0 0.0
  %2161 = vmatpush2.xpose.msra.mxu0 0.0
  %2162 = vmatprep.subr.mxu0 0.0
  %2163 = vmatpush2.xpose.msra.mxu0 0.0
  %2164 = vmatprep.mubr.f32.mxu0 0.0
  %2165 = vmatmul.mubr.f32.gmra.mxu0 %v2086
  %v2166 = vpop.f32.mrf.mxu0
  %v2167 = vadd.f32 %v2084, %v2166
  %v2168 = vpop.f32.mrf.mxu0
  %2169 = vdwg.mxu0
  %v2170 = vmax.f32 %v2167, 0.0
  %v2171 = vlaneseq
  %v2172 = vshrl.u32 %v2171, 7
  %v2173 = vsub.s32 1, %v2172
  %v2174 = vrot.slane %v1983, %v2173
  %v2175 = vmul.f32 %v2170, %v2174
  %v2176 = vsel %vm129, %v2175, 0.0
  %2177 = vadd.xlane.f32.xlu0 %v2176
  %v2178 = vpop.xlane.xlu0 %2177
  %v2179 = vlaneseq
  %v2180 = vshrl.u32 %v2179, 7
  %v2181 = vsub.s32 1, %v2180
  %v2182 = vrot.slane %v1985, %v2181
  %v2183 = vadd.f32 %v2178, %v2182
  %v2184 = vsub.f32 %v2183, %v1569
  %v2185 = vmul.f32 %v2184, 0.25
  %2187 = vset.pattern.permute.xlu0 32
  %2188 = vperm.xlu0 %2187, %v2185
  %v2189 = vpop.permute.xlu0 %2188
  %v2191 = vmul.f32 %v2189, %v2170
  %v2192 = vsel %vm129, %v2191, 0.0
  %v2193 = vrot.slane %v2192, 4
  %v2194 = vadd.f32 %v2192, %v2193
  %v2195 = vrot.slane %v2194, 2
  %v2196 = vadd.f32 %v2194, %v2195
  %v2197 = vrot.slane %v2196, 1
  %v2198 = vadd.f32 %v2196, %v2197
  %v2199 = vsel %vm1586, %v2185, 0.0
  %v2200 = vrot.slane %v2199, 4
  %v2201 = vadd.f32 %v2199, %v2200
  %v2202 = vrot.slane %v2201, 2
  %v2203 = vadd.f32 %v2201, %v2202
  %v2204 = vrot.slane %v2203, 1
  %v2205 = vadd.f32 %v2203, %v2204
  %vm2206 = vcmp.gt.f32.partialorder %v2170, 0.0
  %v2207 = vmul.f32 %v2189, %v2174
  %v2208 = vsel %vm2206, %v2207, 0.0
  %2209 = vxpose.xlu0.b32.start [1/16] %v2208, 128
  %2210 = vxpose.xlu0.b32.cont [2/16] 0.0, 128
  %2211 = vxpose.xlu0.b32.cont [3/16] 0.0, 128
  %2212 = vxpose.xlu0.b32.cont [4/16] 0.0, 128
  %2213 = vxpose.xlu0.b32.cont [5/16] 0.0, 128
  %2214 = vxpose.xlu0.b32.cont [6/16] 0.0, 128
  %2215 = vxpose.xlu0.b32.cont [7/16] 0.0, 128
  %2216 = vxpose.xlu0.b32.cont [8/16] 0.0, 128
  %2217 = vxpose.xlu0.b32.cont [9/16] 0.0, 128
  %2218 = vxpose.xlu0.b32.cont [10/16] 0.0, 128
  %2219 = vxpose.xlu0.b32.cont [11/16] 0.0, 128
  %2220 = vxpose.xlu0.b32.cont [12/16] 0.0, 128
  %2221 = vxpose.xlu0.b32.cont [13/16] 0.0, 128
  %2222 = vxpose.xlu0.b32.cont [14/16] 0.0, 128
  %2223 = vxpose.xlu0.b32.cont [15/16] 0.0, 128
  %2224 = vxpose.xlu0.b32.end [16/16] 0.0, 128
  %v2225 = vpop.trf.xlu0
  %v2226 = vpop.trf.xlu0
  %v2227 = vpop.trf.xlu0
  %v2228 = vpop.trf.xlu0
  %v2229 = vpop.trf.xlu0
  %v2230 = vpop.trf.xlu0
  %v2231 = vpop.trf.xlu0
  %v2232 = vpop.trf.xlu0
  %v2233 = vpop.trf.xlu0
  %v2234 = vpop.trf.xlu0
  %v2235 = vpop.trf.xlu0
  %v2236 = vpop.trf.xlu0
  %v2237 = vpop.trf.xlu0
  %v2238 = vpop.trf.xlu0
  %v2239 = vpop.trf.xlu0
  %v2240 = vpop.trf.xlu0
  %v2242 = vsel %vm274, %v2225, 0
  %v2245 = vsel %vm274, %v2226, 0
  %v2248 = vsel %vm274, %v2227, 0
  %v2251 = vsel %vm274, %v2228, 0
  %2253 = vmatprep.subr.mxu0 0.0
  %2254 = vmatpush1.msra.mxu0 0.0
  %2255 = vmatprep.subr.mxu0 0.0
  %2256 = vmatpush1.msra.mxu0 0.0
  %2257 = vmatprep.subr.mxu0 0.0
  %2258 = vmatpush1.msra.mxu0 0.0
  %2259 = vmatprep.subr.mxu0 0.0
  %2260 = vmatpush1.msra.mxu0 0.0
  %2261 = vmatprep.subr.mxu0 0.0
  %2262 = vmatpush1.msra.mxu0 0.0
  %2263 = vmatprep.subr.mxu0 0.0
  %2264 = vmatpush1.msra.mxu0 0.0
  %2265 = vmatprep.subr.mxu0 0.0
  %2266 = vmatpush1.msra.mxu0 0.0
  %2267 = vmatprep.subr.mxu0 0.0
  %2268 = vmatpush1.msra.mxu0 0.0
  %2269 = vmatprep.subr.mxu0 0.0
  %2270 = vmatpush1.msra.mxu0 0.0
  %2271 = vmatprep.subr.mxu0 0.0
  %2272 = vmatpush1.msra.mxu0 0.0
  %2273 = vmatprep.subr.mxu0 0.0
  %2274 = vmatpush1.msra.mxu0 0.0
  %2275 = vmatprep.subr.mxu0 0.0
  %2276 = vmatpush1.msra.mxu0 0.0
  %2277 = vmatprep.subr.mxu0 0.0
  %2278 = vmatpush1.msra.mxu0 0.0
  %2279 = vmatprep.subr.mxu0 0.0
  %2280 = vmatpush1.msra.mxu0 0.0
  %2281 = vmatprep.subr.mxu0 0.0
  %2282 = vmatpush1.msra.mxu0 0.0
  %2283 = vmatprep.subr.mxu0 0.0
  %2284 = vmatpush1.msra.mxu0 %v2080
  %2285 = vmatprep.subr.mxu0 0.0
  %2286 = vmatpush2.msra.mxu0 0.0
  %2287 = vmatprep.subr.mxu0 0.0
  %2288 = vmatpush2.msra.mxu0 0.0
  %2289 = vmatprep.subr.mxu0 0.0
  %2290 = vmatpush2.msra.mxu0 0.0
  %2291 = vmatprep.subr.mxu0 0.0
  %2292 = vmatpush2.msra.mxu0 0.0
  %2293 = vmatprep.subr.mxu0 0.0
  %2294 = vmatpush2.msra.mxu0 0.0
  %2295 = vmatprep.subr.mxu0 0.0
  %2296 = vmatpush2.msra.mxu0 0.0
  %2297 = vmatprep.subr.mxu0 0.0
  %2298 = vmatpush2.msra.mxu0 0.0
  %2299 = vmatprep.subr.mxu0 0.0
  %2300 = vmatpush2.msra.mxu0 0.0
  %2301 = vmatprep.subr.mxu0 0.0
  %2302 = vmatpush2.msra.mxu0 0.0
  %2303 = vmatprep.subr.mxu0 0.0
  %2304 = vmatpush2.msra.mxu0 0.0
  %2305 = vmatprep.subr.mxu0 0.0
  %2306 = vmatpush2.msra.mxu0 0.0
  %2307 = vmatprep.subr.mxu0 0.0
  %2308 = vmatpush2.msra.mxu0 0.0
  %2309 = vmatprep.subr.mxu0 0.0
  %2310 = vmatpush2.msra.mxu0 0.0
  %2311 = vmatprep.subr.mxu0 0.0
  %2312 = vmatpush2.msra.mxu0 0.0
  %2313 = vmatprep.subr.mxu0 0.0
  %2314 = vmatpush2.msra.mxu0 0.0
  %2315 = vmatprep.subr.mxu0 0.0
  %2316 = vmatpush2.msra.mxu0 0.0
  %2317 = vmatprep.mubr.f32.mxu0 0.0
  %2318 = vmatmul.mubr.f32.gmra.mxu0 %v2242
  %v2319 = vpop.f32.mrf.mxu0
  %v2320 = vadd.f32 0.0, %v2319
  %v2321 = vpop.f32.mrf.mxu0
  %2322 = vmatprep.mubr.f32.mxu0 0.0
  %2323 = vmatmul.mubr.f32.gmra.mxu0 %v2245
  %v2324 = vpop.f32.mrf.mxu0
  %v2325 = vadd.f32 0.0, %v2324
  %v2326 = vpop.f32.mrf.mxu0
  %2327 = vmatprep.mubr.f32.mxu0 0.0
  %2328 = vmatmul.mubr.f32.gmra.mxu0 %v2248
  %v2329 = vpop.f32.mrf.mxu0
  %v2330 = vadd.f32 0.0, %v2329
  %v2331 = vpop.f32.mrf.mxu0
  %2332 = vmatprep.mubr.f32.mxu0 0.0
  %2333 = vmatmul.mubr.f32.gmra.mxu0 %v2251
  %v2334 = vpop.f32.mrf.mxu0
  %v2335 = vadd.f32 0.0, %v2334
  %v2336 = vpop.f32.mrf.mxu0
  %2337 = vdwg.mxu0
  %v2338 = vsel %vm129, %v2208, 0.0
  %v2339 = vrot.slane %v2338, 4
  %v2340 = vadd.f32 %v2338, %v2339
  %v2341 = vrot.slane %v2340, 2
  %v2342 = vadd.f32 %v2340, %v2341
  %v2343 = vrot.slane %v2342, 1
  %v2344 = vadd.f32 %v2342, %v2343
  %vm2345 = vcmp.gt.f32.partialorder %v2080, 0.0
  %v2347 = vsel %vm129, %v2208, 0
  %2349 = vmatprep.subr.mxu0 0.0
  %2350 = vmatpush1.msra.mxu0 0.0
  %2351 = vmatprep.subr.mxu0 0.0
  %2352 = vmatpush1.msra.mxu0 0.0
  %2353 = vmatprep.subr.mxu0 0.0
  %2354 = vmatpush1.msra.mxu0 0.0
  %2355 = vmatprep.subr.mxu0 0.0
  %2356 = vmatpush1.msra.mxu0 0.0
  %2357 = vmatprep.subr.mxu0 0.0
  %2358 = vmatpush1.msra.mxu0 0.0
  %2359 = vmatprep.subr.mxu0 0.0
  %2360 = vmatpush1.msra.mxu0 0.0
  %2361 = vmatprep.subr.mxu0 0.0
  %2362 = vmatpush1.msra.mxu0 0.0
  %2363 = vmatprep.subr.mxu0 0.0
  %2364 = vmatpush1.msra.mxu0 0.0
  %2365 = vmatprep.subr.mxu0 0.0
  %2366 = vmatpush1.msra.mxu0 0.0
  %2367 = vmatprep.subr.mxu0 0.0
  %2368 = vmatpush1.msra.mxu0 0.0
  %2369 = vmatprep.subr.mxu0 0.0
  %2370 = vmatpush1.msra.mxu0 0.0
  %2371 = vmatprep.subr.mxu0 0.0
  %2372 = vmatpush1.msra.mxu0 0.0
  %2373 = vmatprep.subr.mxu0 0.0
  %2374 = vmatpush1.msra.mxu0 %v1979
  %2375 = vmatprep.subr.mxu0 0.0
  %2376 = vmatpush1.msra.mxu0 %v1978
  %2377 = vmatprep.subr.mxu0 0.0
  %2378 = vmatpush1.msra.mxu0 %v1977
  %2379 = vmatprep.subr.mxu0 0.0
  %2380 = vmatpush1.msra.mxu0 %v1976
  %2381 = vmatprep.subr.mxu0 0.0
  %2382 = vmatpush2.msra.mxu0 0.0
  %2383 = vmatprep.subr.mxu0 0.0
  %2384 = vmatpush2.msra.mxu0 0.0
  %2385 = vmatprep.subr.mxu0 0.0
  %2386 = vmatpush2.msra.mxu0 0.0
  %2387 = vmatprep.subr.mxu0 0.0
  %2388 = vmatpush2.msra.mxu0 0.0
  %2389 = vmatprep.subr.mxu0 0.0
  %2390 = vmatpush2.msra.mxu0 0.0
  %2391 = vmatprep.subr.mxu0 0.0
  %2392 = vmatpush2.msra.mxu0 0.0
  %2393 = vmatprep.subr.mxu0 0.0
  %2394 = vmatpush2.msra.mxu0 0.0
  %2395 = vmatprep.subr.mxu0 0.0
  %2396 = vmatpush2.msra.mxu0 0.0
  %2397 = vmatprep.subr.mxu0 0.0
  %2398 = vmatpush2.msra.mxu0 0.0
  %2399 = vmatprep.subr.mxu0 0.0
  %2400 = vmatpush2.msra.mxu0 0.0
  %2401 = vmatprep.subr.mxu0 0.0
  %2402 = vmatpush2.msra.mxu0 0.0
  %2403 = vmatprep.subr.mxu0 0.0
  %2404 = vmatpush2.msra.mxu0 0.0
  %2405 = vmatprep.subr.mxu0 0.0
  %2406 = vmatpush2.msra.mxu0 0.0
  %2407 = vmatprep.subr.mxu0 0.0
  %2408 = vmatpush2.msra.mxu0 0.0
  %2409 = vmatprep.subr.mxu0 0.0
  %2410 = vmatpush2.msra.mxu0 0.0
  %2411 = vmatprep.subr.mxu0 0.0
  %2412 = vmatpush2.msra.mxu0 0.0
  %2413 = vmatprep.mubr.f32.mxu0 0.0
  %2414 = vmatmul.mubr.f32.gmra.mxu0 %v2347
  %v2415 = vpop.f32.mrf.mxu0
  %v2416 = vadd.f32 0.0, %v2415
  %v2417 = vpop.f32.mrf.mxu0
  %2418 = vdwg.mxu0
  %v2419 = vsel %vm2345, %v2416, 0.0
  %2420 = vxpose.xlu0.b32.start [1/16] %v2419, 128
  %2421 = vxpose.xlu0.b32.cont [2/16] 0.0, 128
  %2422 = vxpose.xlu0.b32.cont [3/16] 0.0, 128
  %2423 = vxpose.xlu0.b32.cont [4/16] 0.0, 128
  %2424 = vxpose.xlu0.b32.cont [5/16] 0.0, 128
  %2425 = vxpose.xlu0.b32.cont [6/16] 0.0, 128
  %2426 = vxpose.xlu0.b32.cont [7/16] 0.0, 128
  %2427 = vxpose.xlu0.b32.cont [8/16] 0.0, 128
  %2428 = vxpose.xlu0.b32.cont [9/16] 0.0, 128
  %2429 = vxpose.xlu0.b32.cont [10/16] 0.0, 128
  %2430 = vxpose.xlu0.b32.cont [11/16] 0.0, 128
  %2431 = vxpose.xlu0.b32.cont [12/16] 0.0, 128
  %2432 = vxpose.xlu0.b32.cont [13/16] 0.0, 128
  %2433 = vxpose.xlu0.b32.cont [14/16] 0.0, 128
  %2434 = vxpose.xlu0.b32.cont [15/16] 0.0, 128
  %2435 = vxpose.xlu0.b32.end [16/16] 0.0, 128
  %v2436 = vpop.trf.xlu0
  %v2437 = vpop.trf.xlu0
  %v2438 = vpop.trf.xlu0
  %v2439 = vpop.trf.xlu0
  %v2440 = vpop.trf.xlu0
  %v2441 = vpop.trf.xlu0
  %v2442 = vpop.trf.xlu0
  %v2443 = vpop.trf.xlu0
  %v2444 = vpop.trf.xlu0
  %v2445 = vpop.trf.xlu0
  %v2446 = vpop.trf.xlu0
  %v2447 = vpop.trf.xlu0
  %v2448 = vpop.trf.xlu0
  %v2449 = vpop.trf.xlu0
  %v2450 = vpop.trf.xlu0
  %v2451 = vpop.trf.xlu0
  %v2453 = vsel %vm274, %v2436, 0
  %v2456 = vsel %vm274, %v2437, 0
  %v2459 = vsel %vm274, %v2438, 0
  %v2462 = vsel %vm274, %v2439, 0
  %2464 = vmatprep.subr.mxu0 0.0
  %2465 = vmatpush1.msra.mxu0 0.0
  %2466 = vmatprep.subr.mxu0 0.0
  %2467 = vmatpush1.msra.mxu0 0.0
  %2468 = vmatprep.subr.mxu0 0.0
  %2469 = vmatpush1.msra.mxu0 0.0
  %2470 = vmatprep.subr.mxu0 0.0
  %2471 = vmatpush1.msra.mxu0 0.0
  %2472 = vmatprep.subr.mxu0 0.0
  %2473 = vmatpush1.msra.mxu0 0.0
  %2474 = vmatprep.subr.mxu0 0.0
  %2475 = vmatpush1.msra.mxu0 0.0
  %2476 = vmatprep.subr.mxu0 0.0
  %2477 = vmatpush1.msra.mxu0 0.0
  %2478 = vmatprep.subr.mxu0 0.0
  %2479 = vmatpush1.msra.mxu0 0.0
  %2480 = vmatprep.subr.mxu0 0.0
  %2481 = vmatpush1.msra.mxu0 0.0
  %2482 = vmatprep.subr.mxu0 0.0
  %2483 = vmatpush1.msra.mxu0 0.0
  %2484 = vmatprep.subr.mxu0 0.0
  %2485 = vmatpush1.msra.mxu0 0.0
  %2486 = vmatprep.subr.mxu0 0.0
  %2487 = vmatpush1.msra.mxu0 0.0
  %2488 = vmatprep.subr.mxu0 0.0
  %2489 = vmatpush1.msra.mxu0 0.0
  %2490 = vmatprep.subr.mxu0 0.0
  %2491 = vmatpush1.msra.mxu0 0.0
  %2492 = vmatprep.subr.mxu0 0.0
  %2493 = vmatpush1.msra.mxu0 0.0
  %2494 = vmatprep.subr.mxu0 0.0
  %2495 = vmatpush1.msra.mxu0 %v17
  %2496 = vmatprep.subr.mxu0 0.0
  %2497 = vmatpush2.msra.mxu0 0.0
  %2498 = vmatprep.subr.mxu0 0.0
  %2499 = vmatpush2.msra.mxu0 0.0
  %2500 = vmatprep.subr.mxu0 0.0
  %2501 = vmatpush2.msra.mxu0 0.0
  %2502 = vmatprep.subr.mxu0 0.0
  %2503 = vmatpush2.msra.mxu0 0.0
  %2504 = vmatprep.subr.mxu0 0.0
  %2505 = vmatpush2.msra.mxu0 0.0
  %2506 = vmatprep.subr.mxu0 0.0
  %2507 = vmatpush2.msra.mxu0 0.0
  %2508 = vmatprep.subr.mxu0 0.0
  %2509 = vmatpush2.msra.mxu0 0.0
  %2510 = vmatprep.subr.mxu0 0.0
  %2511 = vmatpush2.msra.mxu0 0.0
  %2512 = vmatprep.subr.mxu0 0.0
  %2513 = vmatpush2.msra.mxu0 0.0
  %2514 = vmatprep.subr.mxu0 0.0
  %2515 = vmatpush2.msra.mxu0 0.0
  %2516 = vmatprep.subr.mxu0 0.0
  %2517 = vmatpush2.msra.mxu0 0.0
  %2518 = vmatprep.subr.mxu0 0.0
  %2519 = vmatpush2.msra.mxu0 0.0
  %2520 = vmatprep.subr.mxu0 0.0
  %2521 = vmatpush2.msra.mxu0 0.0
  %2522 = vmatprep.subr.mxu0 0.0
  %2523 = vmatpush2.msra.mxu0 0.0
  %2524 = vmatprep.subr.mxu0 0.0
  %2525 = vmatpush2.msra.mxu0 0.0
  %2526 = vmatprep.subr.mxu0 0.0
  %2527 = vmatpush2.msra.mxu0 0.0
  %2528 = vmatprep.mubr.f32.mxu0 0.0
  %2529 = vmatmul.mubr.f32.gmra.mxu0 %v2453
  %v2530 = vpop.f32.mrf.mxu0
  %v2531 = vadd.f32 0.0, %v2530
  %v2532 = vpop.f32.mrf.mxu0
  %2533 = vmatprep.mubr.f32.mxu0 0.0
  %2534 = vmatmul.mubr.f32.gmra.mxu0 %v2456
  %v2535 = vpop.f32.mrf.mxu0
  %v2536 = vadd.f32 0.0, %v2535
  %v2537 = vpop.f32.mrf.mxu0
  %2538 = vmatprep.mubr.f32.mxu0 0.0
  %2539 = vmatmul.mubr.f32.gmra.mxu0 %v2459
  %v2540 = vpop.f32.mrf.mxu0
  %v2541 = vadd.f32 0.0, %v2540
  %v2542 = vpop.f32.mrf.mxu0
  %2543 = vmatprep.mubr.f32.mxu0 0.0
  %2544 = vmatmul.mubr.f32.gmra.mxu0 %v2462
  %v2545 = vpop.f32.mrf.mxu0
  %v2546 = vadd.f32 0.0, %v2545
  %v2547 = vpop.f32.mrf.mxu0
  %2548 = vdwg.mxu0
  %v2549 = vsel %vm129, %v2419, 0.0
  %v2550 = vrot.slane %v2549, 4
  %v2551 = vadd.f32 %v2549, %v2550
  %v2552 = vrot.slane %v2551, 2
  %v2553 = vadd.f32 %v2551, %v2552
  %v2554 = vrot.slane %v2553, 1
  %v2555 = vadd.f32 %v2553, %v2554
  %v2556 = vadd.f32 %v1944, %v2198
  %v2557 = vadd.f32 %v1945, %v2205
  %v2558 = vmul.f32 %v2531, 0.01
  %v2559 = vmul.f32 %v2536, 0.01
  %v2560 = vmul.f32 %v2541, 0.01
  %v2561 = vmul.f32 %v2546, 0.01
  %2566 = vrot.lane.b32.xlu0 %v2558, 32
  %v2567 = vpop.permute.xlu0 %2566
  %2568 = vrot.lane.b32.xlu0 %v2559, 32
  %v2569 = vpop.permute.xlu0 %2568
  %2570 = vrot.lane.b32.xlu0 %v2560, 32
  %v2571 = vpop.permute.xlu0 %2570
  %2572 = vrot.lane.b32.xlu0 %v2561, 32
  %v2573 = vpop.permute.xlu0 %2572
  %v2578 = vsub.f32 %v1966, %v2567
  %v2579 = vsub.f32 %v1967, %v2569
  %v2580 = vsub.f32 %v1968, %v2571
  %v2581 = vsub.f32 %v1969, %v2573
  %v2582 = vmul.f32 %v2555, 0.01
  %v2583 = vsub.f32 %v1971, %v2582
  %v2584 = vmul.f32 %v2320, 0.01
  %v2585 = vmul.f32 %v2325, 0.01
  %v2586 = vmul.f32 %v2330, 0.01
  %v2587 = vmul.f32 %v2335, 0.01
  %v2588 = vsub.f32 %v1976, %v2584
  %v2589 = vsub.f32 %v1977, %v2585
  %v2590 = vsub.f32 %v1978, %v2586
  %v2591 = vsub.f32 %v1979, %v2587
  %v2592 = vmul.f32 %v2344, 0.01
  %v2593 = vsub.f32 %v1981, %v2592
  %v2594 = vmul.f32 %v2198, 0.01
  %v2595 = vsub.f32 %v1983, %v2594
  %v2596 = vmul.f32 %v2205, 0.01
  %v2597 = vsub.f32 %v1985, %v2596
  %v2598 = vlaneseq
  %v2599 = vshrl.u32 %v2598, 7
  %v2600 = vsub.s32 0, %v2599
  %v2601 = vrot.slane %v2583, %v2600
  %2606 = vrot.lane.b32.xlu0 %v2578, 96
  %v2607 = vpop.permute.xlu0 %2606
  %2608 = vrot.lane.b32.xlu0 %v2579, 96
  %v2609 = vpop.permute.xlu0 %2608
  %2610 = vrot.lane.b32.xlu0 %v2580, 96
  %v2611 = vpop.permute.xlu0 %2610
  %2612 = vrot.lane.b32.xlu0 %v2581, 96
  %v2613 = vpop.permute.xlu0 %2612
  %v2614 = vsel %vm42, %v2607, 0
  %v2616 = vsel %vm42, %v2609, 0
  %v2618 = vsel %vm42, %v2611, 0
  %v2620 = vsel %vm42, %v2613, 0
  %2622 = vmatprep.subr.mxu0 0.0
  %2623 = vmatpush1.xpose.msra.mxu0 0.0
  %2624 = vmatprep.subr.mxu0 0.0
  %2625 = vmatpush1.xpose.msra.mxu0 0.0
  %2626 = vmatprep.subr.mxu0 0.0
  %2627 = vmatpush1.xpose.msra.mxu0 0.0
  %2628 = vmatprep.subr.mxu0 0.0
  %2629 = vmatpush1.xpose.msra.mxu0 0.0
  %2630 = vmatprep.subr.mxu0 0.0
  %2631 = vmatpush1.xpose.msra.mxu0 0.0
  %2632 = vmatprep.subr.mxu0 0.0
  %2633 = vmatpush1.xpose.msra.mxu0 0.0
  %2634 = vmatprep.subr.mxu0 0.0
  %2635 = vmatpush1.xpose.msra.mxu0 0.0
  %2636 = vmatprep.subr.mxu0 0.0
  %2637 = vmatpush1.xpose.msra.mxu0 0.0
  %2638 = vmatprep.subr.mxu0 0.0
  %2639 = vmatpush1.xpose.msra.mxu0 0.0
  %2640 = vmatprep.subr.mxu0 0.0
  %2641 = vmatpush1.xpose.msra.mxu0 0.0
  %2642 = vmatprep.subr.mxu0 0.0
  %2643 = vmatpush1.xpose.msra.mxu0 0.0
  %2644 = vmatprep.subr.mxu0 0.0
  %2645 = vmatpush1.xpose.msra.mxu0 0.0
  %2646 = vmatprep.subr.mxu0 0.0
  %2647 = vmatpush1.xpose.msra.mxu0 %v2620
  %2648 = vmatprep.subr.mxu0 0.0
  %2649 = vmatpush1.xpose.msra.mxu0 %v2618
  %2650 = vmatprep.subr.mxu0 0.0
  %2651 = vmatpush1.xpose.msra.mxu0 %v2616
  %2652 = vmatprep.subr.mxu0 0.0
  %2653 = vmatpush1.xpose.msra.mxu0 %v2614
  %2654 = vmatprep.subr.mxu0 0.0
  %2655 = vmatpush2.xpose.msra.mxu0 0.0
  %2656 = vmatprep.subr.mxu0 0.0
  %2657 = vmatpush2.xpose.msra.mxu0 0.0
  %2658 = vmatprep.subr.mxu0 0.0
  %2659 = vmatpush2.xpose.msra.mxu0 0.0
  %2660 = vmatprep.subr.mxu0 0.0
  %2661 = vmatpush2.xpose.msra.mxu0 0.0
  %2662 = vmatprep.subr.mxu0 0.0
  %2663 = vmatpush2.xpose.msra.mxu0 0.0
  %2664 = vmatprep.subr.mxu0 0.0
  %2665 = vmatpush2.xpose.msra.mxu0 0.0
  %2666 = vmatprep.subr.mxu0 0.0
  %2667 = vmatpush2.xpose.msra.mxu0 0.0
  %2668 = vmatprep.subr.mxu0 0.0
  %2669 = vmatpush2.xpose.msra.mxu0 0.0
  %2670 = vmatprep.subr.mxu0 0.0
  %2671 = vmatpush2.xpose.msra.mxu0 0.0
  %2672 = vmatprep.subr.mxu0 0.0
  %2673 = vmatpush2.xpose.msra.mxu0 0.0
  %2674 = vmatprep.subr.mxu0 0.0
  %2675 = vmatpush2.xpose.msra.mxu0 0.0
  %2676 = vmatprep.subr.mxu0 0.0
  %2677 = vmatpush2.xpose.msra.mxu0 0.0
  %2678 = vmatprep.subr.mxu0 0.0
  %2679 = vmatpush2.xpose.msra.mxu0 0.0
  %2680 = vmatprep.subr.mxu0 0.0
  %2681 = vmatpush2.xpose.msra.mxu0 0.0
  %2682 = vmatprep.subr.mxu0 0.0
  %2683 = vmatpush2.xpose.msra.mxu0 0.0
  %2684 = vmatprep.subr.mxu0 0.0
  %2685 = vmatpush2.xpose.msra.mxu0 0.0
  %2686 = vmatprep.mubr.f32.mxu0 0.0
  %2687 = vmatmul.mubr.f32.gmra.mxu0 %v44
  %v2688 = vpop.f32.mrf.mxu0
  %v2689 = vadd.f32 %v2601, %v2688
  %v2690 = vpop.f32.mrf.mxu0
  %2691 = vdwg.mxu0
  %v2692 = vmax.f32 %v2689, 0.0
  %v2693 = vlaneseq
  %v2694 = vshrl.u32 %v2693, 7
  %v2695 = vsub.s32 0, %v2694
  %v2696 = vrot.slane %v2593, %v2695
  %v2698 = vsel %vm129, %v2692, 0
  %v2701 = vsel %vm129, %v2588, 0
  %v2704 = vsel %vm129, %v2589, 0
  %v2707 = vsel %vm129, %v2590, 0
  %v2710 = vsel %vm129, %v2591, 0
  %2712 = vmatprep.subr.mxu0 0.0
  %2713 = vmatpush1.xpose.msra.mxu0 0.0
  %2714 = vmatprep.subr.mxu0 0.0
  %2715 = vmatpush1.xpose.msra.mxu0 0.0
  %2716 = vmatprep.subr.mxu0 0.0
  %2717 = vmatpush1.xpose.msra.mxu0 0.0
  %2718 = vmatprep.subr.mxu0 0.0
  %2719 = vmatpush1.xpose.msra.mxu0 0.0
  %2720 = vmatprep.subr.mxu0 0.0
  %2721 = vmatpush1.xpose.msra.mxu0 0.0
  %2722 = vmatprep.subr.mxu0 0.0
  %2723 = vmatpush1.xpose.msra.mxu0 0.0
  %2724 = vmatprep.subr.mxu0 0.0
  %2725 = vmatpush1.xpose.msra.mxu0 0.0
  %2726 = vmatprep.subr.mxu0 0.0
  %2727 = vmatpush1.xpose.msra.mxu0 0.0
  %2728 = vmatprep.subr.mxu0 0.0
  %2729 = vmatpush1.xpose.msra.mxu0 0.0
  %2730 = vmatprep.subr.mxu0 0.0
  %2731 = vmatpush1.xpose.msra.mxu0 0.0
  %2732 = vmatprep.subr.mxu0 0.0
  %2733 = vmatpush1.xpose.msra.mxu0 0.0
  %2734 = vmatprep.subr.mxu0 0.0
  %2735 = vmatpush1.xpose.msra.mxu0 0.0
  %2736 = vmatprep.subr.mxu0 0.0
  %2737 = vmatpush1.xpose.msra.mxu0 %v2710
  %2738 = vmatprep.subr.mxu0 0.0
  %2739 = vmatpush1.xpose.msra.mxu0 %v2707
  %2740 = vmatprep.subr.mxu0 0.0
  %2741 = vmatpush1.xpose.msra.mxu0 %v2704
  %2742 = vmatprep.subr.mxu0 0.0
  %2743 = vmatpush1.xpose.msra.mxu0 %v2701
  %2744 = vmatprep.subr.mxu0 0.0
  %2745 = vmatpush2.xpose.msra.mxu0 0.0
  %2746 = vmatprep.subr.mxu0 0.0
  %2747 = vmatpush2.xpose.msra.mxu0 0.0
  %2748 = vmatprep.subr.mxu0 0.0
  %2749 = vmatpush2.xpose.msra.mxu0 0.0
  %2750 = vmatprep.subr.mxu0 0.0
  %2751 = vmatpush2.xpose.msra.mxu0 0.0
  %2752 = vmatprep.subr.mxu0 0.0
  %2753 = vmatpush2.xpose.msra.mxu0 0.0
  %2754 = vmatprep.subr.mxu0 0.0
  %2755 = vmatpush2.xpose.msra.mxu0 0.0
  %2756 = vmatprep.subr.mxu0 0.0
  %2757 = vmatpush2.xpose.msra.mxu0 0.0
  %2758 = vmatprep.subr.mxu0 0.0
  %2759 = vmatpush2.xpose.msra.mxu0 0.0
  %2760 = vmatprep.subr.mxu0 0.0
  %2761 = vmatpush2.xpose.msra.mxu0 0.0
  %2762 = vmatprep.subr.mxu0 0.0
  %2763 = vmatpush2.xpose.msra.mxu0 0.0
  %2764 = vmatprep.subr.mxu0 0.0
  %2765 = vmatpush2.xpose.msra.mxu0 0.0
  %2766 = vmatprep.subr.mxu0 0.0
  %2767 = vmatpush2.xpose.msra.mxu0 0.0
  %2768 = vmatprep.subr.mxu0 0.0
  %2769 = vmatpush2.xpose.msra.mxu0 0.0
  %2770 = vmatprep.subr.mxu0 0.0
  %2771 = vmatpush2.xpose.msra.mxu0 0.0
  %2772 = vmatprep.subr.mxu0 0.0
  %2773 = vmatpush2.xpose.msra.mxu0 0.0
  %2774 = vmatprep.subr.mxu0 0.0
  %2775 = vmatpush2.xpose.msra.mxu0 0.0
  %2776 = vmatprep.mubr.f32.mxu0 0.0
  %2777 = vmatmul.mubr.f32.gmra.mxu0 %v2698
  %v2778 = vpop.f32.mrf.mxu0
  %v2779 = vadd.f32 %v2696, %v2778
  %v2780 = vpop.f32.mrf.mxu0
  %2781 = vdwg.mxu0
  %v2782 = vmax.f32 %v2779, 0.0
  %v2783 = vlaneseq
  %v2784 = vshrl.u32 %v2783, 7
  %v2785 = vsub.s32 1, %v2784
  %v2786 = vrot.slane %v2595, %v2785
  %v2787 = vmul.f32 %v2782, %v2786
  %v2788 = vsel %vm129, %v2787, 0.0
  %2789 = vadd.xlane.f32.xlu0 %v2788
  %v2790 = vpop.xlane.xlu0 %2789
  %v2791 = vlaneseq
  %v2792 = vshrl.u32 %v2791, 7
  %v2793 = vsub.s32 1, %v2792
  %v2794 = vrot.slane %v2597, %v2793
  %v2795 = vadd.f32 %v2790, %v2794
  %v2796 = vsub.f32 %v2795, %v1569
  %v2797 = vmul.f32 %v2796, 0.25
  %2799 = vset.pattern.permute.xlu0 32
  %2800 = vperm.xlu0 %2799, %v2797
  %v2801 = vpop.permute.xlu0 %2800
  %v2803 = vmul.f32 %v2801, %v2782
  %v2804 = vsel %vm129, %v2803, 0.0
  %v2805 = vrot.slane %v2804, 4
  %v2806 = vadd.f32 %v2804, %v2805
  %v2807 = vrot.slane %v2806, 2
  %v2808 = vadd.f32 %v2806, %v2807
  %v2809 = vrot.slane %v2808, 1
  %v2810 = vadd.f32 %v2808, %v2809
  %v2811 = vsel %vm1586, %v2797, 0.0
  %v2812 = vrot.slane %v2811, 4
  %v2813 = vadd.f32 %v2811, %v2812
  %v2814 = vrot.slane %v2813, 2
  %v2815 = vadd.f32 %v2813, %v2814
  %v2816 = vrot.slane %v2815, 1
  %v2817 = vadd.f32 %v2815, %v2816
  %vm2818 = vcmp.gt.f32.partialorder %v2782, 0.0
  %v2819 = vmul.f32 %v2801, %v2786
  %v2820 = vsel %vm2818, %v2819, 0.0
  %2821 = vxpose.xlu0.b32.start [1/16] %v2820, 128
  %2822 = vxpose.xlu0.b32.cont [2/16] 0.0, 128
  %2823 = vxpose.xlu0.b32.cont [3/16] 0.0, 128
  %2824 = vxpose.xlu0.b32.cont [4/16] 0.0, 128
  %2825 = vxpose.xlu0.b32.cont [5/16] 0.0, 128
  %2826 = vxpose.xlu0.b32.cont [6/16] 0.0, 128
  %2827 = vxpose.xlu0.b32.cont [7/16] 0.0, 128
  %2828 = vxpose.xlu0.b32.cont [8/16] 0.0, 128
  %2829 = vxpose.xlu0.b32.cont [9/16] 0.0, 128
  %2830 = vxpose.xlu0.b32.cont [10/16] 0.0, 128
  %2831 = vxpose.xlu0.b32.cont [11/16] 0.0, 128
  %2832 = vxpose.xlu0.b32.cont [12/16] 0.0, 128
  %2833 = vxpose.xlu0.b32.cont [13/16] 0.0, 128
  %2834 = vxpose.xlu0.b32.cont [14/16] 0.0, 128
  %2835 = vxpose.xlu0.b32.cont [15/16] 0.0, 128
  %2836 = vxpose.xlu0.b32.end [16/16] 0.0, 128
  %v2837 = vpop.trf.xlu0
  %v2838 = vpop.trf.xlu0
  %v2839 = vpop.trf.xlu0
  %v2840 = vpop.trf.xlu0
  %v2841 = vpop.trf.xlu0
  %v2842 = vpop.trf.xlu0
  %v2843 = vpop.trf.xlu0
  %v2844 = vpop.trf.xlu0
  %v2845 = vpop.trf.xlu0
  %v2846 = vpop.trf.xlu0
  %v2847 = vpop.trf.xlu0
  %v2848 = vpop.trf.xlu0
  %v2849 = vpop.trf.xlu0
  %v2850 = vpop.trf.xlu0
  %v2851 = vpop.trf.xlu0
  %v2852 = vpop.trf.xlu0
  %v2854 = vsel %vm274, %v2837, 0
  %v2857 = vsel %vm274, %v2838, 0
  %v2860 = vsel %vm274, %v2839, 0
  %v2863 = vsel %vm274, %v2840, 0
  %2865 = vmatprep.subr.mxu0 0.0
  %2866 = vmatpush1.msra.mxu0 0.0
  %2867 = vmatprep.subr.mxu0 0.0
  %2868 = vmatpush1.msra.mxu0 0.0
  %2869 = vmatprep.subr.mxu0 0.0
  %2870 = vmatpush1.msra.mxu0 0.0
  %2871 = vmatprep.subr.mxu0 0.0
  %2872 = vmatpush1.msra.mxu0 0.0
  %2873 = vmatprep.subr.mxu0 0.0
  %2874 = vmatpush1.msra.mxu0 0.0
  %2875 = vmatprep.subr.mxu0 0.0
  %2876 = vmatpush1.msra.mxu0 0.0
  %2877 = vmatprep.subr.mxu0 0.0
  %2878 = vmatpush1.msra.mxu0 0.0
  %2879 = vmatprep.subr.mxu0 0.0
  %2880 = vmatpush1.msra.mxu0 0.0
  %2881 = vmatprep.subr.mxu0 0.0
  %2882 = vmatpush1.msra.mxu0 0.0
  %2883 = vmatprep.subr.mxu0 0.0
  %2884 = vmatpush1.msra.mxu0 0.0
  %2885 = vmatprep.subr.mxu0 0.0
  %2886 = vmatpush1.msra.mxu0 0.0
  %2887 = vmatprep.subr.mxu0 0.0
  %2888 = vmatpush1.msra.mxu0 0.0
  %2889 = vmatprep.subr.mxu0 0.0
  %2890 = vmatpush1.msra.mxu0 0.0
  %2891 = vmatprep.subr.mxu0 0.0
  %2892 = vmatpush1.msra.mxu0 0.0
  %2893 = vmatprep.subr.mxu0 0.0
  %2894 = vmatpush1.msra.mxu0 0.0
  %2895 = vmatprep.subr.mxu0 0.0
  %2896 = vmatpush1.msra.mxu0 %v2692
  %2897 = vmatprep.subr.mxu0 0.0
  %2898 = vmatpush2.msra.mxu0 0.0
  %2899 = vmatprep.subr.mxu0 0.0
  %2900 = vmatpush2.msra.mxu0 0.0
  %2901 = vmatprep.subr.mxu0 0.0
  %2902 = vmatpush2.msra.mxu0 0.0
  %2903 = vmatprep.subr.mxu0 0.0
  %2904 = vmatpush2.msra.mxu0 0.0
  %2905 = vmatprep.subr.mxu0 0.0
  %2906 = vmatpush2.msra.mxu0 0.0
  %2907 = vmatprep.subr.mxu0 0.0
  %2908 = vmatpush2.msra.mxu0 0.0
  %2909 = vmatprep.subr.mxu0 0.0
  %2910 = vmatpush2.msra.mxu0 0.0
  %2911 = vmatprep.subr.mxu0 0.0
  %2912 = vmatpush2.msra.mxu0 0.0
  %2913 = vmatprep.subr.mxu0 0.0
  %2914 = vmatpush2.msra.mxu0 0.0
  %2915 = vmatprep.subr.mxu0 0.0
  %2916 = vmatpush2.msra.mxu0 0.0
  %2917 = vmatprep.subr.mxu0 0.0
  %2918 = vmatpush2.msra.mxu0 0.0
  %2919 = vmatprep.subr.mxu0 0.0
  %2920 = vmatpush2.msra.mxu0 0.0
  %2921 = vmatprep.subr.mxu0 0.0
  %2922 = vmatpush2.msra.mxu0 0.0
  %2923 = vmatprep.subr.mxu0 0.0
  %2924 = vmatpush2.msra.mxu0 0.0
  %2925 = vmatprep.subr.mxu0 0.0
  %2926 = vmatpush2.msra.mxu0 0.0
  %2927 = vmatprep.subr.mxu0 0.0
  %2928 = vmatpush2.msra.mxu0 0.0
  %2929 = vmatprep.mubr.f32.mxu0 0.0
  %2930 = vmatmul.mubr.f32.gmra.mxu0 %v2854
  %v2931 = vpop.f32.mrf.mxu0
  %v2932 = vadd.f32 0.0, %v2931
  %v2933 = vpop.f32.mrf.mxu0
  %2934 = vmatprep.mubr.f32.mxu0 0.0
  %2935 = vmatmul.mubr.f32.gmra.mxu0 %v2857
  %v2936 = vpop.f32.mrf.mxu0
  %v2937 = vadd.f32 0.0, %v2936
  %v2938 = vpop.f32.mrf.mxu0
  %2939 = vmatprep.mubr.f32.mxu0 0.0
  %2940 = vmatmul.mubr.f32.gmra.mxu0 %v2860
  %v2941 = vpop.f32.mrf.mxu0
  %v2942 = vadd.f32 0.0, %v2941
  %v2943 = vpop.f32.mrf.mxu0
  %2944 = vmatprep.mubr.f32.mxu0 0.0
  %2945 = vmatmul.mubr.f32.gmra.mxu0 %v2863
  %v2946 = vpop.f32.mrf.mxu0
  %v2947 = vadd.f32 0.0, %v2946
  %v2948 = vpop.f32.mrf.mxu0
  %2949 = vdwg.mxu0
  %v2950 = vsel %vm129, %v2820, 0.0
  %v2951 = vrot.slane %v2950, 4
  %v2952 = vadd.f32 %v2950, %v2951
  %v2953 = vrot.slane %v2952, 2
  %v2954 = vadd.f32 %v2952, %v2953
  %v2955 = vrot.slane %v2954, 1
  %v2956 = vadd.f32 %v2954, %v2955
  %vm2957 = vcmp.gt.f32.partialorder %v2692, 0.0
  %v2959 = vsel %vm129, %v2820, 0
  %2961 = vmatprep.subr.mxu0 0.0
  %2962 = vmatpush1.msra.mxu0 0.0
  %2963 = vmatprep.subr.mxu0 0.0
  %2964 = vmatpush1.msra.mxu0 0.0
  %2965 = vmatprep.subr.mxu0 0.0
  %2966 = vmatpush1.msra.mxu0 0.0
  %2967 = vmatprep.subr.mxu0 0.0
  %2968 = vmatpush1.msra.mxu0 0.0
  %2969 = vmatprep.subr.mxu0 0.0
  %2970 = vmatpush1.msra.mxu0 0.0
  %2971 = vmatprep.subr.mxu0 0.0
  %2972 = vmatpush1.msra.mxu0 0.0
  %2973 = vmatprep.subr.mxu0 0.0
  %2974 = vmatpush1.msra.mxu0 0.0
  %2975 = vmatprep.subr.mxu0 0.0
  %2976 = vmatpush1.msra.mxu0 0.0
  %2977 = vmatprep.subr.mxu0 0.0
  %2978 = vmatpush1.msra.mxu0 0.0
  %2979 = vmatprep.subr.mxu0 0.0
  %2980 = vmatpush1.msra.mxu0 0.0
  %2981 = vmatprep.subr.mxu0 0.0
  %2982 = vmatpush1.msra.mxu0 0.0
  %2983 = vmatprep.subr.mxu0 0.0
  %2984 = vmatpush1.msra.mxu0 0.0
  %2985 = vmatprep.subr.mxu0 0.0
  %2986 = vmatpush1.msra.mxu0 %v2591
  %2987 = vmatprep.subr.mxu0 0.0
  %2988 = vmatpush1.msra.mxu0 %v2590
  %2989 = vmatprep.subr.mxu0 0.0
  %2990 = vmatpush1.msra.mxu0 %v2589
  %2991 = vmatprep.subr.mxu0 0.0
  %2992 = vmatpush1.msra.mxu0 %v2588
  %2993 = vmatprep.subr.mxu0 0.0
  %2994 = vmatpush2.msra.mxu0 0.0
  %2995 = vmatprep.subr.mxu0 0.0
  %2996 = vmatpush2.msra.mxu0 0.0
  %2997 = vmatprep.subr.mxu0 0.0
  %2998 = vmatpush2.msra.mxu0 0.0
  %2999 = vmatprep.subr.mxu0 0.0
  %3000 = vmatpush2.msra.mxu0 0.0
  %3001 = vmatprep.subr.mxu0 0.0
  %3002 = vmatpush2.msra.mxu0 0.0
  %3003 = vmatprep.subr.mxu0 0.0
  %3004 = vmatpush2.msra.mxu0 0.0
  %3005 = vmatprep.subr.mxu0 0.0
  %3006 = vmatpush2.msra.mxu0 0.0
  %3007 = vmatprep.subr.mxu0 0.0
  %3008 = vmatpush2.msra.mxu0 0.0
  %3009 = vmatprep.subr.mxu0 0.0
  %3010 = vmatpush2.msra.mxu0 0.0
  %3011 = vmatprep.subr.mxu0 0.0
  %3012 = vmatpush2.msra.mxu0 0.0
  %3013 = vmatprep.subr.mxu0 0.0
  %3014 = vmatpush2.msra.mxu0 0.0
  %3015 = vmatprep.subr.mxu0 0.0
  %3016 = vmatpush2.msra.mxu0 0.0
  %3017 = vmatprep.subr.mxu0 0.0
  %3018 = vmatpush2.msra.mxu0 0.0
  %3019 = vmatprep.subr.mxu0 0.0
  %3020 = vmatpush2.msra.mxu0 0.0
  %3021 = vmatprep.subr.mxu0 0.0
  %3022 = vmatpush2.msra.mxu0 0.0
  %3023 = vmatprep.subr.mxu0 0.0
  %3024 = vmatpush2.msra.mxu0 0.0
  %3025 = vmatprep.mubr.f32.mxu0 0.0
  %3026 = vmatmul.mubr.f32.gmra.mxu0 %v2959
  %v3027 = vpop.f32.mrf.mxu0
  %v3028 = vadd.f32 0.0, %v3027
  %v3029 = vpop.f32.mrf.mxu0
  %3030 = vdwg.mxu0
  %v3031 = vsel %vm2957, %v3028, 0.0
  %3032 = vxpose.xlu0.b32.start [1/16] %v3031, 128
  %3033 = vxpose.xlu0.b32.cont [2/16] 0.0, 128
  %3034 = vxpose.xlu0.b32.cont [3/16] 0.0, 128
  %3035 = vxpose.xlu0.b32.cont [4/16] 0.0, 128
  %3036 = vxpose.xlu0.b32.cont [5/16] 0.0, 128
  %3037 = vxpose.xlu0.b32.cont [6/16] 0.0, 128
  %3038 = vxpose.xlu0.b32.cont [7/16] 0.0, 128
  %3039 = vxpose.xlu0.b32.cont [8/16] 0.0, 128
  %3040 = vxpose.xlu0.b32.cont [9/16] 0.0, 128
  %3041 = vxpose.xlu0.b32.cont [10/16] 0.0, 128
  %3042 = vxpose.xlu0.b32.cont [11/16] 0.0, 128
  %3043 = vxpose.xlu0.b32.cont [12/16] 0.0, 128
  %3044 = vxpose.xlu0.b32.cont [13/16] 0.0, 128
  %3045 = vxpose.xlu0.b32.cont [14/16] 0.0, 128
  %3046 = vxpose.xlu0.b32.cont [15/16] 0.0, 128
  %3047 = vxpose.xlu0.b32.end [16/16] 0.0, 128
  %v3048 = vpop.trf.xlu0
  %v3049 = vpop.trf.xlu0
  %v3050 = vpop.trf.xlu0
  %v3051 = vpop.trf.xlu0
  %v3052 = vpop.trf.xlu0
  %v3053 = vpop.trf.xlu0
  %v3054 = vpop.trf.xlu0
  %v3055 = vpop.trf.xlu0
  %v3056 = vpop.trf.xlu0
  %v3057 = vpop.trf.xlu0
  %v3058 = vpop.trf.xlu0
  %v3059 = vpop.trf.xlu0
  %v3060 = vpop.trf.xlu0
  %v3061 = vpop.trf.xlu0
  %v3062 = vpop.trf.xlu0
  %v3063 = vpop.trf.xlu0
  %v3065 = vsel %vm274, %v3048, 0
  %v3068 = vsel %vm274, %v3049, 0
  %v3071 = vsel %vm274, %v3050, 0
  %v3074 = vsel %vm274, %v3051, 0
  %3076 = vmatprep.subr.mxu0 0.0
  %3077 = vmatpush1.msra.mxu0 0.0
  %3078 = vmatprep.subr.mxu0 0.0
  %3079 = vmatpush1.msra.mxu0 0.0
  %3080 = vmatprep.subr.mxu0 0.0
  %3081 = vmatpush1.msra.mxu0 0.0
  %3082 = vmatprep.subr.mxu0 0.0
  %3083 = vmatpush1.msra.mxu0 0.0
  %3084 = vmatprep.subr.mxu0 0.0
  %3085 = vmatpush1.msra.mxu0 0.0
  %3086 = vmatprep.subr.mxu0 0.0
  %3087 = vmatpush1.msra.mxu0 0.0
  %3088 = vmatprep.subr.mxu0 0.0
  %3089 = vmatpush1.msra.mxu0 0.0
  %3090 = vmatprep.subr.mxu0 0.0
  %3091 = vmatpush1.msra.mxu0 0.0
  %3092 = vmatprep.subr.mxu0 0.0
  %3093 = vmatpush1.msra.mxu0 0.0
  %3094 = vmatprep.subr.mxu0 0.0
  %3095 = vmatpush1.msra.mxu0 0.0
  %3096 = vmatprep.subr.mxu0 0.0
  %3097 = vmatpush1.msra.mxu0 0.0
  %3098 = vmatprep.subr.mxu0 0.0
  %3099 = vmatpush1.msra.mxu0 0.0
  %3100 = vmatprep.subr.mxu0 0.0
  %3101 = vmatpush1.msra.mxu0 0.0
  %3102 = vmatprep.subr.mxu0 0.0
  %3103 = vmatpush1.msra.mxu0 0.0
  %3104 = vmatprep.subr.mxu0 0.0
  %3105 = vmatpush1.msra.mxu0 0.0
  %3106 = vmatprep.subr.mxu0 0.0
  %3107 = vmatpush1.msra.mxu0 %v17
  %3108 = vmatprep.subr.mxu0 0.0
  %3109 = vmatpush2.msra.mxu0 0.0
  %3110 = vmatprep.subr.mxu0 0.0
  %3111 = vmatpush2.msra.mxu0 0.0
  %3112 = vmatprep.subr.mxu0 0.0
  %3113 = vmatpush2.msra.mxu0 0.0
  %3114 = vmatprep.subr.mxu0 0.0
  %3115 = vmatpush2.msra.mxu0 0.0
  %3116 = vmatprep.subr.mxu0 0.0
  %3117 = vmatpush2.msra.mxu0 0.0
  %3118 = vmatprep.subr.mxu0 0.0
  %3119 = vmatpush2.msra.mxu0 0.0
  %3120 = vmatprep.subr.mxu0 0.0
  %3121 = vmatpush2.msra.mxu0 0.0
  %3122 = vmatprep.subr.mxu0 0.0
  %3123 = vmatpush2.msra.mxu0 0.0
  %3124 = vmatprep.subr.mxu0 0.0
  %3125 = vmatpush2.msra.mxu0 0.0
  %3126 = vmatprep.subr.mxu0 0.0
  %3127 = vmatpush2.msra.mxu0 0.0
  %3128 = vmatprep.subr.mxu0 0.0
  %3129 = vmatpush2.msra.mxu0 0.0
  %3130 = vmatprep.subr.mxu0 0.0
  %3131 = vmatpush2.msra.mxu0 0.0
  %3132 = vmatprep.subr.mxu0 0.0
  %3133 = vmatpush2.msra.mxu0 0.0
  %3134 = vmatprep.subr.mxu0 0.0
  %3135 = vmatpush2.msra.mxu0 0.0
  %3136 = vmatprep.subr.mxu0 0.0
  %3137 = vmatpush2.msra.mxu0 0.0
  %3138 = vmatprep.subr.mxu0 0.0
  %3139 = vmatpush2.msra.mxu0 0.0
  %3140 = vmatprep.mubr.f32.mxu0 0.0
  %3141 = vmatmul.mubr.f32.gmra.mxu0 %v3065
  %v3142 = vpop.f32.mrf.mxu0
  %v3143 = vadd.f32 0.0, %v3142
  %v3144 = vpop.f32.mrf.mxu0
  %3145 = vmatprep.mubr.f32.mxu0 0.0
  %3146 = vmatmul.mubr.f32.gmra.mxu0 %v3068
  %v3147 = vpop.f32.mrf.mxu0
  %v3148 = vadd.f32 0.0, %v3147
  %v3149 = vpop.f32.mrf.mxu0
  %3150 = vmatprep.mubr.f32.mxu0 0.0
  %3151 = vmatmul.mubr.f32.gmra.mxu0 %v3071
  %v3152 = vpop.f32.mrf.mxu0
  %v3153 = vadd.f32 0.0, %v3152
  %v3154 = vpop.f32.mrf.mxu0
  %3155 = vmatprep.mubr.f32.mxu0 0.0
  %3156 = vmatmul.mubr.f32.gmra.mxu0 %v3074
  %v3157 = vpop.f32.mrf.mxu0
  %v3158 = vadd.f32 0.0, %v3157
  %v3159 = vpop.f32.mrf.mxu0
  %3160 = vdwg.mxu0
  %v3161 = vsel %vm129, %v3031, 0.0
  %v3162 = vrot.slane %v3161, 4
  %v3163 = vadd.f32 %v3161, %v3162
  %v3164 = vrot.slane %v3163, 2
  %v3165 = vadd.f32 %v3163, %v3164
  %v3166 = vrot.slane %v3165, 1
  %v3167 = vadd.f32 %v3165, %v3166
  %v3168 = vadd.f32 %v2556, %v2810
  %v3169 = vadd.f32 %v2557, %v2817
  %v3170 = vmul.f32 %v3143, 0.01
  %v3171 = vmul.f32 %v3148, 0.01
  %v3172 = vmul.f32 %v3153, 0.01
  %v3173 = vmul.f32 %v3158, 0.01
  %3178 = vrot.lane.b32.xlu0 %v3170, 32
  %v3179 = vpop.permute.xlu0 %3178
  %3180 = vrot.lane.b32.xlu0 %v3171, 32
  %v3181 = vpop.permute.xlu0 %3180
  %3182 = vrot.lane.b32.xlu0 %v3172, 32
  %v3183 = vpop.permute.xlu0 %3182
  %3184 = vrot.lane.b32.xlu0 %v3173, 32
  %v3185 = vpop.permute.xlu0 %3184
  %v3190 = vsub.f32 %v2578, %v3179
  %v3191 = vsub.f32 %v2579, %v3181
  %v3192 = vsub.f32 %v2580, %v3183
  %v3193 = vsub.f32 %v2581, %v3185
  %v3194 = vmul.f32 %v3167, 0.01
  %v3195 = vsub.f32 %v2583, %v3194
  %v3196 = vmul.f32 %v2932, 0.01
  %v3197 = vmul.f32 %v2937, 0.01
  %v3198 = vmul.f32 %v2942, 0.01
  %v3199 = vmul.f32 %v2947, 0.01
  %v3200 = vsub.f32 %v2588, %v3196
  %v3201 = vsub.f32 %v2589, %v3197
  %v3202 = vsub.f32 %v2590, %v3198
  %v3203 = vsub.f32 %v2591, %v3199
  %v3204 = vmul.f32 %v2956, 0.01
  %v3205 = vsub.f32 %v2593, %v3204
  %v3206 = vmul.f32 %v3168, 0.01
  %v3207 = vsub.f32 %v1558, %v3206
  %v3208 = vmul.f32 %v3169, 0.01
  %v3209 = vsub.f32 %v1558, %v3208
  %v3210 = vlaneseq
  %v3211 = vshrl.u32 %v3210, 7
  %v3212 = vsub.s32 0, %v3211
  %v3213 = vrot.slane %v3195, %v3212
  %3218 = vrot.lane.b32.xlu0 %v3190, 96
  %v3219 = vpop.permute.xlu0 %3218
  %3220 = vrot.lane.b32.xlu0 %v3191, 96
  %v3221 = vpop.permute.xlu0 %3220
  %3222 = vrot.lane.b32.xlu0 %v3192, 96
  %v3223 = vpop.permute.xlu0 %3222
  %3224 = vrot.lane.b32.xlu0 %v3193, 96
  %v3225 = vpop.permute.xlu0 %3224
  %v3227 = vsel %vm42, %v18, 0
  %v3229 = vsel %vm42, %v3219, 0
  %v3231 = vsel %vm42, %v3221, 0
  %v3233 = vsel %vm42, %v3223, 0
  %v3235 = vsel %vm42, %v3225, 0
  %3237 = vmatprep.subr.mxu0 0.0
  %3238 = vmatpush1.xpose.msra.mxu0 0.0
  %3239 = vmatprep.subr.mxu0 0.0
  %3240 = vmatpush1.xpose.msra.mxu0 0.0
  %3241 = vmatprep.subr.mxu0 0.0
  %3242 = vmatpush1.xpose.msra.mxu0 0.0
  %3243 = vmatprep.subr.mxu0 0.0
  %3244 = vmatpush1.xpose.msra.mxu0 0.0
  %3245 = vmatprep.subr.mxu0 0.0
  %3246 = vmatpush1.xpose.msra.mxu0 0.0
  %3247 = vmatprep.subr.mxu0 0.0
  %3248 = vmatpush1.xpose.msra.mxu0 0.0
  %3249 = vmatprep.subr.mxu0 0.0
  %3250 = vmatpush1.xpose.msra.mxu0 0.0
  %3251 = vmatprep.subr.mxu0 0.0
  %3252 = vmatpush1.xpose.msra.mxu0 0.0
  %3253 = vmatprep.subr.mxu0 0.0
  %3254 = vmatpush1.xpose.msra.mxu0 0.0
  %3255 = vmatprep.subr.mxu0 0.0
  %3256 = vmatpush1.xpose.msra.mxu0 0.0
  %3257 = vmatprep.subr.mxu0 0.0
  %3258 = vmatpush1.xpose.msra.mxu0 0.0
  %3259 = vmatprep.subr.mxu0 0.0
  %3260 = vmatpush1.xpose.msra.mxu0 0.0
  %3261 = vmatprep.subr.mxu0 0.0
  %3262 = vmatpush1.xpose.msra.mxu0 %v3235
  %3263 = vmatprep.subr.mxu0 0.0
  %3264 = vmatpush1.xpose.msra.mxu0 %v3233
  %3265 = vmatprep.subr.mxu0 0.0
  %3266 = vmatpush1.xpose.msra.mxu0 %v3231
  %3267 = vmatprep.subr.mxu0 0.0
  %3268 = vmatpush1.xpose.msra.mxu0 %v3229
  %3269 = vmatprep.subr.mxu0 0.0
  %3270 = vmatpush2.xpose.msra.mxu0 0.0
  %3271 = vmatprep.subr.mxu0 0.0
  %3272 = vmatpush2.xpose.msra.mxu0 0.0
  %3273 = vmatprep.subr.mxu0 0.0
  %3274 = vmatpush2.xpose.msra.mxu0 0.0
  %3275 = vmatprep.subr.mxu0 0.0
  %3276 = vmatpush2.xpose.msra.mxu0 0.0
  %3277 = vmatprep.subr.mxu0 0.0
  %3278 = vmatpush2.xpose.msra.mxu0 0.0
  %3279 = vmatprep.subr.mxu0 0.0
  %3280 = vmatpush2.xpose.msra.mxu0 0.0
  %3281 = vmatprep.subr.mxu0 0.0
  %3282 = vmatpush2.xpose.msra.mxu0 0.0
  %3283 = vmatprep.subr.mxu0 0.0
  %3284 = vmatpush2.xpose.msra.mxu0 0.0
  %3285 = vmatprep.subr.mxu0 0.0
  %3286 = vmatpush2.xpose.msra.mxu0 0.0
  %3287 = vmatprep.subr.mxu0 0.0
  %3288 = vmatpush2.xpose.msra.mxu0 0.0
  %3289 = vmatprep.subr.mxu0 0.0
  %3290 = vmatpush2.xpose.msra.mxu0 0.0
  %3291 = vmatprep.subr.mxu0 0.0
  %3292 = vmatpush2.xpose.msra.mxu0 0.0
  %3293 = vmatprep.subr.mxu0 0.0
  %3294 = vmatpush2.xpose.msra.mxu0 0.0
  %3295 = vmatprep.subr.mxu0 0.0
  %3296 = vmatpush2.xpose.msra.mxu0 0.0
  %3297 = vmatprep.subr.mxu0 0.0
  %3298 = vmatpush2.xpose.msra.mxu0 0.0
  %3299 = vmatprep.subr.mxu0 0.0
  %3300 = vmatpush2.xpose.msra.mxu0 0.0
  %3301 = vmatprep.mubr.f32.mxu0 0.0
  %3302 = vmatmul.mubr.f32.gmra.mxu0 %v3227
  %v3303 = vpop.f32.mrf.mxu0
  %v3304 = vadd.f32 %v3213, %v3303
  %v3305 = vpop.f32.mrf.mxu0
  %3306 = vdwg.mxu0
  %v3307 = vmax.f32 %v3304, 0.0
  %v3308 = vlaneseq
  %v3309 = vshrl.u32 %v3308, 7
  %v3310 = vsub.s32 0, %v3309
  %v3311 = vrot.slane %v3205, %v3310
  %v3313 = vsel %vm129, %v3307, 0
  %v3316 = vsel %vm129, %v3200, 0
  %v3319 = vsel %vm129, %v3201, 0
  %v3322 = vsel %vm129, %v3202, 0
  %v3325 = vsel %vm129, %v3203, 0
  %3327 = vmatprep.subr.mxu0 0.0
  %3328 = vmatpush1.xpose.msra.mxu0 0.0
  %3329 = vmatprep.subr.mxu0 0.0
  %3330 = vmatpush1.xpose.msra.mxu0 0.0
  %3331 = vmatprep.subr.mxu0 0.0
  %3332 = vmatpush1.xpose.msra.mxu0 0.0
  %3333 = vmatprep.subr.mxu0 0.0
  %3334 = vmatpush1.xpose.msra.mxu0 0.0
  %3335 = vmatprep.subr.mxu0 0.0
  %3336 = vmatpush1.xpose.msra.mxu0 0.0
  %3337 = vmatprep.subr.mxu0 0.0
  %3338 = vmatpush1.xpose.msra.mxu0 0.0
  %3339 = vmatprep.subr.mxu0 0.0
  %3340 = vmatpush1.xpose.msra.mxu0 0.0
  %3341 = vmatprep.subr.mxu0 0.0
  %3342 = vmatpush1.xpose.msra.mxu0 0.0
  %3343 = vmatprep.subr.mxu0 0.0
  %3344 = vmatpush1.xpose.msra.mxu0 0.0
  %3345 = vmatprep.subr.mxu0 0.0
  %3346 = vmatpush1.xpose.msra.mxu0 0.0
  %3347 = vmatprep.subr.mxu0 0.0
  %3348 = vmatpush1.xpose.msra.mxu0 0.0
  %3349 = vmatprep.subr.mxu0 0.0
  %3350 = vmatpush1.xpose.msra.mxu0 0.0
  %3351 = vmatprep.subr.mxu0 0.0
  %3352 = vmatpush1.xpose.msra.mxu0 %v3325
  %3353 = vmatprep.subr.mxu0 0.0
  %3354 = vmatpush1.xpose.msra.mxu0 %v3322
  %3355 = vmatprep.subr.mxu0 0.0
  %3356 = vmatpush1.xpose.msra.mxu0 %v3319
  %3357 = vmatprep.subr.mxu0 0.0
  %3358 = vmatpush1.xpose.msra.mxu0 %v3316
  %3359 = vmatprep.subr.mxu0 0.0
  %3360 = vmatpush2.xpose.msra.mxu0 0.0
  %3361 = vmatprep.subr.mxu0 0.0
  %3362 = vmatpush2.xpose.msra.mxu0 0.0
  %3363 = vmatprep.subr.mxu0 0.0
  %3364 = vmatpush2.xpose.msra.mxu0 0.0
  %3365 = vmatprep.subr.mxu0 0.0
  %3366 = vmatpush2.xpose.msra.mxu0 0.0
  %3367 = vmatprep.subr.mxu0 0.0
  %3368 = vmatpush2.xpose.msra.mxu0 0.0
  %3369 = vmatprep.subr.mxu0 0.0
  %3370 = vmatpush2.xpose.msra.mxu0 0.0
  %3371 = vmatprep.subr.mxu0 0.0
  %3372 = vmatpush2.xpose.msra.mxu0 0.0
  %3373 = vmatprep.subr.mxu0 0.0
  %3374 = vmatpush2.xpose.msra.mxu0 0.0
  %3375 = vmatprep.subr.mxu0 0.0
  %3376 = vmatpush2.xpose.msra.mxu0 0.0
  %3377 = vmatprep.subr.mxu0 0.0
  %3378 = vmatpush2.xpose.msra.mxu0 0.0
  %3379 = vmatprep.subr.mxu0 0.0
  %3380 = vmatpush2.xpose.msra.mxu0 0.0
  %3381 = vmatprep.subr.mxu0 0.0
  %3382 = vmatpush2.xpose.msra.mxu0 0.0
  %3383 = vmatprep.subr.mxu0 0.0
  %3384 = vmatpush2.xpose.msra.mxu0 0.0
  %3385 = vmatprep.subr.mxu0 0.0
  %3386 = vmatpush2.xpose.msra.mxu0 0.0
  %3387 = vmatprep.subr.mxu0 0.0
  %3388 = vmatpush2.xpose.msra.mxu0 0.0
  %3389 = vmatprep.subr.mxu0 0.0
  %3390 = vmatpush2.xpose.msra.mxu0 0.0
  %3391 = vmatprep.mubr.f32.mxu0 0.0
  %3392 = vmatmul.mubr.f32.gmra.mxu0 %v3313
  %v3393 = vpop.f32.mrf.mxu0
  %v3394 = vadd.f32 %v3311, %v3393
  %v3395 = vpop.f32.mrf.mxu0
  %3396 = vdwg.mxu0
  %v3397 = vmax.f32 %v3394, 0.0
  %v3398 = vlaneseq
  %v3399 = vshrl.u32 %v3398, 7
  %v3400 = vsub.s32 1, %v3399
  %v3401 = vrot.slane %v3207, %v3400
  %v3402 = vmul.f32 %v3397, %v3401
  %v3403 = vsel %vm129, %v3402, 0.0
  %3404 = vadd.xlane.f32.xlu0 %v3403
  %v3405 = vpop.xlane.xlu0 %3404
  %v3406 = vlaneseq
  %v3407 = vshrl.u32 %v3406, 7
  %v3408 = vsub.s32 1, %v3407
  %v3409 = vrot.slane %v3209, %v3408
  %v3410 = vadd.f32 %v3405, %v3409
  %3412 = vrot.lane.b32.xlu0 %v3410, 96
  %v3413 = vpop.permute.xlu0 %3412
  %vm3415 = vcmask 7168
  %3416 = vst.msk [vmem:[%s4] sm:$0xff] %vm3415, %v3413
  // Predicated region
  $region18: #{maml_mse_forward_batched.1} parent=0 // pred_check
    _
  $region19: #{maml_mse_forward_batched.1} parent=0 // pred_check_branch
    %3418 = sbr.rel (0) target = $region21
  $region20: #{maml_mse_forward_batched.1} parent=0 // pred_region
    _
  $region21: #{maml_mse_forward_batched.1} parent=0 // pred_fallthru
    _
  // Predicated region
  $region22: #{maml_mse_forward_batched.1} parent=0 // pred_check
    _
  $region23: #{maml_mse_forward_batched.1} parent=0 // pred_check_branch
    %3420 = sbr.rel (0) target = $region25
  $region24: #{maml_mse_forward_batched.1} parent=0 // pred_region
    _
  $region25: #{maml_mse_forward_batched.1} parent=0 // pred_fallthru
    _

</llo_original>
